<compile_context>
chip_gen: v7x
topology: tpu7x:2x2x1
jax: 0.10.0
libtpu: 0.0.40
codegen_flags: <defaults>
</compile_context>

<pallas_src>
import jax
import jax.numpy as jnp
from jax.experimental import pallas as pl
from jax.experimental.pallas import tpu as pltpu

BN_EPS = 1e-5


def _round_up(n, m):
    return ((n + m - 1) // m) * m


# ---------------------------------------------------------------------------
# Fused Pallas kernel: conv1+BN+ReLU -> conv2+BN+ReLU -> Squeeze-Excite.
# One grid step per batch element; everything between the single input load
# and the single (lane-dense, NCHW) output store stays in VMEM/vregs.
# ---------------------------------------------------------------------------
def _fused_double_conv_se_kernel(xpad_ref, w1_ref, shift1_ref, w2_ref,
                                 shift2_ref, sew1_ref, sew2t_ref, o_ref):
    Hp, Wp = xpad_ref.shape[1], xpad_ref.shape[2]
    H, W = Hp - 2, Wp - 2
    HW = H * W
    cin = xpad_ref.shape[3]
    cmid = w1_ref.shape[1]
    cout = w2_ref.shape[1]
    taps = [(dy, dx) for dy in range(3) for dx in range(3)]

    # --- conv1: single K-concatenated matmul (HW, 9*Cin) x (9*Cin, Cmid) -----
    lhs1 = jnp.concatenate(
        [xpad_ref[0, dy:dy + H, dx:dx + W, :].reshape(HW, cin)
         for dy, dx in taps], axis=-1)                              # bf16
    y1 = jnp.maximum(
        jnp.dot(lhs1, w1_ref[...], preferred_element_type=jnp.float32)
        + shift1_ref[...], 0.0)                                     # (HW, cmid) f32

    # --- zero-pad y1 spatially as a value (borders baked in; no masked stores)
    y1hw = y1.astype(jnp.bfloat16).reshape(H, W, cmid)
    zc = jnp.zeros((H, 1, cmid), jnp.bfloat16)
    zr = jnp.zeros((1, Wp, cmid), jnp.bfloat16)
    y1p = jnp.concatenate(
        [zr, jnp.concatenate([zc, y1hw, zc], axis=1), zr], axis=0)  # (Hp, Wp, cmid)

    # --- conv2: single (HW, 9*Cmid) x (9*Cmid, Cout) matmul (true cmid) ------
    lhs2 = jnp.concatenate(
        [y1p[dy:dy + H, dx:dx + W, :].reshape(HW, cmid)
         for dy, dx in taps], axis=-1)                              # bf16
    y2 = jnp.maximum(
        jnp.dot(lhs2, w2_ref[...], preferred_element_type=jnp.float32)
        + shift2_ref[...], 0.0)                                     # (HW, cout) f32

    # --- Squeeze-Excite on the VPU/XLU (cr is tiny; no MXU drains) -----------
    pooled = jnp.mean(y2, axis=0, keepdims=True)                    # (1, cout)
    z = jnp.maximum(
        jnp.sum(pooled * sew1_ref[...], axis=1, keepdims=True), 0.0)   # (crp, 1)
    s = jax.nn.sigmoid(
        jnp.sum(z * sew2t_ref[...], axis=0, keepdims=True))            # (1, cout)

    # lane-dense NCHW output: (Cout, H*W), only real channels.
    o_ref[0] = jnp.transpose(y2 * s).astype(o_ref.dtype)


def _fused_double_conv_se(xpad, p):
    """xpad: (B, H+2, W+2, Cin) bf16 -> (B, Cout, H*W) f32 (NCHW-flat)."""
    B, Hp, Wp, Cin = xpad.shape
    H, W = Hp - 2, Wp - 2
    HW = H * W
    w1, shift1 = p['w1'], p['shift1']
    w2, shift2 = p['w2'], p['shift2']
    sew1, sew2t = p['se_w1'], p['se_w2t']
    cmid = w1.shape[1]
    cout = w2.shape[1]
    crp = sew1.shape[0]

    return pl.pallas_call(
        _fused_double_conv_se_kernel,
        out_shape=jax.ShapeDtypeStruct((B, cout, HW), jnp.float32),
        grid=(B,),
        in_specs=[
            pl.BlockSpec((1, Hp, Wp, Cin), lambda b: (b, 0, 0, 0)),
            pl.BlockSpec((9 * Cin, cmid), lambda b: (0, 0)),
            pl.BlockSpec((1, cmid), lambda b: (0, 0)),
            pl.BlockSpec((9 * cmid, cout), lambda b: (0, 0)),
            pl.BlockSpec((1, cout), lambda b: (0, 0)),
            pl.BlockSpec((crp, cout), lambda b: (0, 0)),
            pl.BlockSpec((crp, cout), lambda b: (0, 0)),
        ],
        out_specs=pl.BlockSpec((1, cout, HW), lambda b: (b, 0, 0)),
        compiler_params=pltpu.CompilerParams(
            dimension_semantics=("parallel",),
            vmem_limit_bytes=32 * 1024 * 1024),
    )(xpad, w1, shift1, w2, shift2, sew1, sew2t)


# ---------------------------------------------------------------------------
# JAX glue (layout / data movement only)
# ---------------------------------------------------------------------------
def _interp_matrix(n_in, n_out):
    """Dense (n_out, n_in) align_corners=True linear-interpolation matrix."""
    if n_in == 1:
        return jnp.ones((n_out, 1), jnp.float32)
    pos = jnp.arange(n_out, dtype=jnp.float32) * ((n_in - 1) / (n_out - 1))
    lo = jnp.clip(jnp.floor(pos).astype(jnp.int32), 0, n_in - 2)
    frac = pos - lo.astype(jnp.float32)
    return (jax.nn.one_hot(lo, n_in, dtype=jnp.float32) * (1.0 - frac)[:, None]
            + jax.nn.one_hot(lo + 1, n_in, dtype=jnp.float32) * frac[:, None])


def init_params(key, in_channels, out_channels, reduction=16):
    """Deterministic synthetic parameters (shapes per UpSkipSE.__init__)."""
    mid = out_channels                       # mid_channels defaults to out_channels
    cr = max(out_channels // reduction, 1)
    ks = jax.random.split(key, 14)
    conv1_w = 0.1 * jax.random.normal(ks[0], (mid, in_channels, 3, 3), jnp.float32)
    conv1_b = 0.1 * jax.random.normal(ks[1], (mid,), jnp.float32)
    bn1 = (1.0 + 0.1 * jax.random.normal(ks[2], (mid,), jnp.float32),   # gamma
           0.1 * jax.random.normal(ks[3], (mid,), jnp.float32),         # beta
           0.1 * jax.random.normal(ks[4], (mid,), jnp.float32),         # running_mean
           jax.random.uniform(ks[5], (mid,), jnp.float32, 0.5, 1.5))    # running_var
    conv2_w = 0.1 * jax.random.normal(ks[6], (out_channels, mid, 3, 3), jnp.float32)
    conv2_b = 0.1 * jax.random.normal(ks[7], (out_channels,), jnp.float32)
    bn2 = (1.0 + 0.1 * jax.random.normal(ks[8], (out_channels,), jnp.float32),
           0.1 * jax.random.normal(ks[9], (out_channels,), jnp.float32),
           0.1 * jax.random.normal(ks[10], (out_channels,), jnp.float32),
           jax.random.uniform(ks[11], (out_channels,), jnp.float32, 0.5, 1.5))
    se_w1 = 0.2 * jax.random.normal(ks[12], (cr, out_channels), jnp.float32)  # Linear(C, C//r)
    se_w2 = 0.2 * jax.random.normal(ks[13], (out_channels, cr), jnp.float32)  # Linear(C//r, C)

    raw = dict(conv1_w=conv1_w, conv1_b=conv1_b, bn1=bn1,
               conv2_w=conv2_w, conv2_b=conv2_b, bn2=bn2,
               se_w1=se_w1, se_w2=se_w2)

    def fold(w, b, bn):
        """Fold conv bias + BN into a (9*Cin, Cout) bf16 weight + f32 shift."""
        g, beta, m, v = bn
        scale = g / jnp.sqrt(v + BN_EPS)
        shift = (b - m) * scale + beta
        # (Cout, Cin, 3, 3) -> (ky, kx, Cin, Cout) -> (9*Cin, Cout); BN scale is
        # folded into the output columns, row order matches the im2col concat.
        taps = (jnp.transpose(w, (2, 3, 1, 0)).reshape(9 * w.shape[1], w.shape[0])
                * scale)
        return taps.astype(jnp.bfloat16), shift[None, :].astype(jnp.float32)

    w1_taps, shift1 = fold(conv1_w, conv1_b, bn1)          # (9*Cin, mid)
    w2_taps, shift2 = fold(conv2_w, conv2_b, bn2)          # (9*mid, out)

    # SE weights: cr padded only to the 8-sublane minimum (rows >= cr are zero,
    # so they contribute exactly nothing to the excite sum).
    crp = _round_up(cr, 8)
    sew1 = jnp.zeros((crp, out_channels), jnp.float32).at[:cr].set(se_w1)
    sew2t = jnp.zeros((crp, out_channels), jnp.float32).at[:cr].set(se_w2.T)

    kernel_params = dict(w1=w1_taps, shift1=shift1, w2=w2_taps, shift2=shift2,
                         se_w1=sew1, se_w2t=sew2t)
    return kernel_params, raw


def up_skip_se_forward(x1_nchw, x2_nchw, p, out_channels):
    """UpSkipSE.forward(x1, x2) with bilinear=True, use_se=True (inference BN)."""
    B, _, h, w = x1_nchw.shape
    # bilinear 2x align_corners upsample as two small dense matmuls, in NCHW.
    my = _interp_matrix(h, 2 * h)
    mx = _interp_matrix(w, 2 * w)
    x1u = jnp.einsum('oh,bchw->bcow', my, x1_nchw)
    x1u = jnp.einsum('pw,bcow->bcop', mx, x1u)             # self.up(x1)

    H, W = x2_nchw.shape[2], x2_nchw.shape[3]
    diffY = H - x1u.shape[2]
    diffX = W - x1u.shape[3]
    # F.pad(diff) and the 3x3 conv halo are folded into a single pad per tensor.
    x1p = jnp.pad(x1u, ((0, 0), (0, 0),
                        (1 + diffY // 2, 1 + diffY - diffY // 2),
                        (1 + diffX // 2, 1 + diffX - diffX // 2)))
    x2p = jnp.pad(x2_nchw, ((0, 0), (0, 0), (1, 1), (1, 1)))
    x = jnp.concatenate([x2p, x1p], axis=1)                # torch.cat([x2, x1], dim=1)
    xpad = jnp.transpose(x, (0, 2, 3, 1)).astype(jnp.bfloat16)  # one NHWC transpose + cast

    y = _fused_double_conv_se(xpad, p)                     # (B, Cout, H*W), already NCHW
    return y.reshape(B, out_channels, H, W)


# ---------------------------------------------------------------------------
# Pure-JAX reference (for self-check)
# ---------------------------------------------------------------------------
def _bilinear_up2_ref(x):
    B, H, W, C = x.shape
    Ho, Wo = 2 * H, 2 * W
    ys = jnp.arange(Ho, dtype=jnp.float32) * ((H - 1) / (Ho - 1))
    xs = jnp.arange(Wo, dtype=jnp.float32) * ((W - 1) / (Wo - 1))
    y0 = jnp.clip(jnp.floor(ys).astype(jnp.int32), 0, H - 1)
    x0 = jnp.clip(jnp.floor(xs).astype(jnp.int32), 0, W - 1)
    y1 = jnp.minimum(y0 + 1, H - 1)
    x1 = jnp.minimum(x0 + 1, W - 1)
    wy = (ys - y0.astype(jnp.float32))[None, :, None, None]
    wx = (xs - x0.astype(jnp.float32))[None, None, :, None]
    a = x[:, y0][:, :, x0]
    b = x[:, y0][:, :, x1]
    c = x[:, y1][:, :, x0]
    d = x[:, y1][:, :, x1]
    top = a * (1.0 - wx) + b * wx
    bot = c * (1.0 - wx) + d * wx
    return top * (1.0 - wy) + bot * wy


def _reference_forward(x1_nchw, x2_nchw, raw):
    x1 = jnp.transpose(x1_nchw, (0, 2, 3, 1))
    x2 = jnp.transpose(x2_nchw, (0, 2, 3, 1))
    x1 = _bilinear_up2_ref(x1)
    diffY = x2.shape[1] - x1.shape[1]
    diffX = x2.shape[2] - x1.shape[2]
    x1 = jnp.pad(x1, ((0, 0), (diffY // 2, diffY - diffY // 2),
                      (diffX // 2, diffX - diffX // 2), (0, 0)))
    x = jnp.concatenate([x2, x1], axis=-1)

    def conv_bn_relu(x, w, b, bn):
        g, beta, m, v = bn
        w_hwio = jnp.transpose(w, (2, 3, 1, 0))
        y = jax.lax.conv_general_dilated(
            x, w_hwio, window_strides=(1, 1), padding='SAME',
            dimension_numbers=('NHWC', 'HWIO', 'NHWC')) + b
        return jnp.maximum((y - m) * g / jnp.sqrt(v + BN_EPS) + beta, 0.0)

    y = conv_bn_relu(x, raw['conv1_w'], raw['conv1_b'], raw['bn1'])
    y = conv_bn_relu(y, raw['conv2_w'], raw['conv2_b'], raw['bn2'])
    pooled = jnp.mean(y, axis=(1, 2))
    z = jnp.maximum(pooled @ raw['se_w1'].T, 0.0)
    s = jax.nn.sigmoid(z @ raw['se_w2'].T)
    y = y * s[:, None, None, :]
    return jnp.transpose(y, (0, 3, 1, 2))


# ---------------------------------------------------------------------------
if __name__ == "__main__":
    key = jax.random.PRNGKey(0)
    k1, k2, kp = jax.random.split(key, 3)

    in_channels, out_channels = 32, 32      # UpSkipSE(32, 32, bilinear=True, use_se=True)
    B, H2, W2 = 2, 16, 16
    # x1 comes from the deeper level: half the channels, half the spatial size.
    x1 = jax.random.normal(k1, (B, in_channels // 2, H2 // 2, W2 // 2), jnp.float32)
    x2 = jax.random.normal(k2, (B, in_channels // 2, H2, W2), jnp.float32)

    params, raw_params = init_params(kp, in_channels, out_channels)

    fwd = jax.jit(up_skip_se_forward, static_argnums=(3,))
    out = jax.block_until_ready(fwd(x1, x2, params, out_channels))

    ref = _reference_forward(x1, x2, raw_params)
    assert out.shape == (B, out_channels, H2, W2), out.shape
    assert bool(jnp.allclose(out, ref, rtol=5e-2, atol=5e-2)), \
        float(jnp.max(jnp.abs(out - ref)))

    print("KERNEL_OK")
</pallas_src>

<mosaic_0001>
module attributes {stable_mosaic.version = 11 : i64} {
  func.func @_fused_double_conv_se_kernel(%arg0: i32, %arg1: memref<1x18x18x32xbf16, #tpu.memory_space<vmem>>, %arg2: memref<288x32xbf16, #tpu.memory_space<vmem>>, %arg3: memref<1x32xf32, #tpu.memory_space<vmem>>, %arg4: memref<288x32xbf16, #tpu.memory_space<vmem>>, %arg5: memref<1x32xf32, #tpu.memory_space<vmem>>, %arg6: memref<8x32xf32, #tpu.memory_space<vmem>>, %arg7: memref<8x32xf32, #tpu.memory_space<vmem>>, %arg8: memref<1x32x256xf32, #tpu.memory_space<vmem>>) attributes {dimension_semantics = [#tpu.dimension_semantics<parallel>], iteration_bounds = array<i64: 2>, scalar_prefetch = 0 : i64, scratch_operands = 0 : i64, tpu.core_type = #tpu.core_type<tc>, window_params = [{transform_indices = @transform_0, window_bounds = array<i64: 1, 18, 18, 32>}, {pipeline_mode = #tpu.pipeline_mode<synchronous>, transform_indices = @transform_1, window_bounds = array<i64: 288, 32>}, {pipeline_mode = #tpu.pipeline_mode<synchronous>, transform_indices = @transform_2, window_bounds = array<i64: 1, 32>}, {pipeline_mode = #tpu.pipeline_mode<synchronous>, transform_indices = @transform_3, window_bounds = array<i64: 288, 32>}, {pipeline_mode = #tpu.pipeline_mode<synchronous>, transform_indices = @transform_4, window_bounds = array<i64: 1, 32>}, {pipeline_mode = #tpu.pipeline_mode<synchronous>, transform_indices = @transform_5, window_bounds = array<i64: 8, 32>}, {pipeline_mode = #tpu.pipeline_mode<synchronous>, transform_indices = @transform_6, window_bounds = array<i64: 8, 32>}, {transform_indices = @transform_7, window_bounds = array<i64: 1, 32, 256>}]} {
    %c0 = arith.constant 0 : index
    %c0_0 = arith.constant 0 : index
    %c0_1 = arith.constant 0 : index
    %c0_2 = arith.constant 0 : index
    %0 = vector.load %arg1[%c0, %c0_0, %c0_1, %c0_2] : memref<1x18x18x32xbf16, #tpu.memory_space<vmem>>, vector<1x16x16x32xbf16>
    %1 = vector.shape_cast %0 : vector<1x16x16x32xbf16> to vector<16x16x32xbf16>
    %2 = vector.shape_cast %1 : vector<16x16x32xbf16> to vector<256x32xbf16>
    %c0_3 = arith.constant 0 : index
    %c0_4 = arith.constant 0 : index
    %c1 = arith.constant 1 : index
    %c0_5 = arith.constant 0 : index
    %3 = vector.load %arg1[%c0_3, %c0_4, %c1, %c0_5] : memref<1x18x18x32xbf16, #tpu.memory_space<vmem>>, vector<1x16x16x32xbf16>
    %4 = vector.shape_cast %3 : vector<1x16x16x32xbf16> to vector<16x16x32xbf16>
    %5 = vector.shape_cast %4 : vector<16x16x32xbf16> to vector<256x32xbf16>
    %c0_6 = arith.constant 0 : index
    %c0_7 = arith.constant 0 : index
    %c2 = arith.constant 2 : index
    %c0_8 = arith.constant 0 : index
    %6 = vector.load %arg1[%c0_6, %c0_7, %c2, %c0_8] : memref<1x18x18x32xbf16, #tpu.memory_space<vmem>>, vector<1x16x16x32xbf16>
    %7 = vector.shape_cast %6 : vector<1x16x16x32xbf16> to vector<16x16x32xbf16>
    %8 = vector.shape_cast %7 : vector<16x16x32xbf16> to vector<256x32xbf16>
    %c0_9 = arith.constant 0 : index
    %c1_10 = arith.constant 1 : index
    %c0_11 = arith.constant 0 : index
    %c0_12 = arith.constant 0 : index
    %9 = vector.load %arg1[%c0_9, %c1_10, %c0_11, %c0_12] : memref<1x18x18x32xbf16, #tpu.memory_space<vmem>>, vector<1x16x16x32xbf16>
    %10 = vector.shape_cast %9 : vector<1x16x16x32xbf16> to vector<16x16x32xbf16>
    %11 = vector.shape_cast %10 : vector<16x16x32xbf16> to vector<256x32xbf16>
    %c0_13 = arith.constant 0 : index
    %c1_14 = arith.constant 1 : index
    %c1_15 = arith.constant 1 : index
    %c0_16 = arith.constant 0 : index
    %12 = vector.load %arg1[%c0_13, %c1_14, %c1_15, %c0_16] : memref<1x18x18x32xbf16, #tpu.memory_space<vmem>>, vector<1x16x16x32xbf16>
    %13 = vector.shape_cast %12 : vector<1x16x16x32xbf16> to vector<16x16x32xbf16>
    %14 = vector.shape_cast %13 : vector<16x16x32xbf16> to vector<256x32xbf16>
    %c0_17 = arith.constant 0 : index
    %c1_18 = arith.constant 1 : index
    %c2_19 = arith.constant 2 : index
    %c0_20 = arith.constant 0 : index
    %15 = vector.load %arg1[%c0_17, %c1_18, %c2_19, %c0_20] : memref<1x18x18x32xbf16, #tpu.memory_space<vmem>>, vector<1x16x16x32xbf16>
    %16 = vector.shape_cast %15 : vector<1x16x16x32xbf16> to vector<16x16x32xbf16>
    %17 = vector.shape_cast %16 : vector<16x16x32xbf16> to vector<256x32xbf16>
    %c0_21 = arith.constant 0 : index
    %c2_22 = arith.constant 2 : index
    %c0_23 = arith.constant 0 : index
    %c0_24 = arith.constant 0 : index
    %18 = vector.load %arg1[%c0_21, %c2_22, %c0_23, %c0_24] : memref<1x18x18x32xbf16, #tpu.memory_space<vmem>>, vector<1x16x16x32xbf16>
    %19 = vector.shape_cast %18 : vector<1x16x16x32xbf16> to vector<16x16x32xbf16>
    %20 = vector.shape_cast %19 : vector<16x16x32xbf16> to vector<256x32xbf16>
    %c0_25 = arith.constant 0 : index
    %c2_26 = arith.constant 2 : index
    %c1_27 = arith.constant 1 : index
    %c0_28 = arith.constant 0 : index
    %21 = vector.load %arg1[%c0_25, %c2_26, %c1_27, %c0_28] : memref<1x18x18x32xbf16, #tpu.memory_space<vmem>>, vector<1x16x16x32xbf16>
    %22 = vector.shape_cast %21 : vector<1x16x16x32xbf16> to vector<16x16x32xbf16>
    %23 = vector.shape_cast %22 : vector<16x16x32xbf16> to vector<256x32xbf16>
    %c0_29 = arith.constant 0 : index
    %c2_30 = arith.constant 2 : index
    %c2_31 = arith.constant 2 : index
    %c0_32 = arith.constant 0 : index
    %24 = vector.load %arg1[%c0_29, %c2_30, %c2_31, %c0_32] : memref<1x18x18x32xbf16, #tpu.memory_space<vmem>>, vector<1x16x16x32xbf16>
    %25 = vector.shape_cast %24 : vector<1x16x16x32xbf16> to vector<16x16x32xbf16>
    %26 = vector.shape_cast %25 : vector<16x16x32xbf16> to vector<256x32xbf16>
    %27 = tpu.concatenate %2, %5, %8, %11, %14, %17, %20, %23, %26 in 1 : vector<256x32xbf16>, vector<256x32xbf16>, vector<256x32xbf16>, vector<256x32xbf16>, vector<256x32xbf16>, vector<256x32xbf16>, vector<256x32xbf16>, vector<256x32xbf16>, vector<256x32xbf16> -> vector<256x288xbf16>
    %c0_33 = arith.constant 0 : index
    %c0_34 = arith.constant 0 : index
    %28 = vector.load %arg2[%c0_33, %c0_34] : memref<288x32xbf16, #tpu.memory_space<vmem>>, vector<288x32xbf16>
    %cst = arith.constant dense<0.000000e+00> : vector<256x32xf32>
    %29 = tpu.matmul %27, %28, %cst {dimension_numbers = #tpu.dot_dimension_numbers<[1], [0], [0], [1], [0, 0, 1, 1], [], []>} : vector<256x288xbf16>, vector<288x32xbf16>, vector<256x32xf32> -> vector<256x32xf32>
    %c0_35 = arith.constant 0 : index
    %c0_36 = arith.constant 0 : index
    %30 = vector.load %arg3[%c0_35, %c0_36] : memref<1x32xf32, #tpu.memory_space<vmem>>, vector<1x32xf32>
    %31 = vector.broadcast %30 : vector<1x32xf32> to vector<256x32xf32>
    %32 = arith.addf %29, %31 : vector<256x32xf32>
    %cst_37 = arith.constant 0.000000e+00 : f32
    %33 = vector.broadcast %cst_37 : f32 to vector<256x32xf32>
    %34 = arith.maximumf %32, %33 : vector<256x32xf32>
    %35 = arith.truncf %34 : vector<256x32xf32> to vector<256x32xbf16>
    %36 = vector.shape_cast %35 : vector<256x32xbf16> to vector<16x16x32xbf16>
    %cst_38 = arith.constant 0.000000e+00 : bf16
    %37 = vector.broadcast %cst_38 : bf16 to vector<16x1x32xbf16>
    %cst_39 = arith.constant 0.000000e+00 : bf16
    %38 = vector.broadcast %cst_39 : bf16 to vector<1x18x32xbf16>
    %39 = tpu.concatenate %37, %36, %37 in 1 : vector<16x1x32xbf16>, vector<16x16x32xbf16>, vector<16x1x32xbf16> -> vector<16x18x32xbf16>
    %40 = tpu.concatenate %38, %39, %38 in 0 : vector<1x18x32xbf16>, vector<16x18x32xbf16>, vector<1x18x32xbf16> -> vector<18x18x32xbf16>
    %41 = vector.extract_strided_slice %40 {offsets = [0, 0, 0], sizes = [16, 16, 32], strides = [1, 1, 1]} : vector<18x18x32xbf16> to vector<16x16x32xbf16>
    %42 = vector.shape_cast %41 : vector<16x16x32xbf16> to vector<256x32xbf16>
    %43 = vector.extract_strided_slice %40 {offsets = [0, 1, 0], sizes = [16, 16, 32], strides = [1, 1, 1]} : vector<18x18x32xbf16> to vector<16x16x32xbf16>
    %44 = vector.shape_cast %43 : vector<16x16x32xbf16> to vector<256x32xbf16>
    %45 = vector.extract_strided_slice %40 {offsets = [0, 2, 0], sizes = [16, 16, 32], strides = [1, 1, 1]} : vector<18x18x32xbf16> to vector<16x16x32xbf16>
    %46 = vector.shape_cast %45 : vector<16x16x32xbf16> to vector<256x32xbf16>
    %47 = vector.extract_strided_slice %40 {offsets = [1, 0, 0], sizes = [16, 16, 32], strides = [1, 1, 1]} : vector<18x18x32xbf16> to vector<16x16x32xbf16>
    %48 = vector.shape_cast %47 : vector<16x16x32xbf16> to vector<256x32xbf16>
    %49 = vector.extract_strided_slice %40 {offsets = [1, 1, 0], sizes = [16, 16, 32], strides = [1, 1, 1]} : vector<18x18x32xbf16> to vector<16x16x32xbf16>
    %50 = vector.shape_cast %49 : vector<16x16x32xbf16> to vector<256x32xbf16>
    %51 = vector.extract_strided_slice %40 {offsets = [1, 2, 0], sizes = [16, 16, 32], strides = [1, 1, 1]} : vector<18x18x32xbf16> to vector<16x16x32xbf16>
    %52 = vector.shape_cast %51 : vector<16x16x32xbf16> to vector<256x32xbf16>
    %53 = vector.extract_strided_slice %40 {offsets = [2, 0, 0], sizes = [16, 16, 32], strides = [1, 1, 1]} : vector<18x18x32xbf16> to vector<16x16x32xbf16>
    %54 = vector.shape_cast %53 : vector<16x16x32xbf16> to vector<256x32xbf16>
    %55 = vector.extract_strided_slice %40 {offsets = [2, 1, 0], sizes = [16, 16, 32], strides = [1, 1, 1]} : vector<18x18x32xbf16> to vector<16x16x32xbf16>
    %56 = vector.shape_cast %55 : vector<16x16x32xbf16> to vector<256x32xbf16>
    %57 = vector.extract_strided_slice %40 {offsets = [2, 2, 0], sizes = [16, 16, 32], strides = [1, 1, 1]} : vector<18x18x32xbf16> to vector<16x16x32xbf16>
    %58 = vector.shape_cast %57 : vector<16x16x32xbf16> to vector<256x32xbf16>
    %59 = tpu.concatenate %42, %44, %46, %48, %50, %52, %54, %56, %58 in 1 : vector<256x32xbf16>, vector<256x32xbf16>, vector<256x32xbf16>, vector<256x32xbf16>, vector<256x32xbf16>, vector<256x32xbf16>, vector<256x32xbf16>, vector<256x32xbf16>, vector<256x32xbf16> -> vector<256x288xbf16>
    %c0_40 = arith.constant 0 : index
    %c0_41 = arith.constant 0 : index
    %60 = vector.load %arg4[%c0_40, %c0_41] : memref<288x32xbf16, #tpu.memory_space<vmem>>, vector<288x32xbf16>
    %cst_42 = arith.constant dense<0.000000e+00> : vector<256x32xf32>
    %61 = tpu.matmul %59, %60, %cst_42 {dimension_numbers = #tpu.dot_dimension_numbers<[1], [0], [0], [1], [0, 0, 1, 1], [], []>} : vector<256x288xbf16>, vector<288x32xbf16>, vector<256x32xf32> -> vector<256x32xf32>
    %c0_43 = arith.constant 0 : index
    %c0_44 = arith.constant 0 : index
    %62 = vector.load %arg5[%c0_43, %c0_44] : memref<1x32xf32, #tpu.memory_space<vmem>>, vector<1x32xf32>
    %63 = vector.broadcast %62 : vector<1x32xf32> to vector<256x32xf32>
    %64 = arith.addf %61, %63 : vector<256x32xf32>
    %cst_45 = arith.constant 0.000000e+00 : f32
    %65 = vector.broadcast %cst_45 : f32 to vector<256x32xf32>
    %66 = arith.maximumf %64, %65 : vector<256x32xf32>
    %cst_46 = arith.constant dense<0.000000e+00> : vector<32xf32>
    %67 = vector.multi_reduction <add>, %66, %cst_46 [0] : vector<256x32xf32> to vector<32xf32>
    %68 = vector.shape_cast %67 : vector<32xf32> to vector<1x32xf32>
    %cst_47 = arith.constant 2.560000e+02 : f32
    %69 = vector.broadcast %cst_47 : f32 to vector<1x32xf32>
    %70 = arith.divf %68, %69 : vector<1x32xf32>
    %c0_48 = arith.constant 0 : index
    %c0_49 = arith.constant 0 : index
    %71 = vector.load %arg6[%c0_48, %c0_49] : memref<8x32xf32, #tpu.memory_space<vmem>>, vector<8x32xf32>
    %72 = vector.broadcast %70 : vector<1x32xf32> to vector<8x32xf32>
    %73 = arith.mulf %72, %71 : vector<8x32xf32>
    %cst_50 = arith.constant dense<0.000000e+00> : vector<8xf32>
    %74 = vector.multi_reduction <add>, %73, %cst_50 [1] : vector<8x32xf32> to vector<8xf32>
    %75 = vector.shape_cast %74 : vector<8xf32> to vector<8x1xf32>
    %cst_51 = arith.constant 0.000000e+00 : f32
    %76 = vector.broadcast %cst_51 : f32 to vector<8x1xf32>
    %77 = arith.maximumf %75, %76 : vector<8x1xf32>
    %c0_52 = arith.constant 0 : index
    %c0_53 = arith.constant 0 : index
    %78 = vector.load %arg7[%c0_52, %c0_53] : memref<8x32xf32, #tpu.memory_space<vmem>>, vector<8x32xf32>
    %79 = vector.broadcast %77 : vector<8x1xf32> to vector<8x32xf32>
    %80 = arith.mulf %79, %78 : vector<8x32xf32>
    %cst_54 = arith.constant dense<0.000000e+00> : vector<32xf32>
    %81 = vector.multi_reduction <add>, %80, %cst_54 [0] : vector<8x32xf32> to vector<32xf32>
    %82 = vector.shape_cast %81 : vector<32xf32> to vector<1x32xf32>
    %83 = arith.negf %82 : vector<1x32xf32>
    %84 = math.exp %83 : vector<1x32xf32>
    %cst_55 = arith.constant 1.000000e+00 : f32
    %85 = vector.broadcast %cst_55 : f32 to vector<1x32xf32>
    %86 = arith.addf %85, %84 : vector<1x32xf32>
    %87 = arith.divf %85, %86 : vector<1x32xf32>
    %88 = vector.broadcast %87 : vector<1x32xf32> to vector<256x32xf32>
    %89 = arith.mulf %66, %88 : vector<256x32xf32>
    %90 = tpu.transpose %89, [1, 0] : vector<256x32xf32> -> vector<32x256xf32>
    %c0_56 = arith.constant 0 : index
    %c0_57 = arith.constant 0 : index
    %c0_58 = arith.constant 0 : index
    %91 = vector.load %arg8[%c0_56, %c0_57, %c0_58] : memref<1x32x256xf32, #tpu.memory_space<vmem>>, vector<1x32x256xf32>
    %92 = vector.shape_cast %91 : vector<1x32x256xf32> to vector<32x256xf32>
    %93 = vector.shape_cast %90 : vector<32x256xf32> to vector<1x32x256xf32>
    tpu.vector_store %arg8[%c0_56, %c0_57, %c0_58], %93 {strides = array<i32>} : memref<1x32x256xf32, #tpu.memory_space<vmem>>, vector<1x32x256xf32>,
    return
  }
  func.func @transform_0(%arg0: i32) -> (i32, i32, i32, i32) {
    %c0_i32 = arith.constant 0 : i32
    %c0_i32_0 = arith.constant 0 : i32
    %c0_i32_1 = arith.constant 0 : i32
    %c0_i32_2 = arith.constant 0 : i32
    return %arg0, %c0_i32, %c0_i32_0, %c0_i32_1 : i32, i32, i32, i32
  }
  func.func @transform_1(%arg0: i32) -> (i32, i32) {
    %c0_i32 = arith.constant 0 : i32
    %c0_i32_0 = arith.constant 0 : i32
    %c0_i32_1 = arith.constant 0 : i32
    return %c0_i32, %c0_i32_0 : i32, i32
  }
  func.func @transform_2(%arg0: i32) -> (i32, i32) {
    %c0_i32 = arith.constant 0 : i32
    %c0_i32_0 = arith.constant 0 : i32
    %c0_i32_1 = arith.constant 0 : i32
    return %c0_i32, %c0_i32_0 : i32, i32
  }
  func.func @transform_3(%arg0: i32) -> (i32, i32) {
    %c0_i32 = arith.constant 0 : i32
    %c0_i32_0 = arith.constant 0 : i32
    %c0_i32_1 = arith.constant 0 : i32
    return %c0_i32, %c0_i32_0 : i32, i32
  }
  func.func @transform_4(%arg0: i32) -> (i32, i32) {
    %c0_i32 = arith.constant 0 : i32
    %c0_i32_0 = arith.constant 0 : i32
    %c0_i32_1 = arith.constant 0 : i32
    return %c0_i32, %c0_i32_0 : i32, i32
  }
  func.func @transform_5(%arg0: i32) -> (i32, i32) {
    %c0_i32 = arith.constant 0 : i32
    %c0_i32_0 = arith.constant 0 : i32
    %c0_i32_1 = arith.constant 0 : i32
    return %c0_i32, %c0_i32_0 : i32, i32
  }
  func.func @transform_6(%arg0: i32) -> (i32, i32) {
    %c0_i32 = arith.constant 0 : i32
    %c0_i32_0 = arith.constant 0 : i32
    %c0_i32_1 = arith.constant 0 : i32
    return %c0_i32, %c0_i32_0 : i32, i32
  }
  func.func @transform_7(%arg0: i32) -> (i32, i32, i32) {
    %c0_i32 = arith.constant 0 : i32
    %c0_i32_0 = arith.constant 0 : i32
    %c0_i32_1 = arith.constant 0 : i32
    return %arg0, %c0_i32, %c0_i32_0 : i32, i32, i32
  }
}

</mosaic_0001>

<llo_original>
// kernel: up_skip_se_forward.1
$region0: #{up_skip_se_forward.1}
  #allocation0 [shape = 'u32[]', space=smem, size = 0x4, offset = 0x4, fixed_abs, tag = 'smem constant byte address 0x4 - core index']
  #allocation1 [shape = 'u32[144,128]{1,0:T(1,128)}', space=vmem, size = 0x12000, scoped, tag = 'internal scratch']
  %s0 = inlined_call_operand.vmem [shape: bf16[2,18,18,32], index: 0, kind: input, shape index: {}]
  %s1 = inlined_call_operand.vmem [shape: bf16[288,32], index: 1, kind: input, shape index: {}]
  %s2 = inlined_call_operand.vmem [shape: f32[1,32], index: 2, kind: input, shape index: {}]
  %s3 = inlined_call_operand.vmem [shape: bf16[288,32], index: 3, kind: input, shape index: {}]
  %s4 = inlined_call_operand.vmem [shape: f32[1,32], index: 4, kind: input, shape index: {}]
  %s5 = inlined_call_operand.vmem [shape: f32[8,32], index: 5, kind: input, shape index: {}]
  %s6 = inlined_call_operand.vmem [shape: f32[8,32], index: 6, kind: input, shape index: {}]
  %s7 = inlined_call_operand.vmem [shape: f32[2,32,256], index: 7, kind: output, shape index: {}]
  %s8 = sld [smem:[#allocation0]]
  $region61: #{up_skip_se_forward.1} parent=0
    _
  %s10 = ssub.s32 1, %s8
  %s11 = scalar_select 0, %s10, %s8
  loop: start=0, step=1, limit=4
  $region2: #{up_skip_se_forward.1} parent=0 // loop_pre_header
    _
  $region3: #{up_skip_se_forward.1} parent=0 // loop_header
    %s13 = sphi 0, %s17
    %p14 = scmp.ge.s32.totalorder %s13, 4
    %s23 = sphi 0, %s25
    %s26 = sphi 0, %s23
    %s27 = sphi 0, %s26
    %s43 = sphi 0, %s27
    %s47 = sphi 0, %s47
    %s49 = sphi 0, %s47
    %s50 = sphi 0, %s49
    %s64 = sphi 0, %s50
    %s68 = sphi 0, %s68
    %s70 = sphi 0, %s68
    %s71 = sphi 0, %s70
    %s85 = sphi 0, %s71
    %s89 = sphi 0, %s89
    %s91 = sphi 0, %s89
    %s92 = sphi 0, %s91
    %s106 = sphi 0, %s92
    %s110 = sphi 0, %s110
    %s112 = sphi 0, %s110
    %s113 = sphi 0, %s112
    %s127 = sphi 0, %s113
    %s131 = sphi 0, %s131
    %s133 = sphi 0, %s131
    %s134 = sphi 0, %s133
    %s148 = sphi 0, %s134
    %s152 = sphi 0, %s152
    %s154 = sphi 0, %s152
    %s155 = sphi 0, %s154
    %s169 = sphi 0, %s155
    %s175 = sphi 0, %s177
    %s178 = sphi 0, %s175
    %s179 = sphi 0, %s178
    %s195 = sphi 0, %s179
  $region4: #{up_skip_se_forward.1} parent=0 // loop_header_branch
    %16 = sbr.rel (%p14) target = $region8
  $region5: #{up_skip_se_forward.1} parent=0 // loop_body
    %s18 = ssub.s32 %s13, 1
    %s19 = ssub.s32 %s13, 2
    %s20 = sadd.s32 %s13, 1
    %s21 = ssub.s32 %s13, %s20
    %p22 = scmp.eq.s32.totalorder %s21, 0
    %s24 = sadd.s32 %s23, 1
    %s25 = scalar_select %p22, %s23, %s24
    %p28 = pneg %p22
    %p29 = scmp.eq.s32.totalorder %s13, 1
    %p30 = por %p28, %p29
    %p31 = scmp.ne.s32.totalorder %s23, %s26
    %p32 = scmp.eq.s32.totalorder %s13, 0
    %p33 = por %p31, %p32
    %p34 = scmp.ne.s32.totalorder %s23, %s26
    %p35 = scmp.eq.s32.totalorder %s18, 1
    %p36 = por %p34, %p35
    %p37 = scmp.ne.s32.totalorder %s26, %s27
    %p38 = scmp.eq.s32.totalorder %s18, 0
    %p39 = por %p37, %p38
    %p40 = scmp.ne.s32.totalorder %s26, %s27
    %p41 = scmp.eq.s32.totalorder %s19, 1
    %p42 = por %p40, %p41
    %p44 = scmp.ne.s32.totalorder %s27, %s43
    %p45 = scmp.eq.s32.totalorder %s19, 0
    %p46 = por %p44, %p45
    %s48 = sadd.s32 %s47, 1
    %p51 = scmp.eq.s32.totalorder %s13, 1
    %p52 = scmp.ne.s32.totalorder %s47, %s49
    %p53 = scmp.eq.s32.totalorder %s13, 0
    %p54 = por %p52, %p53
    %p55 = scmp.ne.s32.totalorder %s47, %s49
    %p56 = scmp.eq.s32.totalorder %s18, 1
    %p57 = por %p55, %p56
    %p58 = scmp.ne.s32.totalorder %s49, %s50
    %p59 = scmp.eq.s32.totalorder %s18, 0
    %p60 = por %p58, %p59
    %p61 = scmp.ne.s32.totalorder %s49, %s50
    %p62 = scmp.eq.s32.totalorder %s19, 1
    %p63 = por %p61, %p62
    %p65 = scmp.ne.s32.totalorder %s50, %s64
    %p66 = scmp.eq.s32.totalorder %s19, 0
    %p67 = por %p65, %p66
    %s69 = sadd.s32 %s68, 1
    %p72 = scmp.eq.s32.totalorder %s13, 1
    %p73 = scmp.ne.s32.totalorder %s68, %s70
    %p74 = scmp.eq.s32.totalorder %s13, 0
    %p75 = por %p73, %p74
    %p76 = scmp.ne.s32.totalorder %s68, %s70
    %p77 = scmp.eq.s32.totalorder %s18, 1
    %p78 = por %p76, %p77
    %p79 = scmp.ne.s32.totalorder %s70, %s71
    %p80 = scmp.eq.s32.totalorder %s18, 0
    %p81 = por %p79, %p80
    %p82 = scmp.ne.s32.totalorder %s70, %s71
    %p83 = scmp.eq.s32.totalorder %s19, 1
    %p84 = por %p82, %p83
    %p86 = scmp.ne.s32.totalorder %s71, %s85
    %p87 = scmp.eq.s32.totalorder %s19, 0
    %p88 = por %p86, %p87
    %s90 = sadd.s32 %s89, 1
    %p93 = scmp.eq.s32.totalorder %s13, 1
    %p94 = scmp.ne.s32.totalorder %s89, %s91
    %p95 = scmp.eq.s32.totalorder %s13, 0
    %p96 = por %p94, %p95
    %p97 = scmp.ne.s32.totalorder %s89, %s91
    %p98 = scmp.eq.s32.totalorder %s18, 1
    %p99 = por %p97, %p98
    %p100 = scmp.ne.s32.totalorder %s91, %s92
    %p101 = scmp.eq.s32.totalorder %s18, 0
    %p102 = por %p100, %p101
    %p103 = scmp.ne.s32.totalorder %s91, %s92
    %p104 = scmp.eq.s32.totalorder %s19, 1
    %p105 = por %p103, %p104
    %p107 = scmp.ne.s32.totalorder %s92, %s106
    %p108 = scmp.eq.s32.totalorder %s19, 0
    %p109 = por %p107, %p108
    %s111 = sadd.s32 %s110, 1
    %p114 = scmp.eq.s32.totalorder %s13, 1
    %p115 = scmp.ne.s32.totalorder %s110, %s112
    %p116 = scmp.eq.s32.totalorder %s13, 0
    %p117 = por %p115, %p116
    %p118 = scmp.ne.s32.totalorder %s110, %s112
    %p119 = scmp.eq.s32.totalorder %s18, 1
    %p120 = por %p118, %p119
    %p121 = scmp.ne.s32.totalorder %s112, %s113
    %p122 = scmp.eq.s32.totalorder %s18, 0
    %p123 = por %p121, %p122
    %p124 = scmp.ne.s32.totalorder %s112, %s113
    %p125 = scmp.eq.s32.totalorder %s19, 1
    %p126 = por %p124, %p125
    %p128 = scmp.ne.s32.totalorder %s113, %s127
    %p129 = scmp.eq.s32.totalorder %s19, 0
    %p130 = por %p128, %p129
    %s132 = sadd.s32 %s131, 1
    %p135 = scmp.eq.s32.totalorder %s13, 1
    %p136 = scmp.ne.s32.totalorder %s131, %s133
    %p137 = scmp.eq.s32.totalorder %s13, 0
    %p138 = por %p136, %p137
    %p139 = scmp.ne.s32.totalorder %s131, %s133
    %p140 = scmp.eq.s32.totalorder %s18, 1
    %p141 = por %p139, %p140
    %p142 = scmp.ne.s32.totalorder %s133, %s134
    %p143 = scmp.eq.s32.totalorder %s18, 0
    %p144 = por %p142, %p143
    %p145 = scmp.ne.s32.totalorder %s133, %s134
    %p146 = scmp.eq.s32.totalorder %s19, 1
    %p147 = por %p145, %p146
    %p149 = scmp.ne.s32.totalorder %s134, %s148
    %p150 = scmp.eq.s32.totalorder %s19, 0
    %p151 = por %p149, %p150
    %s153 = sadd.s32 %s152, 1
    %p156 = scmp.eq.s32.totalorder %s13, 1
    %p157 = scmp.ne.s32.totalorder %s152, %s154
    %p158 = scmp.eq.s32.totalorder %s13, 0
    %p159 = por %p157, %p158
    %p160 = scmp.ne.s32.totalorder %s152, %s154
    %p161 = scmp.eq.s32.totalorder %s18, 1
    %p162 = por %p160, %p161
    %p163 = scmp.ne.s32.totalorder %s154, %s155
    %p164 = scmp.eq.s32.totalorder %s18, 0
    %p165 = por %p163, %p164
    %p166 = scmp.ne.s32.totalorder %s154, %s155
    %p167 = scmp.eq.s32.totalorder %s19, 1
    %p168 = por %p166, %p167
    %p170 = scmp.ne.s32.totalorder %s155, %s169
    %p171 = scmp.eq.s32.totalorder %s19, 0
    %p172 = por %p170, %p171
    %s173 = ssub.s32 %s13, %s20
    %p174 = scmp.eq.s32.totalorder %s173, 0
    %s176 = sadd.s32 %s175, 1
    %s177 = scalar_select %p174, %s175, %s176
    %p180 = pneg %p174
    %p181 = scmp.eq.s32.totalorder %s13, 1
    %p182 = por %p180, %p181
    %p183 = scmp.ne.s32.totalorder %s175, %s178
    %p184 = scmp.eq.s32.totalorder %s13, 0
    %p185 = por %p183, %p184
    %p186 = scmp.ne.s32.totalorder %s175, %s178
    %p187 = scmp.eq.s32.totalorder %s18, 1
    %p188 = por %p186, %p187
    %p189 = scmp.ne.s32.totalorder %s178, %s179
    %p190 = scmp.eq.s32.totalorder %s18, 0
    %p191 = por %p189, %p190
    %p192 = scmp.ne.s32.totalorder %s178, %s179
    %p193 = scmp.eq.s32.totalorder %s19, 1
    %p194 = por %p192, %p193
    %p196 = scmp.ne.s32.totalorder %s179, %s195
    %p197 = scmp.eq.s32.totalorder %s19, 0
    %p198 = por %p196, %p197
    %p199 = scmp.le.s32.totalorder 1, %s13
    %p200 = scmp.lt.s32.totalorder %s13, 3
    %p201 = pnand %p199, %p200
    %p202 = pneg %p201
    // Predicated region
    $region9: #{up_skip_se_forward.1} parent=5 // pred_check
      _
    $region10: #{up_skip_se_forward.1} parent=5 // pred_check_branch
      %204 = sbr.rel (%p201) target = $region12
    $region11: #{up_skip_se_forward.1} parent=5 // pred_region
      %s205 = ssub.s32 %s13, 1
      // Predicated region
      $region13: #{up_skip_se_forward.1} parent=11 // pred_check
        %p206 = pneg %p60
      $region14: #{up_skip_se_forward.1} parent=11 // pred_check_branch
        %208 = sbr.rel (%p206) target = $region16
      $region15: #{up_skip_se_forward.1} parent=11 // pred_region
        _
      $region16: #{up_skip_se_forward.1} parent=11 // pred_fallthru
        _
      // Predicated region
      $region17: #{up_skip_se_forward.1} parent=11 // pred_check
        %p209 = pneg %p81
      $region18: #{up_skip_se_forward.1} parent=11 // pred_check_branch
        %211 = sbr.rel (%p209) target = $region20
      $region19: #{up_skip_se_forward.1} parent=11 // pred_region
        _
      $region20: #{up_skip_se_forward.1} parent=11 // pred_fallthru
        _
      // Predicated region
      $region21: #{up_skip_se_forward.1} parent=11 // pred_check
        %p212 = pneg %p102
      $region22: #{up_skip_se_forward.1} parent=11 // pred_check_branch
        %214 = sbr.rel (%p212) target = $region24
      $region23: #{up_skip_se_forward.1} parent=11 // pred_region
        _
      $region24: #{up_skip_se_forward.1} parent=11 // pred_fallthru
        _
      // Predicated region
      $region25: #{up_skip_se_forward.1} parent=11 // pred_check
        %p215 = pneg %p123
      $region26: #{up_skip_se_forward.1} parent=11 // pred_check_branch
        %217 = sbr.rel (%p215) target = $region28
      $region27: #{up_skip_se_forward.1} parent=11 // pred_region
        _
      $region28: #{up_skip_se_forward.1} parent=11 // pred_fallthru
        _
      // Predicated region
      $region29: #{up_skip_se_forward.1} parent=11 // pred_check
        %p218 = pneg %p144
      $region30: #{up_skip_se_forward.1} parent=11 // pred_check_branch
        %220 = sbr.rel (%p218) target = $region32
      $region31: #{up_skip_se_forward.1} parent=11 // pred_region
        _
      $region32: #{up_skip_se_forward.1} parent=11 // pred_fallthru
        _
      // Predicated region
      $region33: #{up_skip_se_forward.1} parent=11 // pred_check
        %p221 = pneg %p165
      $region34: #{up_skip_se_forward.1} parent=11 // pred_check_branch
        %223 = sbr.rel (%p221) target = $region36
      $region35: #{up_skip_se_forward.1} parent=11 // pred_region
        _
      $region36: #{up_skip_se_forward.1} parent=11 // pred_fallthru
        _
    $region12: #{up_skip_se_forward.1} parent=5 // pred_fallthru
      _
    %p224 = scmp.lt.s32.totalorder %s13, 2
    // Predicated region
    $region37: #{up_skip_se_forward.1} parent=5 // pred_check
      %p225 = pneg %p224
    $region38: #{up_skip_se_forward.1} parent=5 // pred_check_branch
      %227 = sbr.rel (%p225) target = $region40
    $region39: #{up_skip_se_forward.1} parent=5 // pred_region
      // Predicated region
      $region41: #{up_skip_se_forward.1} parent=39 // pred_check
        %p228 = pneg %p33
      $region42: #{up_skip_se_forward.1} parent=39 // pred_check_branch
        %230 = sbr.rel (%p228) target = $region44
      $region43: #{up_skip_se_forward.1} parent=39 // pred_region
        %p231 = scmp.lt.s32.totalorder %s13, 1
        %s232 = scalar_select %p231, %s13, 1
        %s233 = smul.addr %s232, 54
        %s234 = smul.addr %s233, 4
        %s235 = scalar_lea.vmem %s0, %s234
      $region44: #{up_skip_se_forward.1} parent=39 // pred_fallthru
        _
    $region40: #{up_skip_se_forward.1} parent=5 // pred_fallthru
      _
    %p236 = scmp.le.s32.totalorder 1, %s13
    %p237 = scmp.lt.s32.totalorder %s13, 3
    %p238 = pnand %p236, %p237
    %p239 = pneg %p238
    // Predicated region
    $region45: #{up_skip_se_forward.1} parent=5 // pred_check
      _
    $region46: #{up_skip_se_forward.1} parent=5 // pred_check_branch
      %241 = sbr.rel (%p238) target = $region48
    $region47: #{up_skip_se_forward.1} parent=5 // pred_region
      %s242 = ssub.s32 %s13, 1
      %p243 = scmp.lt.s32.totalorder %s18, 1
      %s244 = scalar_select %p243, %s18, 1
      %s245 = smul.addr %s244, 54
      %s246 = smul.addr %s245, 4
      %s247 = scalar_lea.vmem %s0, %s246
      %p248 = pneg %p39
      %p249 = pneg %p36
      %p250 = pneg %p60
      %p251 = pneg %p57
      %p252 = pneg %p81
      %p253 = pneg %p78
      %p254 = pneg %p102
      %p255 = pneg %p99
      %p256 = pneg %p123
      %p257 = pneg %p120
      %p258 = pneg %p144
      %p259 = pneg %p141
      %p260 = pneg %p165
      %p261 = pneg %p162
      %p262 = pneg %p191
      %p263 = pneg %p188
      %p264 = scmp.lt.s32.totalorder %s18, 1
      %s265 = scalar_select %p264, %s18, 1
      %s266 = smul.addr %s265, 8
      %s267 = smul.addr %s266, 8
      %s268 = scalar_lea.vmem %s7, %s267
      %p269 = scmp.lt.s32.totalorder %s18, 1
      %s270 = scalar_select %p269, %s18, 1
      %s271 = smul.addr %s270, 54
      %s272 = smul.addr %s271, 4
      %s273 = scalar_lea.vmem %s0, %s272
      %p274 = scmp.lt.s32.totalorder %s18, 1
      %s275 = scalar_select %p274, %s18, 1
      %s276 = smul.addr %s275, 8
      %s277 = smul.addr %s276, 8
      %s278 = scalar_lea.vmem %s7, %s277
      %v280 = vld [vmem:[%s273] sm:$0xf]
      %v281 = vld [vmem:[%s273 + $0x4] sm:$0xf]
      %v282 = vld [vmem:[%s273 + $0xc] sm:$0xf]
      %v283 = vld [vmem:[%s273 + $0x10] sm:$0xf]
      %v284 = vld [vmem:[%s273 + $0x18] sm:$0xf]
      %v285 = vld [vmem:[%s273 + $0x1c] sm:$0xf]
      %v286 = vld [vmem:[%s273 + $0x24] sm:$0xf]
      %v287 = vld [vmem:[%s273 + $0x28] sm:$0xf]
      %v288 = vld [vmem:[%s273 + $0x30] sm:$0xf]
      %v289 = vld [vmem:[%s273 + $0x34] sm:$0xf]
      %v290 = vld [vmem:[%s273 + $0x3c] sm:$0xf]
      %v291 = vld [vmem:[%s273 + $0x40] sm:$0xf]
      %v292 = vld [vmem:[%s273 + $0x48] sm:$0xf]
      %v293 = vld [vmem:[%s273 + $0x4c] sm:$0xf]
      %v294 = vld [vmem:[%s273 + $0x54] sm:$0xf]
      %v295 = vld [vmem:[%s273 + $0x58] sm:$0xf]
      %v296 = vld [vmem:[%s273 + $0x60] sm:$0xf]
      %v297 = vld [vmem:[%s273 + $0x64] sm:$0xf]
      %v298 = vld [vmem:[%s273 + $0x6c] sm:$0xf]
      %v299 = vld [vmem:[%s273 + $0x70] sm:$0xf]
      %v300 = vld [vmem:[%s273 + $0x78] sm:$0xf]
      %v301 = vld [vmem:[%s273 + $0x7c] sm:$0xf]
      %v302 = vld [vmem:[%s273 + $0x84] sm:$0xf]
      %v303 = vld [vmem:[%s273 + $0x88] sm:$0xf]
      %v304 = vld [vmem:[%s273 + $0x90] sm:$0xf]
      %v305 = vld [vmem:[%s273 + $0x94] sm:$0xf]
      %v306 = vld [vmem:[%s273 + $0x9c] sm:$0xf]
      %v307 = vld [vmem:[%s273 + $0xa0] sm:$0xf]
      %v308 = vld [vmem:[%s273 + $0xa8] sm:$0xf]
      %v309 = vld [vmem:[%s273 + $0xac] sm:$0xf]
      %v310 = vld [vmem:[%s273 + $0xb4] sm:$0xf]
      %v311 = vld [vmem:[%s273 + $0xb8] sm:$0xf]
      %v312 = vld [vmem:[%s273 + $0x8] sm:$0x1]
      %v313 = vld [vmem:[%s273 + $0x14] sm:$0x1]
      %v314 = vld [vmem:[%s273 + $0x20] sm:$0x1]
      %v315 = vld [vmem:[%s273 + $0x2c] sm:$0x1]
      %v316 = vld [vmem:[%s273 + $0x38] sm:$0x1]
      %v317 = vld [vmem:[%s273 + $0x44] sm:$0x1]
      %v318 = vld [vmem:[%s273 + $0x50] sm:$0x1]
      %v319 = vld [vmem:[%s273 + $0x5c] sm:$0x1]
      %v320 = vld [vmem:[%s273 + $0x68] sm:$0x1]
      %v321 = vld [vmem:[%s273 + $0x74] sm:$0x1]
      %v322 = vld [vmem:[%s273 + $0x80] sm:$0x1]
      %v323 = vld [vmem:[%s273 + $0x8c] sm:$0x1]
      %v324 = vld [vmem:[%s273 + $0x98] sm:$0x1]
      %v325 = vld [vmem:[%s273 + $0xa4] sm:$0x1]
      %v326 = vld [vmem:[%s273 + $0xb0] sm:$0x1]
      %v327 = vld [vmem:[%s273 + $0xbc] sm:$0x1]
      %vm328 = vsmask.f32 3328
      %vm329 = vsmask.f32 7440
      %vm330 = vmor %vm328, %vm329
      %v332 = vshrl.u32 %v280, 16
      %v334 = vrot.slane %v332, 4
      %v335 = vshll.u32 %v280, 16
      %v337 = vrot.slane %v335, 5
      %v338 = vor.u32 %v334, %v337
      %v339 = vrot.slane %v338, 4
      %v341 = vshll.u32 %v281, 16
      %v343 = vrot.slane %v341, 5
      %v344 = vsel %vm330, %v339, %v343
      %v345 = vshrl.u32 %v281, 16
      %v347 = vrot.slane %v345, 4
      %v348 = vor.u32 %v347, %v343
      %v349 = vrot.slane %v348, 4
      %v351 = vshll.u32 %v312, 16
      %v353 = vrot.slane %v351, 5
      %v354 = vsel %vm330, %v349, %v353
      %v356 = vshrl.u32 %v282, 16
      %v358 = vrot.slane %v356, 4
      %v359 = vshll.u32 %v282, 16
      %v361 = vrot.slane %v359, 5
      %v362 = vor.u32 %v358, %v361
      %v363 = vrot.slane %v362, 4
      %v365 = vshll.u32 %v283, 16
      %v367 = vrot.slane %v365, 5
      %v368 = vsel %vm330, %v363, %v367
      %v369 = vshrl.u32 %v283, 16
      %v371 = vrot.slane %v369, 4
      %v372 = vor.u32 %v371, %v367
      %v373 = vrot.slane %v372, 4
      %v375 = vshll.u32 %v313, 16
      %v377 = vrot.slane %v375, 5
      %v378 = vsel %vm330, %v373, %v377
      %v380 = vshrl.u32 %v284, 16
      %v382 = vrot.slane %v380, 4
      %v383 = vshll.u32 %v284, 16
      %v385 = vrot.slane %v383, 5
      %v386 = vor.u32 %v382, %v385
      %v387 = vrot.slane %v386, 4
      %v389 = vshll.u32 %v285, 16
      %v391 = vrot.slane %v389, 5
      %v392 = vsel %vm330, %v387, %v391
      %v393 = vshrl.u32 %v285, 16
      %v395 = vrot.slane %v393, 4
      %v396 = vor.u32 %v395, %v391
      %v397 = vrot.slane %v396, 4
      %v399 = vshll.u32 %v314, 16
      %v401 = vrot.slane %v399, 5
      %v402 = vsel %vm330, %v397, %v401
      %v404 = vshrl.u32 %v286, 16
      %v406 = vrot.slane %v404, 4
      %v407 = vshll.u32 %v286, 16
      %v409 = vrot.slane %v407, 5
      %v410 = vor.u32 %v406, %v409
      %v411 = vrot.slane %v410, 4
      %v413 = vshll.u32 %v287, 16
      %v415 = vrot.slane %v413, 5
      %v416 = vsel %vm330, %v411, %v415
      %v417 = vshrl.u32 %v287, 16
      %v419 = vrot.slane %v417, 4
      %v420 = vor.u32 %v419, %v415
      %v421 = vrot.slane %v420, 4
      %v423 = vshll.u32 %v315, 16
      %v425 = vrot.slane %v423, 5
      %v426 = vsel %vm330, %v421, %v425
      %v428 = vshrl.u32 %v288, 16
      %v430 = vrot.slane %v428, 4
      %v431 = vshll.u32 %v288, 16
      %v433 = vrot.slane %v431, 5
      %v434 = vor.u32 %v430, %v433
      %v435 = vrot.slane %v434, 4
      %v437 = vshll.u32 %v289, 16
      %v439 = vrot.slane %v437, 5
      %v440 = vsel %vm330, %v435, %v439
      %v441 = vshrl.u32 %v289, 16
      %v443 = vrot.slane %v441, 4
      %v444 = vor.u32 %v443, %v439
      %v445 = vrot.slane %v444, 4
      %v447 = vshll.u32 %v316, 16
      %v449 = vrot.slane %v447, 5
      %v450 = vsel %vm330, %v445, %v449
      %v452 = vshrl.u32 %v290, 16
      %v454 = vrot.slane %v452, 4
      %v455 = vshll.u32 %v290, 16
      %v457 = vrot.slane %v455, 5
      %v458 = vor.u32 %v454, %v457
      %v459 = vrot.slane %v458, 4
      %v461 = vshll.u32 %v291, 16
      %v463 = vrot.slane %v461, 5
      %v464 = vsel %vm330, %v459, %v463
      %v465 = vshrl.u32 %v291, 16
      %v467 = vrot.slane %v465, 4
      %v468 = vor.u32 %v467, %v463
      %v469 = vrot.slane %v468, 4
      %v471 = vshll.u32 %v317, 16
      %v473 = vrot.slane %v471, 5
      %v474 = vsel %vm330, %v469, %v473
      %v476 = vshrl.u32 %v292, 16
      %v478 = vrot.slane %v476, 4
      %v479 = vshll.u32 %v292, 16
      %v481 = vrot.slane %v479, 5
      %v482 = vor.u32 %v478, %v481
      %v483 = vrot.slane %v482, 4
      %v485 = vshll.u32 %v293, 16
      %v487 = vrot.slane %v485, 5
      %v488 = vsel %vm330, %v483, %v487
      %v489 = vshrl.u32 %v293, 16
      %v491 = vrot.slane %v489, 4
      %v492 = vor.u32 %v491, %v487
      %v493 = vrot.slane %v492, 4
      %v495 = vshll.u32 %v318, 16
      %v497 = vrot.slane %v495, 5
      %v498 = vsel %vm330, %v493, %v497
      %v500 = vshrl.u32 %v294, 16
      %v502 = vrot.slane %v500, 4
      %v503 = vshll.u32 %v294, 16
      %v505 = vrot.slane %v503, 5
      %v506 = vor.u32 %v502, %v505
      %v507 = vrot.slane %v506, 4
      %v509 = vshll.u32 %v295, 16
      %v511 = vrot.slane %v509, 5
      %v512 = vsel %vm330, %v507, %v511
      %v513 = vshrl.u32 %v295, 16
      %v515 = vrot.slane %v513, 4
      %v516 = vor.u32 %v515, %v511
      %v517 = vrot.slane %v516, 4
      %v519 = vshll.u32 %v319, 16
      %v521 = vrot.slane %v519, 5
      %v522 = vsel %vm330, %v517, %v521
      %v524 = vshrl.u32 %v296, 16
      %v526 = vrot.slane %v524, 4
      %v527 = vshll.u32 %v296, 16
      %v529 = vrot.slane %v527, 5
      %v530 = vor.u32 %v526, %v529
      %v531 = vrot.slane %v530, 4
      %v533 = vshll.u32 %v297, 16
      %v535 = vrot.slane %v533, 5
      %v536 = vsel %vm330, %v531, %v535
      %v537 = vshrl.u32 %v297, 16
      %v539 = vrot.slane %v537, 4
      %v540 = vor.u32 %v539, %v535
      %v541 = vrot.slane %v540, 4
      %v543 = vshll.u32 %v320, 16
      %v545 = vrot.slane %v543, 5
      %v546 = vsel %vm330, %v541, %v545
      %v548 = vshrl.u32 %v298, 16
      %v550 = vrot.slane %v548, 4
      %v551 = vshll.u32 %v298, 16
      %v553 = vrot.slane %v551, 5
      %v554 = vor.u32 %v550, %v553
      %v555 = vrot.slane %v554, 4
      %v557 = vshll.u32 %v299, 16
      %v559 = vrot.slane %v557, 5
      %v560 = vsel %vm330, %v555, %v559
      %v561 = vshrl.u32 %v299, 16
      %v563 = vrot.slane %v561, 4
      %v564 = vor.u32 %v563, %v559
      %v565 = vrot.slane %v564, 4
      %v567 = vshll.u32 %v321, 16
      %v569 = vrot.slane %v567, 5
      %v570 = vsel %vm330, %v565, %v569
      %v572 = vshrl.u32 %v300, 16
      %v574 = vrot.slane %v572, 4
      %v575 = vshll.u32 %v300, 16
      %v577 = vrot.slane %v575, 5
      %v578 = vor.u32 %v574, %v577
      %v579 = vrot.slane %v578, 4
      %v581 = vshll.u32 %v301, 16
      %v583 = vrot.slane %v581, 5
      %v584 = vsel %vm330, %v579, %v583
      %v585 = vshrl.u32 %v301, 16
      %v587 = vrot.slane %v585, 4
      %v588 = vor.u32 %v587, %v583
      %v589 = vrot.slane %v588, 4
      %v591 = vshll.u32 %v322, 16
      %v593 = vrot.slane %v591, 5
      %v594 = vsel %vm330, %v589, %v593
      %v596 = vshrl.u32 %v302, 16
      %v598 = vrot.slane %v596, 4
      %v599 = vshll.u32 %v302, 16
      %v601 = vrot.slane %v599, 5
      %v602 = vor.u32 %v598, %v601
      %v603 = vrot.slane %v602, 4
      %v605 = vshll.u32 %v303, 16
      %v607 = vrot.slane %v605, 5
      %v608 = vsel %vm330, %v603, %v607
      %v609 = vshrl.u32 %v303, 16
      %v611 = vrot.slane %v609, 4
      %v612 = vor.u32 %v611, %v607
      %v613 = vrot.slane %v612, 4
      %v615 = vshll.u32 %v323, 16
      %v617 = vrot.slane %v615, 5
      %v618 = vsel %vm330, %v613, %v617
      %v620 = vshrl.u32 %v304, 16
      %v622 = vrot.slane %v620, 4
      %v623 = vshll.u32 %v304, 16
      %v625 = vrot.slane %v623, 5
      %v626 = vor.u32 %v622, %v625
      %v627 = vrot.slane %v626, 4
      %v629 = vshll.u32 %v305, 16
      %v631 = vrot.slane %v629, 5
      %v632 = vsel %vm330, %v627, %v631
      %v633 = vshrl.u32 %v305, 16
      %v635 = vrot.slane %v633, 4
      %v636 = vor.u32 %v635, %v631
      %v637 = vrot.slane %v636, 4
      %v639 = vshll.u32 %v324, 16
      %v641 = vrot.slane %v639, 5
      %v642 = vsel %vm330, %v637, %v641
      %v644 = vshrl.u32 %v306, 16
      %v646 = vrot.slane %v644, 4
      %v647 = vshll.u32 %v306, 16
      %v649 = vrot.slane %v647, 5
      %v650 = vor.u32 %v646, %v649
      %v651 = vrot.slane %v650, 4
      %v653 = vshll.u32 %v307, 16
      %v655 = vrot.slane %v653, 5
      %v656 = vsel %vm330, %v651, %v655
      %v657 = vshrl.u32 %v307, 16
      %v659 = vrot.slane %v657, 4
      %v660 = vor.u32 %v659, %v655
      %v661 = vrot.slane %v660, 4
      %v663 = vshll.u32 %v325, 16
      %v665 = vrot.slane %v663, 5
      %v666 = vsel %vm330, %v661, %v665
      %v668 = vshrl.u32 %v308, 16
      %v670 = vrot.slane %v668, 4
      %v671 = vshll.u32 %v308, 16
      %v673 = vrot.slane %v671, 5
      %v674 = vor.u32 %v670, %v673
      %v675 = vrot.slane %v674, 4
      %v677 = vshll.u32 %v309, 16
      %v679 = vrot.slane %v677, 5
      %v680 = vsel %vm330, %v675, %v679
      %v681 = vshrl.u32 %v309, 16
      %v683 = vrot.slane %v681, 4
      %v684 = vor.u32 %v683, %v679
      %v685 = vrot.slane %v684, 4
      %v687 = vshll.u32 %v326, 16
      %v689 = vrot.slane %v687, 5
      %v690 = vsel %vm330, %v685, %v689
      %v692 = vshrl.u32 %v310, 16
      %v694 = vrot.slane %v692, 4
      %v695 = vshll.u32 %v310, 16
      %v697 = vrot.slane %v695, 5
      %v698 = vor.u32 %v694, %v697
      %v699 = vrot.slane %v698, 4
      %v701 = vshll.u32 %v311, 16
      %v703 = vrot.slane %v701, 5
      %v704 = vsel %vm330, %v699, %v703
      %v705 = vshrl.u32 %v311, 16
      %v707 = vrot.slane %v705, 4
      %v708 = vor.u32 %v707, %v703
      %v709 = vrot.slane %v708, 4
      %v711 = vshll.u32 %v327, 16
      %v713 = vrot.slane %v711, 5
      %v714 = vsel %vm330, %v709, %v713
      %v715 = vld [vmem:[%s273] sm:$0xe]
      %v716 = vld [vmem:[%s273 + $0xc] sm:$0xe]
      %v717 = vld [vmem:[%s273 + $0x18] sm:$0xe]
      %v718 = vld [vmem:[%s273 + $0x24] sm:$0xe]
      %v719 = vld [vmem:[%s273 + $0x30] sm:$0xe]
      %v720 = vld [vmem:[%s273 + $0x3c] sm:$0xe]
      %v721 = vld [vmem:[%s273 + $0x48] sm:$0xe]
      %v722 = vld [vmem:[%s273 + $0x54] sm:$0xe]
      %v723 = vld [vmem:[%s273 + $0x60] sm:$0xe]
      %v724 = vld [vmem:[%s273 + $0x6c] sm:$0xe]
      %v725 = vld [vmem:[%s273 + $0x78] sm:$0xe]
      %v726 = vld [vmem:[%s273 + $0x84] sm:$0xe]
      %v727 = vld [vmem:[%s273 + $0x90] sm:$0xe]
      %v728 = vld [vmem:[%s273 + $0x9c] sm:$0xe]
      %v729 = vld [vmem:[%s273 + $0xa8] sm:$0xe]
      %v730 = vld [vmem:[%s273 + $0xb4] sm:$0xe]
      %vm779 = vcmask 1042432
      %vm780 = vcmask 1046532
      %vm781 = vmor %vm779, %vm780
      %v782 = vrot.slane %v715, 5
      %v783 = vrot.slane %v782, 4
      %v784 = vrot.slane %v281, 5
      %v785 = vsel %vm781, %v783, %v784
      %v786 = vrot.slane %v784, 4
      %v787 = vrot.slane %v312, 5
      %v788 = vsel %vm781, %v786, %v787
      %v789 = vrot.slane %v716, 5
      %v790 = vrot.slane %v789, 4
      %v791 = vrot.slane %v283, 5
      %v792 = vsel %vm781, %v790, %v791
      %v793 = vrot.slane %v791, 4
      %v794 = vrot.slane %v313, 5
      %v795 = vsel %vm781, %v793, %v794
      %v796 = vrot.slane %v717, 5
      %v797 = vrot.slane %v796, 4
      %v798 = vrot.slane %v285, 5
      %v799 = vsel %vm781, %v797, %v798
      %v800 = vrot.slane %v798, 4
      %v801 = vrot.slane %v314, 5
      %v802 = vsel %vm781, %v800, %v801
      %v803 = vrot.slane %v718, 5
      %v804 = vrot.slane %v803, 4
      %v805 = vrot.slane %v287, 5
      %v806 = vsel %vm781, %v804, %v805
      %v807 = vrot.slane %v805, 4
      %v808 = vrot.slane %v315, 5
      %v809 = vsel %vm781, %v807, %v808
      %v810 = vrot.slane %v719, 5
      %v811 = vrot.slane %v810, 4
      %v812 = vrot.slane %v289, 5
      %v813 = vsel %vm781, %v811, %v812
      %v814 = vrot.slane %v812, 4
      %v815 = vrot.slane %v316, 5
      %v816 = vsel %vm781, %v814, %v815
      %v817 = vrot.slane %v720, 5
      %v818 = vrot.slane %v817, 4
      %v819 = vrot.slane %v291, 5
      %v820 = vsel %vm781, %v818, %v819
      %v821 = vrot.slane %v819, 4
      %v822 = vrot.slane %v317, 5
      %v823 = vsel %vm781, %v821, %v822
      %v824 = vrot.slane %v721, 5
      %v825 = vrot.slane %v824, 4
      %v826 = vrot.slane %v293, 5
      %v827 = vsel %vm781, %v825, %v826
      %v828 = vrot.slane %v826, 4
      %v829 = vrot.slane %v318, 5
      %v830 = vsel %vm781, %v828, %v829
      %v831 = vrot.slane %v722, 5
      %v832 = vrot.slane %v831, 4
      %v833 = vrot.slane %v295, 5
      %v834 = vsel %vm781, %v832, %v833
      %v835 = vrot.slane %v833, 4
      %v836 = vrot.slane %v319, 5
      %v837 = vsel %vm781, %v835, %v836
      %v838 = vrot.slane %v723, 5
      %v839 = vrot.slane %v838, 4
      %v840 = vrot.slane %v297, 5
      %v841 = vsel %vm781, %v839, %v840
      %v842 = vrot.slane %v840, 4
      %v843 = vrot.slane %v320, 5
      %v844 = vsel %vm781, %v842, %v843
      %v845 = vrot.slane %v724, 5
      %v846 = vrot.slane %v845, 4
      %v847 = vrot.slane %v299, 5
      %v848 = vsel %vm781, %v846, %v847
      %v849 = vrot.slane %v847, 4
      %v850 = vrot.slane %v321, 5
      %v851 = vsel %vm781, %v849, %v850
      %v852 = vrot.slane %v725, 5
      %v853 = vrot.slane %v852, 4
      %v854 = vrot.slane %v301, 5
      %v855 = vsel %vm781, %v853, %v854
      %v856 = vrot.slane %v854, 4
      %v857 = vrot.slane %v322, 5
      %v858 = vsel %vm781, %v856, %v857
      %v859 = vrot.slane %v726, 5
      %v860 = vrot.slane %v859, 4
      %v861 = vrot.slane %v303, 5
      %v862 = vsel %vm781, %v860, %v861
      %v863 = vrot.slane %v861, 4
      %v864 = vrot.slane %v323, 5
      %v865 = vsel %vm781, %v863, %v864
      %v866 = vrot.slane %v727, 5
      %v867 = vrot.slane %v866, 4
      %v868 = vrot.slane %v305, 5
      %v869 = vsel %vm781, %v867, %v868
      %v870 = vrot.slane %v868, 4
      %v871 = vrot.slane %v324, 5
      %v872 = vsel %vm781, %v870, %v871
      %v873 = vrot.slane %v728, 5
      %v874 = vrot.slane %v873, 4
      %v875 = vrot.slane %v307, 5
      %v876 = vsel %vm781, %v874, %v875
      %v877 = vrot.slane %v875, 4
      %v878 = vrot.slane %v325, 5
      %v879 = vsel %vm781, %v877, %v878
      %v880 = vrot.slane %v729, 5
      %v881 = vrot.slane %v880, 4
      %v882 = vrot.slane %v309, 5
      %v883 = vsel %vm781, %v881, %v882
      %v884 = vrot.slane %v882, 4
      %v885 = vrot.slane %v326, 5
      %v886 = vsel %vm781, %v884, %v885
      %v887 = vrot.slane %v730, 5
      %v888 = vrot.slane %v887, 4
      %v889 = vrot.slane %v311, 5
      %v890 = vsel %vm781, %v888, %v889
      %v891 = vrot.slane %v889, 4
      %v892 = vrot.slane %v327, 5
      %v893 = vsel %vm781, %v891, %v892
      %s894 = scalar_lea.vmem %s273, 12
      %v895 = vld [vmem:[%s894] sm:$0xf]
      %v896 = vld [vmem:[%s894 + $0x4] sm:$0xf]
      %v897 = vld [vmem:[%s894 + $0xc] sm:$0xf]
      %v898 = vld [vmem:[%s894 + $0x10] sm:$0xf]
      %v899 = vld [vmem:[%s894 + $0x18] sm:$0xf]
      %v900 = vld [vmem:[%s894 + $0x1c] sm:$0xf]
      %v901 = vld [vmem:[%s894 + $0x24] sm:$0xf]
      %v902 = vld [vmem:[%s894 + $0x28] sm:$0xf]
      %v903 = vld [vmem:[%s894 + $0x30] sm:$0xf]
      %v904 = vld [vmem:[%s894 + $0x34] sm:$0xf]
      %v905 = vld [vmem:[%s894 + $0x3c] sm:$0xf]
      %v906 = vld [vmem:[%s894 + $0x40] sm:$0xf]
      %v907 = vld [vmem:[%s894 + $0x48] sm:$0xf]
      %v908 = vld [vmem:[%s894 + $0x4c] sm:$0xf]
      %v909 = vld [vmem:[%s894 + $0x54] sm:$0xf]
      %v910 = vld [vmem:[%s894 + $0x58] sm:$0xf]
      %v911 = vld [vmem:[%s894 + $0x60] sm:$0xf]
      %v912 = vld [vmem:[%s894 + $0x64] sm:$0xf]
      %v913 = vld [vmem:[%s894 + $0x6c] sm:$0xf]
      %v914 = vld [vmem:[%s894 + $0x70] sm:$0xf]
      %v915 = vld [vmem:[%s894 + $0x78] sm:$0xf]
      %v916 = vld [vmem:[%s894 + $0x7c] sm:$0xf]
      %v917 = vld [vmem:[%s894 + $0x84] sm:$0xf]
      %v918 = vld [vmem:[%s894 + $0x88] sm:$0xf]
      %v919 = vld [vmem:[%s894 + $0x90] sm:$0xf]
      %v920 = vld [vmem:[%s894 + $0x94] sm:$0xf]
      %v921 = vld [vmem:[%s894 + $0x9c] sm:$0xf]
      %v922 = vld [vmem:[%s894 + $0xa0] sm:$0xf]
      %v923 = vld [vmem:[%s894 + $0xa8] sm:$0xf]
      %v924 = vld [vmem:[%s894 + $0xac] sm:$0xf]
      %v925 = vld [vmem:[%s894 + $0xb4] sm:$0xf]
      %v926 = vld [vmem:[%s894 + $0xb8] sm:$0xf]
      %v927 = vld [vmem:[%s894 + $0x8] sm:$0x1]
      %v928 = vld [vmem:[%s894 + $0x14] sm:$0x1]
      %v929 = vld [vmem:[%s894 + $0x20] sm:$0x1]
      %v930 = vld [vmem:[%s894 + $0x2c] sm:$0x1]
      %v931 = vld [vmem:[%s894 + $0x38] sm:$0x1]
      %v932 = vld [vmem:[%s894 + $0x44] sm:$0x1]
      %v933 = vld [vmem:[%s894 + $0x50] sm:$0x1]
      %v934 = vld [vmem:[%s894 + $0x5c] sm:$0x1]
      %v935 = vld [vmem:[%s894 + $0x68] sm:$0x1]
      %v936 = vld [vmem:[%s894 + $0x74] sm:$0x1]
      %v937 = vld [vmem:[%s894 + $0x80] sm:$0x1]
      %v938 = vld [vmem:[%s894 + $0x8c] sm:$0x1]
      %v939 = vld [vmem:[%s894 + $0x98] sm:$0x1]
      %v940 = vld [vmem:[%s894 + $0xa4] sm:$0x1]
      %v941 = vld [vmem:[%s894 + $0xb0] sm:$0x1]
      %v942 = vld [vmem:[%s894 + $0xbc] sm:$0x1]
      %v944 = vshrl.u32 %v895, 16
      %v946 = vrot.slane %v944, 4
      %v947 = vshll.u32 %v895, 16
      %v949 = vrot.slane %v947, 5
      %v950 = vor.u32 %v946, %v949
      %v951 = vrot.slane %v950, 4
      %v953 = vshll.u32 %v896, 16
      %v955 = vrot.slane %v953, 5
      %v956 = vsel %vm330, %v951, %v955
      %v957 = vshrl.u32 %v896, 16
      %v959 = vrot.slane %v957, 4
      %v960 = vor.u32 %v959, %v955
      %v961 = vrot.slane %v960, 4
      %v963 = vshll.u32 %v927, 16
      %v965 = vrot.slane %v963, 5
      %v966 = vsel %vm330, %v961, %v965
      %v968 = vshrl.u32 %v897, 16
      %v970 = vrot.slane %v968, 4
      %v971 = vshll.u32 %v897, 16
      %v973 = vrot.slane %v971, 5
      %v974 = vor.u32 %v970, %v973
      %v975 = vrot.slane %v974, 4
      %v977 = vshll.u32 %v898, 16
      %v979 = vrot.slane %v977, 5
      %v980 = vsel %vm330, %v975, %v979
      %v981 = vshrl.u32 %v898, 16
      %v983 = vrot.slane %v981, 4
      %v984 = vor.u32 %v983, %v979
      %v985 = vrot.slane %v984, 4
      %v987 = vshll.u32 %v928, 16
      %v989 = vrot.slane %v987, 5
      %v990 = vsel %vm330, %v985, %v989
      %v992 = vshrl.u32 %v899, 16
      %v994 = vrot.slane %v992, 4
      %v995 = vshll.u32 %v899, 16
      %v997 = vrot.slane %v995, 5
      %v998 = vor.u32 %v994, %v997
      %v999 = vrot.slane %v998, 4
      %v1001 = vshll.u32 %v900, 16
      %v1003 = vrot.slane %v1001, 5
      %v1004 = vsel %vm330, %v999, %v1003
      %v1005 = vshrl.u32 %v900, 16
      %v1007 = vrot.slane %v1005, 4
      %v1008 = vor.u32 %v1007, %v1003
      %v1009 = vrot.slane %v1008, 4
      %v1011 = vshll.u32 %v929, 16
      %v1013 = vrot.slane %v1011, 5
      %v1014 = vsel %vm330, %v1009, %v1013
      %v1016 = vshrl.u32 %v901, 16
      %v1018 = vrot.slane %v1016, 4
      %v1019 = vshll.u32 %v901, 16
      %v1021 = vrot.slane %v1019, 5
      %v1022 = vor.u32 %v1018, %v1021
      %v1023 = vrot.slane %v1022, 4
      %v1025 = vshll.u32 %v902, 16
      %v1027 = vrot.slane %v1025, 5
      %v1028 = vsel %vm330, %v1023, %v1027
      %v1029 = vshrl.u32 %v902, 16
      %v1031 = vrot.slane %v1029, 4
      %v1032 = vor.u32 %v1031, %v1027
      %v1033 = vrot.slane %v1032, 4
      %v1035 = vshll.u32 %v930, 16
      %v1037 = vrot.slane %v1035, 5
      %v1038 = vsel %vm330, %v1033, %v1037
      %v1040 = vshrl.u32 %v903, 16
      %v1042 = vrot.slane %v1040, 4
      %v1043 = vshll.u32 %v903, 16
      %v1045 = vrot.slane %v1043, 5
      %v1046 = vor.u32 %v1042, %v1045
      %v1047 = vrot.slane %v1046, 4
      %v1049 = vshll.u32 %v904, 16
      %v1051 = vrot.slane %v1049, 5
      %v1052 = vsel %vm330, %v1047, %v1051
      %v1053 = vshrl.u32 %v904, 16
      %v1055 = vrot.slane %v1053, 4
      %v1056 = vor.u32 %v1055, %v1051
      %v1057 = vrot.slane %v1056, 4
      %v1059 = vshll.u32 %v931, 16
      %v1061 = vrot.slane %v1059, 5
      %v1062 = vsel %vm330, %v1057, %v1061
      %v1064 = vshrl.u32 %v905, 16
      %v1066 = vrot.slane %v1064, 4
      %v1067 = vshll.u32 %v905, 16
      %v1069 = vrot.slane %v1067, 5
      %v1070 = vor.u32 %v1066, %v1069
      %v1071 = vrot.slane %v1070, 4
      %v1073 = vshll.u32 %v906, 16
      %v1075 = vrot.slane %v1073, 5
      %v1076 = vsel %vm330, %v1071, %v1075
      %v1077 = vshrl.u32 %v906, 16
      %v1079 = vrot.slane %v1077, 4
      %v1080 = vor.u32 %v1079, %v1075
      %v1081 = vrot.slane %v1080, 4
      %v1083 = vshll.u32 %v932, 16
      %v1085 = vrot.slane %v1083, 5
      %v1086 = vsel %vm330, %v1081, %v1085
      %v1088 = vshrl.u32 %v907, 16
      %v1090 = vrot.slane %v1088, 4
      %v1091 = vshll.u32 %v907, 16
      %v1093 = vrot.slane %v1091, 5
      %v1094 = vor.u32 %v1090, %v1093
      %v1095 = vrot.slane %v1094, 4
      %v1097 = vshll.u32 %v908, 16
      %v1099 = vrot.slane %v1097, 5
      %v1100 = vsel %vm330, %v1095, %v1099
      %v1101 = vshrl.u32 %v908, 16
      %v1103 = vrot.slane %v1101, 4
      %v1104 = vor.u32 %v1103, %v1099
      %v1105 = vrot.slane %v1104, 4
      %v1107 = vshll.u32 %v933, 16
      %v1109 = vrot.slane %v1107, 5
      %v1110 = vsel %vm330, %v1105, %v1109
      %v1112 = vshrl.u32 %v909, 16
      %v1114 = vrot.slane %v1112, 4
      %v1115 = vshll.u32 %v909, 16
      %v1117 = vrot.slane %v1115, 5
      %v1118 = vor.u32 %v1114, %v1117
      %v1119 = vrot.slane %v1118, 4
      %v1121 = vshll.u32 %v910, 16
      %v1123 = vrot.slane %v1121, 5
      %v1124 = vsel %vm330, %v1119, %v1123
      %v1125 = vshrl.u32 %v910, 16
      %v1127 = vrot.slane %v1125, 4
      %v1128 = vor.u32 %v1127, %v1123
      %v1129 = vrot.slane %v1128, 4
      %v1131 = vshll.u32 %v934, 16
      %v1133 = vrot.slane %v1131, 5
      %v1134 = vsel %vm330, %v1129, %v1133
      %v1136 = vshrl.u32 %v911, 16
      %v1138 = vrot.slane %v1136, 4
      %v1139 = vshll.u32 %v911, 16
      %v1141 = vrot.slane %v1139, 5
      %v1142 = vor.u32 %v1138, %v1141
      %v1143 = vrot.slane %v1142, 4
      %v1145 = vshll.u32 %v912, 16
      %v1147 = vrot.slane %v1145, 5
      %v1148 = vsel %vm330, %v1143, %v1147
      %v1149 = vshrl.u32 %v912, 16
      %v1151 = vrot.slane %v1149, 4
      %v1152 = vor.u32 %v1151, %v1147
      %v1153 = vrot.slane %v1152, 4
      %v1155 = vshll.u32 %v935, 16
      %v1157 = vrot.slane %v1155, 5
      %v1158 = vsel %vm330, %v1153, %v1157
      %v1160 = vshrl.u32 %v913, 16
      %v1162 = vrot.slane %v1160, 4
      %v1163 = vshll.u32 %v913, 16
      %v1165 = vrot.slane %v1163, 5
      %v1166 = vor.u32 %v1162, %v1165
      %v1167 = vrot.slane %v1166, 4
      %v1169 = vshll.u32 %v914, 16
      %v1171 = vrot.slane %v1169, 5
      %v1172 = vsel %vm330, %v1167, %v1171
      %v1173 = vshrl.u32 %v914, 16
      %v1175 = vrot.slane %v1173, 4
      %v1176 = vor.u32 %v1175, %v1171
      %v1177 = vrot.slane %v1176, 4
      %v1179 = vshll.u32 %v936, 16
      %v1181 = vrot.slane %v1179, 5
      %v1182 = vsel %vm330, %v1177, %v1181
      %v1184 = vshrl.u32 %v915, 16
      %v1186 = vrot.slane %v1184, 4
      %v1187 = vshll.u32 %v915, 16
      %v1189 = vrot.slane %v1187, 5
      %v1190 = vor.u32 %v1186, %v1189
      %v1191 = vrot.slane %v1190, 4
      %v1193 = vshll.u32 %v916, 16
      %v1195 = vrot.slane %v1193, 5
      %v1196 = vsel %vm330, %v1191, %v1195
      %v1197 = vshrl.u32 %v916, 16
      %v1199 = vrot.slane %v1197, 4
      %v1200 = vor.u32 %v1199, %v1195
      %v1201 = vrot.slane %v1200, 4
      %v1203 = vshll.u32 %v937, 16
      %v1205 = vrot.slane %v1203, 5
      %v1206 = vsel %vm330, %v1201, %v1205
      %v1208 = vshrl.u32 %v917, 16
      %v1210 = vrot.slane %v1208, 4
      %v1211 = vshll.u32 %v917, 16
      %v1213 = vrot.slane %v1211, 5
      %v1214 = vor.u32 %v1210, %v1213
      %v1215 = vrot.slane %v1214, 4
      %v1217 = vshll.u32 %v918, 16
      %v1219 = vrot.slane %v1217, 5
      %v1220 = vsel %vm330, %v1215, %v1219
      %v1221 = vshrl.u32 %v918, 16
      %v1223 = vrot.slane %v1221, 4
      %v1224 = vor.u32 %v1223, %v1219
      %v1225 = vrot.slane %v1224, 4
      %v1227 = vshll.u32 %v938, 16
      %v1229 = vrot.slane %v1227, 5
      %v1230 = vsel %vm330, %v1225, %v1229
      %v1232 = vshrl.u32 %v919, 16
      %v1234 = vrot.slane %v1232, 4
      %v1235 = vshll.u32 %v919, 16
      %v1237 = vrot.slane %v1235, 5
      %v1238 = vor.u32 %v1234, %v1237
      %v1239 = vrot.slane %v1238, 4
      %v1241 = vshll.u32 %v920, 16
      %v1243 = vrot.slane %v1241, 5
      %v1244 = vsel %vm330, %v1239, %v1243
      %v1245 = vshrl.u32 %v920, 16
      %v1247 = vrot.slane %v1245, 4
      %v1248 = vor.u32 %v1247, %v1243
      %v1249 = vrot.slane %v1248, 4
      %v1251 = vshll.u32 %v939, 16
      %v1253 = vrot.slane %v1251, 5
      %v1254 = vsel %vm330, %v1249, %v1253
      %v1256 = vshrl.u32 %v921, 16
      %v1258 = vrot.slane %v1256, 4
      %v1259 = vshll.u32 %v921, 16
      %v1261 = vrot.slane %v1259, 5
      %v1262 = vor.u32 %v1258, %v1261
      %v1263 = vrot.slane %v1262, 4
      %v1265 = vshll.u32 %v922, 16
      %v1267 = vrot.slane %v1265, 5
      %v1268 = vsel %vm330, %v1263, %v1267
      %v1269 = vshrl.u32 %v922, 16
      %v1271 = vrot.slane %v1269, 4
      %v1272 = vor.u32 %v1271, %v1267
      %v1273 = vrot.slane %v1272, 4
      %v1275 = vshll.u32 %v940, 16
      %v1277 = vrot.slane %v1275, 5
      %v1278 = vsel %vm330, %v1273, %v1277
      %v1280 = vshrl.u32 %v923, 16
      %v1282 = vrot.slane %v1280, 4
      %v1283 = vshll.u32 %v923, 16
      %v1285 = vrot.slane %v1283, 5
      %v1286 = vor.u32 %v1282, %v1285
      %v1287 = vrot.slane %v1286, 4
      %v1289 = vshll.u32 %v924, 16
      %v1291 = vrot.slane %v1289, 5
      %v1292 = vsel %vm330, %v1287, %v1291
      %v1293 = vshrl.u32 %v924, 16
      %v1295 = vrot.slane %v1293, 4
      %v1296 = vor.u32 %v1295, %v1291
      %v1297 = vrot.slane %v1296, 4
      %v1299 = vshll.u32 %v941, 16
      %v1301 = vrot.slane %v1299, 5
      %v1302 = vsel %vm330, %v1297, %v1301
      %v1304 = vshrl.u32 %v925, 16
      %v1306 = vrot.slane %v1304, 4
      %v1307 = vshll.u32 %v925, 16
      %v1309 = vrot.slane %v1307, 5
      %v1310 = vor.u32 %v1306, %v1309
      %v1311 = vrot.slane %v1310, 4
      %v1313 = vshll.u32 %v926, 16
      %v1315 = vrot.slane %v1313, 5
      %v1316 = vsel %vm330, %v1311, %v1315
      %v1317 = vshrl.u32 %v926, 16
      %v1319 = vrot.slane %v1317, 4
      %v1320 = vor.u32 %v1319, %v1315
      %v1321 = vrot.slane %v1320, 4
      %v1323 = vshll.u32 %v942, 16
      %v1325 = vrot.slane %v1323, 5
      %v1326 = vsel %vm330, %v1321, %v1325
      %v1327 = vld [vmem:[%s894] sm:$0xe]
      %v1328 = vld [vmem:[%s894 + $0xc] sm:$0xe]
      %v1329 = vld [vmem:[%s894 + $0x18] sm:$0xe]
      %v1330 = vld [vmem:[%s894 + $0x24] sm:$0xe]
      %v1331 = vld [vmem:[%s894 + $0x30] sm:$0xe]
      %v1332 = vld [vmem:[%s894 + $0x3c] sm:$0xe]
      %v1333 = vld [vmem:[%s894 + $0x48] sm:$0xe]
      %v1334 = vld [vmem:[%s894 + $0x54] sm:$0xe]
      %v1335 = vld [vmem:[%s894 + $0x60] sm:$0xe]
      %v1336 = vld [vmem:[%s894 + $0x6c] sm:$0xe]
      %v1337 = vld [vmem:[%s894 + $0x78] sm:$0xe]
      %v1338 = vld [vmem:[%s894 + $0x84] sm:$0xe]
      %v1339 = vld [vmem:[%s894 + $0x90] sm:$0xe]
      %v1340 = vld [vmem:[%s894 + $0x9c] sm:$0xe]
      %v1341 = vld [vmem:[%s894 + $0xa8] sm:$0xe]
      %v1342 = vld [vmem:[%s894 + $0xb4] sm:$0xe]
      %v1391 = vrot.slane %v1327, 5
      %v1392 = vrot.slane %v1391, 4
      %v1393 = vrot.slane %v896, 5
      %v1394 = vsel %vm781, %v1392, %v1393
      %v1395 = vrot.slane %v1393, 4
      %v1396 = vrot.slane %v927, 5
      %v1397 = vsel %vm781, %v1395, %v1396
      %v1398 = vrot.slane %v1328, 5
      %v1399 = vrot.slane %v1398, 4
      %v1400 = vrot.slane %v898, 5
      %v1401 = vsel %vm781, %v1399, %v1400
      %v1402 = vrot.slane %v1400, 4
      %v1403 = vrot.slane %v928, 5
      %v1404 = vsel %vm781, %v1402, %v1403
      %v1405 = vrot.slane %v1329, 5
      %v1406 = vrot.slane %v1405, 4
      %v1407 = vrot.slane %v900, 5
      %v1408 = vsel %vm781, %v1406, %v1407
      %v1409 = vrot.slane %v1407, 4
      %v1410 = vrot.slane %v929, 5
      %v1411 = vsel %vm781, %v1409, %v1410
      %v1412 = vrot.slane %v1330, 5
      %v1413 = vrot.slane %v1412, 4
      %v1414 = vrot.slane %v902, 5
      %v1415 = vsel %vm781, %v1413, %v1414
      %v1416 = vrot.slane %v1414, 4
      %v1417 = vrot.slane %v930, 5
      %v1418 = vsel %vm781, %v1416, %v1417
      %v1419 = vrot.slane %v1331, 5
      %v1420 = vrot.slane %v1419, 4
      %v1421 = vrot.slane %v904, 5
      %v1422 = vsel %vm781, %v1420, %v1421
      %v1423 = vrot.slane %v1421, 4
      %v1424 = vrot.slane %v931, 5
      %v1425 = vsel %vm781, %v1423, %v1424
      %v1426 = vrot.slane %v1332, 5
      %v1427 = vrot.slane %v1426, 4
      %v1428 = vrot.slane %v906, 5
      %v1429 = vsel %vm781, %v1427, %v1428
      %v1430 = vrot.slane %v1428, 4
      %v1431 = vrot.slane %v932, 5
      %v1432 = vsel %vm781, %v1430, %v1431
      %v1433 = vrot.slane %v1333, 5
      %v1434 = vrot.slane %v1433, 4
      %v1435 = vrot.slane %v908, 5
      %v1436 = vsel %vm781, %v1434, %v1435
      %v1437 = vrot.slane %v1435, 4
      %v1438 = vrot.slane %v933, 5
      %v1439 = vsel %vm781, %v1437, %v1438
      %v1440 = vrot.slane %v1334, 5
      %v1441 = vrot.slane %v1440, 4
      %v1442 = vrot.slane %v910, 5
      %v1443 = vsel %vm781, %v1441, %v1442
      %v1444 = vrot.slane %v1442, 4
      %v1445 = vrot.slane %v934, 5
      %v1446 = vsel %vm781, %v1444, %v1445
      %v1447 = vrot.slane %v1335, 5
      %v1448 = vrot.slane %v1447, 4
      %v1449 = vrot.slane %v912, 5
      %v1450 = vsel %vm781, %v1448, %v1449
      %v1451 = vrot.slane %v1449, 4
      %v1452 = vrot.slane %v935, 5
      %v1453 = vsel %vm781, %v1451, %v1452
      %v1454 = vrot.slane %v1336, 5
      %v1455 = vrot.slane %v1454, 4
      %v1456 = vrot.slane %v914, 5
      %v1457 = vsel %vm781, %v1455, %v1456
      %v1458 = vrot.slane %v1456, 4
      %v1459 = vrot.slane %v936, 5
      %v1460 = vsel %vm781, %v1458, %v1459
      %v1461 = vrot.slane %v1337, 5
      %v1462 = vrot.slane %v1461, 4
      %v1463 = vrot.slane %v916, 5
      %v1464 = vsel %vm781, %v1462, %v1463
      %v1465 = vrot.slane %v1463, 4
      %v1466 = vrot.slane %v937, 5
      %v1467 = vsel %vm781, %v1465, %v1466
      %v1468 = vrot.slane %v1338, 5
      %v1469 = vrot.slane %v1468, 4
      %v1470 = vrot.slane %v918, 5
      %v1471 = vsel %vm781, %v1469, %v1470
      %v1472 = vrot.slane %v1470, 4
      %v1473 = vrot.slane %v938, 5
      %v1474 = vsel %vm781, %v1472, %v1473
      %v1475 = vrot.slane %v1339, 5
      %v1476 = vrot.slane %v1475, 4
      %v1477 = vrot.slane %v920, 5
      %v1478 = vsel %vm781, %v1476, %v1477
      %v1479 = vrot.slane %v1477, 4
      %v1480 = vrot.slane %v939, 5
      %v1481 = vsel %vm781, %v1479, %v1480
      %v1482 = vrot.slane %v1340, 5
      %v1483 = vrot.slane %v1482, 4
      %v1484 = vrot.slane %v922, 5
      %v1485 = vsel %vm781, %v1483, %v1484
      %v1486 = vrot.slane %v1484, 4
      %v1487 = vrot.slane %v940, 5
      %v1488 = vsel %vm781, %v1486, %v1487
      %v1489 = vrot.slane %v1341, 5
      %v1490 = vrot.slane %v1489, 4
      %v1491 = vrot.slane %v924, 5
      %v1492 = vsel %vm781, %v1490, %v1491
      %v1493 = vrot.slane %v1491, 4
      %v1494 = vrot.slane %v941, 5
      %v1495 = vsel %vm781, %v1493, %v1494
      %v1496 = vrot.slane %v1342, 5
      %v1497 = vrot.slane %v1496, 4
      %v1498 = vrot.slane %v926, 5
      %v1499 = vsel %vm781, %v1497, %v1498
      %v1500 = vrot.slane %v1498, 4
      %v1501 = vrot.slane %v942, 5
      %v1502 = vsel %vm781, %v1500, %v1501
      %s1503 = scalar_lea.vmem %s273, 24
      %v1504 = vld [vmem:[%s1503] sm:$0xf]
      %v1505 = vld [vmem:[%s1503 + $0x4] sm:$0xf]
      %v1506 = vld [vmem:[%s1503 + $0xc] sm:$0xf]
      %v1507 = vld [vmem:[%s1503 + $0x10] sm:$0xf]
      %v1508 = vld [vmem:[%s1503 + $0x18] sm:$0xf]
      %v1509 = vld [vmem:[%s1503 + $0x1c] sm:$0xf]
      %v1510 = vld [vmem:[%s1503 + $0x24] sm:$0xf]
      %v1511 = vld [vmem:[%s1503 + $0x28] sm:$0xf]
      %v1512 = vld [vmem:[%s1503 + $0x30] sm:$0xf]
      %v1513 = vld [vmem:[%s1503 + $0x34] sm:$0xf]
      %v1514 = vld [vmem:[%s1503 + $0x3c] sm:$0xf]
      %v1515 = vld [vmem:[%s1503 + $0x40] sm:$0xf]
      %v1516 = vld [vmem:[%s1503 + $0x48] sm:$0xf]
      %v1517 = vld [vmem:[%s1503 + $0x4c] sm:$0xf]
      %v1518 = vld [vmem:[%s1503 + $0x54] sm:$0xf]
      %v1519 = vld [vmem:[%s1503 + $0x58] sm:$0xf]
      %v1520 = vld [vmem:[%s1503 + $0x60] sm:$0xf]
      %v1521 = vld [vmem:[%s1503 + $0x64] sm:$0xf]
      %v1522 = vld [vmem:[%s1503 + $0x6c] sm:$0xf]
      %v1523 = vld [vmem:[%s1503 + $0x70] sm:$0xf]
      %v1524 = vld [vmem:[%s1503 + $0x78] sm:$0xf]
      %v1525 = vld [vmem:[%s1503 + $0x7c] sm:$0xf]
      %v1526 = vld [vmem:[%s1503 + $0x84] sm:$0xf]
      %v1527 = vld [vmem:[%s1503 + $0x88] sm:$0xf]
      %v1528 = vld [vmem:[%s1503 + $0x90] sm:$0xf]
      %v1529 = vld [vmem:[%s1503 + $0x94] sm:$0xf]
      %v1530 = vld [vmem:[%s1503 + $0x9c] sm:$0xf]
      %v1531 = vld [vmem:[%s1503 + $0xa0] sm:$0xf]
      %v1532 = vld [vmem:[%s1503 + $0xa8] sm:$0xf]
      %v1533 = vld [vmem:[%s1503 + $0xac] sm:$0xf]
      %v1534 = vld [vmem:[%s1503 + $0xb4] sm:$0xf]
      %v1535 = vld [vmem:[%s1503 + $0xb8] sm:$0xf]
      %v1536 = vld [vmem:[%s1503 + $0x8] sm:$0x1]
      %v1537 = vld [vmem:[%s1503 + $0x14] sm:$0x1]
      %v1538 = vld [vmem:[%s1503 + $0x20] sm:$0x1]
      %v1539 = vld [vmem:[%s1503 + $0x2c] sm:$0x1]
      %v1540 = vld [vmem:[%s1503 + $0x38] sm:$0x1]
      %v1541 = vld [vmem:[%s1503 + $0x44] sm:$0x1]
      %v1542 = vld [vmem:[%s1503 + $0x50] sm:$0x1]
      %v1543 = vld [vmem:[%s1503 + $0x5c] sm:$0x1]
      %v1544 = vld [vmem:[%s1503 + $0x68] sm:$0x1]
      %v1545 = vld [vmem:[%s1503 + $0x74] sm:$0x1]
      %v1546 = vld [vmem:[%s1503 + $0x80] sm:$0x1]
      %v1547 = vld [vmem:[%s1503 + $0x8c] sm:$0x1]
      %v1548 = vld [vmem:[%s1503 + $0x98] sm:$0x1]
      %v1549 = vld [vmem:[%s1503 + $0xa4] sm:$0x1]
      %v1550 = vld [vmem:[%s1503 + $0xb0] sm:$0x1]
      %v1551 = vld [vmem:[%s1503 + $0xbc] sm:$0x1]
      %v1553 = vshrl.u32 %v1504, 16
      %v1555 = vrot.slane %v1553, 4
      %v1556 = vshll.u32 %v1504, 16
      %v1558 = vrot.slane %v1556, 5
      %v1559 = vor.u32 %v1555, %v1558
      %v1560 = vrot.slane %v1559, 4
      %v1562 = vshll.u32 %v1505, 16
      %v1564 = vrot.slane %v1562, 5
      %v1565 = vsel %vm330, %v1560, %v1564
      %v1566 = vshrl.u32 %v1505, 16
      %v1568 = vrot.slane %v1566, 4
      %v1569 = vor.u32 %v1568, %v1564
      %v1570 = vrot.slane %v1569, 4
      %v1572 = vshll.u32 %v1536, 16
      %v1574 = vrot.slane %v1572, 5
      %v1575 = vsel %vm330, %v1570, %v1574
      %v1577 = vshrl.u32 %v1506, 16
      %v1579 = vrot.slane %v1577, 4
      %v1580 = vshll.u32 %v1506, 16
      %v1582 = vrot.slane %v1580, 5
      %v1583 = vor.u32 %v1579, %v1582
      %v1584 = vrot.slane %v1583, 4
      %v1586 = vshll.u32 %v1507, 16
      %v1588 = vrot.slane %v1586, 5
      %v1589 = vsel %vm330, %v1584, %v1588
      %v1590 = vshrl.u32 %v1507, 16
      %v1592 = vrot.slane %v1590, 4
      %v1593 = vor.u32 %v1592, %v1588
      %v1594 = vrot.slane %v1593, 4
      %v1596 = vshll.u32 %v1537, 16
      %v1598 = vrot.slane %v1596, 5
      %v1599 = vsel %vm330, %v1594, %v1598
      %v1601 = vshrl.u32 %v1508, 16
      %v1603 = vrot.slane %v1601, 4
      %v1604 = vshll.u32 %v1508, 16
      %v1606 = vrot.slane %v1604, 5
      %v1607 = vor.u32 %v1603, %v1606
      %v1608 = vrot.slane %v1607, 4
      %v1610 = vshll.u32 %v1509, 16
      %v1612 = vrot.slane %v1610, 5
      %v1613 = vsel %vm330, %v1608, %v1612
      %v1614 = vshrl.u32 %v1509, 16
      %v1616 = vrot.slane %v1614, 4
      %v1617 = vor.u32 %v1616, %v1612
      %v1618 = vrot.slane %v1617, 4
      %v1620 = vshll.u32 %v1538, 16
      %v1622 = vrot.slane %v1620, 5
      %v1623 = vsel %vm330, %v1618, %v1622
      %v1625 = vshrl.u32 %v1510, 16
      %v1627 = vrot.slane %v1625, 4
      %v1628 = vshll.u32 %v1510, 16
      %v1630 = vrot.slane %v1628, 5
      %v1631 = vor.u32 %v1627, %v1630
      %v1632 = vrot.slane %v1631, 4
      %v1634 = vshll.u32 %v1511, 16
      %v1636 = vrot.slane %v1634, 5
      %v1637 = vsel %vm330, %v1632, %v1636
      %v1638 = vshrl.u32 %v1511, 16
      %v1640 = vrot.slane %v1638, 4
      %v1641 = vor.u32 %v1640, %v1636
      %v1642 = vrot.slane %v1641, 4
      %v1644 = vshll.u32 %v1539, 16
      %v1646 = vrot.slane %v1644, 5
      %v1647 = vsel %vm330, %v1642, %v1646
      %v1649 = vshrl.u32 %v1512, 16
      %v1651 = vrot.slane %v1649, 4
      %v1652 = vshll.u32 %v1512, 16
      %v1654 = vrot.slane %v1652, 5
      %v1655 = vor.u32 %v1651, %v1654
      %v1656 = vrot.slane %v1655, 4
      %v1658 = vshll.u32 %v1513, 16
      %v1660 = vrot.slane %v1658, 5
      %v1661 = vsel %vm330, %v1656, %v1660
      %v1662 = vshrl.u32 %v1513, 16
      %v1664 = vrot.slane %v1662, 4
      %v1665 = vor.u32 %v1664, %v1660
      %v1666 = vrot.slane %v1665, 4
      %v1668 = vshll.u32 %v1540, 16
      %v1670 = vrot.slane %v1668, 5
      %v1671 = vsel %vm330, %v1666, %v1670
      %v1673 = vshrl.u32 %v1514, 16
      %v1675 = vrot.slane %v1673, 4
      %v1676 = vshll.u32 %v1514, 16
      %v1678 = vrot.slane %v1676, 5
      %v1679 = vor.u32 %v1675, %v1678
      %v1680 = vrot.slane %v1679, 4
      %v1682 = vshll.u32 %v1515, 16
      %v1684 = vrot.slane %v1682, 5
      %v1685 = vsel %vm330, %v1680, %v1684
      %v1686 = vshrl.u32 %v1515, 16
      %v1688 = vrot.slane %v1686, 4
      %v1689 = vor.u32 %v1688, %v1684
      %v1690 = vrot.slane %v1689, 4
      %v1692 = vshll.u32 %v1541, 16
      %v1694 = vrot.slane %v1692, 5
      %v1695 = vsel %vm330, %v1690, %v1694
      %v1697 = vshrl.u32 %v1516, 16
      %v1699 = vrot.slane %v1697, 4
      %v1700 = vshll.u32 %v1516, 16
      %v1702 = vrot.slane %v1700, 5
      %v1703 = vor.u32 %v1699, %v1702
      %v1704 = vrot.slane %v1703, 4
      %v1706 = vshll.u32 %v1517, 16
      %v1708 = vrot.slane %v1706, 5
      %v1709 = vsel %vm330, %v1704, %v1708
      %v1710 = vshrl.u32 %v1517, 16
      %v1712 = vrot.slane %v1710, 4
      %v1713 = vor.u32 %v1712, %v1708
      %v1714 = vrot.slane %v1713, 4
      %v1716 = vshll.u32 %v1542, 16
      %v1718 = vrot.slane %v1716, 5
      %v1719 = vsel %vm330, %v1714, %v1718
      %v1721 = vshrl.u32 %v1518, 16
      %v1723 = vrot.slane %v1721, 4
      %v1724 = vshll.u32 %v1518, 16
      %v1726 = vrot.slane %v1724, 5
      %v1727 = vor.u32 %v1723, %v1726
      %v1728 = vrot.slane %v1727, 4
      %v1730 = vshll.u32 %v1519, 16
      %v1732 = vrot.slane %v1730, 5
      %v1733 = vsel %vm330, %v1728, %v1732
      %v1734 = vshrl.u32 %v1519, 16
      %v1736 = vrot.slane %v1734, 4
      %v1737 = vor.u32 %v1736, %v1732
      %v1738 = vrot.slane %v1737, 4
      %v1740 = vshll.u32 %v1543, 16
      %v1742 = vrot.slane %v1740, 5
      %v1743 = vsel %vm330, %v1738, %v1742
      %v1745 = vshrl.u32 %v1520, 16
      %v1747 = vrot.slane %v1745, 4
      %v1748 = vshll.u32 %v1520, 16
      %v1750 = vrot.slane %v1748, 5
      %v1751 = vor.u32 %v1747, %v1750
      %v1752 = vrot.slane %v1751, 4
      %v1754 = vshll.u32 %v1521, 16
      %v1756 = vrot.slane %v1754, 5
      %v1757 = vsel %vm330, %v1752, %v1756
      %v1758 = vshrl.u32 %v1521, 16
      %v1760 = vrot.slane %v1758, 4
      %v1761 = vor.u32 %v1760, %v1756
      %v1762 = vrot.slane %v1761, 4
      %v1764 = vshll.u32 %v1544, 16
      %v1766 = vrot.slane %v1764, 5
      %v1767 = vsel %vm330, %v1762, %v1766
      %v1769 = vshrl.u32 %v1522, 16
      %v1771 = vrot.slane %v1769, 4
      %v1772 = vshll.u32 %v1522, 16
      %v1774 = vrot.slane %v1772, 5
      %v1775 = vor.u32 %v1771, %v1774
      %v1776 = vrot.slane %v1775, 4
      %v1778 = vshll.u32 %v1523, 16
      %v1780 = vrot.slane %v1778, 5
      %v1781 = vsel %vm330, %v1776, %v1780
      %v1782 = vshrl.u32 %v1523, 16
      %v1784 = vrot.slane %v1782, 4
      %v1785 = vor.u32 %v1784, %v1780
      %v1786 = vrot.slane %v1785, 4
      %v1788 = vshll.u32 %v1545, 16
      %v1790 = vrot.slane %v1788, 5
      %v1791 = vsel %vm330, %v1786, %v1790
      %v1793 = vshrl.u32 %v1524, 16
      %v1795 = vrot.slane %v1793, 4
      %v1796 = vshll.u32 %v1524, 16
      %v1798 = vrot.slane %v1796, 5
      %v1799 = vor.u32 %v1795, %v1798
      %v1800 = vrot.slane %v1799, 4
      %v1802 = vshll.u32 %v1525, 16
      %v1804 = vrot.slane %v1802, 5
      %v1805 = vsel %vm330, %v1800, %v1804
      %v1806 = vshrl.u32 %v1525, 16
      %v1808 = vrot.slane %v1806, 4
      %v1809 = vor.u32 %v1808, %v1804
      %v1810 = vrot.slane %v1809, 4
      %v1812 = vshll.u32 %v1546, 16
      %v1814 = vrot.slane %v1812, 5
      %v1815 = vsel %vm330, %v1810, %v1814
      %v1817 = vshrl.u32 %v1526, 16
      %v1819 = vrot.slane %v1817, 4
      %v1820 = vshll.u32 %v1526, 16
      %v1822 = vrot.slane %v1820, 5
      %v1823 = vor.u32 %v1819, %v1822
      %v1824 = vrot.slane %v1823, 4
      %v1826 = vshll.u32 %v1527, 16
      %v1828 = vrot.slane %v1826, 5
      %v1829 = vsel %vm330, %v1824, %v1828
      %v1830 = vshrl.u32 %v1527, 16
      %v1832 = vrot.slane %v1830, 4
      %v1833 = vor.u32 %v1832, %v1828
      %v1834 = vrot.slane %v1833, 4
      %v1836 = vshll.u32 %v1547, 16
      %v1838 = vrot.slane %v1836, 5
      %v1839 = vsel %vm330, %v1834, %v1838
      %v1841 = vshrl.u32 %v1528, 16
      %v1843 = vrot.slane %v1841, 4
      %v1844 = vshll.u32 %v1528, 16
      %v1846 = vrot.slane %v1844, 5
      %v1847 = vor.u32 %v1843, %v1846
      %v1848 = vrot.slane %v1847, 4
      %v1850 = vshll.u32 %v1529, 16
      %v1852 = vrot.slane %v1850, 5
      %v1853 = vsel %vm330, %v1848, %v1852
      %v1854 = vshrl.u32 %v1529, 16
      %v1856 = vrot.slane %v1854, 4
      %v1857 = vor.u32 %v1856, %v1852
      %v1858 = vrot.slane %v1857, 4
      %v1860 = vshll.u32 %v1548, 16
      %v1862 = vrot.slane %v1860, 5
      %v1863 = vsel %vm330, %v1858, %v1862
      %v1865 = vshrl.u32 %v1530, 16
      %v1867 = vrot.slane %v1865, 4
      %v1868 = vshll.u32 %v1530, 16
      %v1870 = vrot.slane %v1868, 5
      %v1871 = vor.u32 %v1867, %v1870
      %v1872 = vrot.slane %v1871, 4
      %v1874 = vshll.u32 %v1531, 16
      %v1876 = vrot.slane %v1874, 5
      %v1877 = vsel %vm330, %v1872, %v1876
      %v1878 = vshrl.u32 %v1531, 16
      %v1880 = vrot.slane %v1878, 4
      %v1881 = vor.u32 %v1880, %v1876
      %v1882 = vrot.slane %v1881, 4
      %v1884 = vshll.u32 %v1549, 16
      %v1886 = vrot.slane %v1884, 5
      %v1887 = vsel %vm330, %v1882, %v1886
      %v1889 = vshrl.u32 %v1532, 16
      %v1891 = vrot.slane %v1889, 4
      %v1892 = vshll.u32 %v1532, 16
      %v1894 = vrot.slane %v1892, 5
      %v1895 = vor.u32 %v1891, %v1894
      %v1896 = vrot.slane %v1895, 4
      %v1898 = vshll.u32 %v1533, 16
      %v1900 = vrot.slane %v1898, 5
      %v1901 = vsel %vm330, %v1896, %v1900
      %v1902 = vshrl.u32 %v1533, 16
      %v1904 = vrot.slane %v1902, 4
      %v1905 = vor.u32 %v1904, %v1900
      %v1906 = vrot.slane %v1905, 4
      %v1908 = vshll.u32 %v1550, 16
      %v1910 = vrot.slane %v1908, 5
      %v1911 = vsel %vm330, %v1906, %v1910
      %v1913 = vshrl.u32 %v1534, 16
      %v1915 = vrot.slane %v1913, 4
      %v1916 = vshll.u32 %v1534, 16
      %v1918 = vrot.slane %v1916, 5
      %v1919 = vor.u32 %v1915, %v1918
      %v1920 = vrot.slane %v1919, 4
      %v1922 = vshll.u32 %v1535, 16
      %v1924 = vrot.slane %v1922, 5
      %v1925 = vsel %vm330, %v1920, %v1924
      %v1926 = vshrl.u32 %v1535, 16
      %v1928 = vrot.slane %v1926, 4
      %v1929 = vor.u32 %v1928, %v1924
      %v1930 = vrot.slane %v1929, 4
      %v1932 = vshll.u32 %v1551, 16
      %v1934 = vrot.slane %v1932, 5
      %v1935 = vsel %vm330, %v1930, %v1934
      %v1936 = vld [vmem:[%s1503] sm:$0xe]
      %v1937 = vld [vmem:[%s1503 + $0xc] sm:$0xe]
      %v1938 = vld [vmem:[%s1503 + $0x18] sm:$0xe]
      %v1939 = vld [vmem:[%s1503 + $0x24] sm:$0xe]
      %v1940 = vld [vmem:[%s1503 + $0x30] sm:$0xe]
      %v1941 = vld [vmem:[%s1503 + $0x3c] sm:$0xe]
      %v1942 = vld [vmem:[%s1503 + $0x48] sm:$0xe]
      %v1943 = vld [vmem:[%s1503 + $0x54] sm:$0xe]
      %v1944 = vld [vmem:[%s1503 + $0x60] sm:$0xe]
      %v1945 = vld [vmem:[%s1503 + $0x6c] sm:$0xe]
      %v1946 = vld [vmem:[%s1503 + $0x78] sm:$0xe]
      %v1947 = vld [vmem:[%s1503 + $0x84] sm:$0xe]
      %v1948 = vld [vmem:[%s1503 + $0x90] sm:$0xe]
      %v1949 = vld [vmem:[%s1503 + $0x9c] sm:$0xe]
      %v1950 = vld [vmem:[%s1503 + $0xa8] sm:$0xe]
      %v1951 = vld [vmem:[%s1503 + $0xb4] sm:$0xe]
      %v2000 = vrot.slane %v1936, 5
      %v2001 = vrot.slane %v2000, 4
      %v2002 = vrot.slane %v1505, 5
      %v2003 = vsel %vm781, %v2001, %v2002
      %v2004 = vrot.slane %v2002, 4
      %v2005 = vrot.slane %v1536, 5
      %v2006 = vsel %vm781, %v2004, %v2005
      %v2007 = vrot.slane %v1937, 5
      %v2008 = vrot.slane %v2007, 4
      %v2009 = vrot.slane %v1507, 5
      %v2010 = vsel %vm781, %v2008, %v2009
      %v2011 = vrot.slane %v2009, 4
      %v2012 = vrot.slane %v1537, 5
      %v2013 = vsel %vm781, %v2011, %v2012
      %v2014 = vrot.slane %v1938, 5
      %v2015 = vrot.slane %v2014, 4
      %v2016 = vrot.slane %v1509, 5
      %v2017 = vsel %vm781, %v2015, %v2016
      %v2018 = vrot.slane %v2016, 4
      %v2019 = vrot.slane %v1538, 5
      %v2020 = vsel %vm781, %v2018, %v2019
      %v2021 = vrot.slane %v1939, 5
      %v2022 = vrot.slane %v2021, 4
      %v2023 = vrot.slane %v1511, 5
      %v2024 = vsel %vm781, %v2022, %v2023
      %v2025 = vrot.slane %v2023, 4
      %v2026 = vrot.slane %v1539, 5
      %v2027 = vsel %vm781, %v2025, %v2026
      %v2028 = vrot.slane %v1940, 5
      %v2029 = vrot.slane %v2028, 4
      %v2030 = vrot.slane %v1513, 5
      %v2031 = vsel %vm781, %v2029, %v2030
      %v2032 = vrot.slane %v2030, 4
      %v2033 = vrot.slane %v1540, 5
      %v2034 = vsel %vm781, %v2032, %v2033
      %v2035 = vrot.slane %v1941, 5
      %v2036 = vrot.slane %v2035, 4
      %v2037 = vrot.slane %v1515, 5
      %v2038 = vsel %vm781, %v2036, %v2037
      %v2039 = vrot.slane %v2037, 4
      %v2040 = vrot.slane %v1541, 5
      %v2041 = vsel %vm781, %v2039, %v2040
      %v2042 = vrot.slane %v1942, 5
      %v2043 = vrot.slane %v2042, 4
      %v2044 = vrot.slane %v1517, 5
      %v2045 = vsel %vm781, %v2043, %v2044
      %v2046 = vrot.slane %v2044, 4
      %v2047 = vrot.slane %v1542, 5
      %v2048 = vsel %vm781, %v2046, %v2047
      %v2049 = vrot.slane %v1943, 5
      %v2050 = vrot.slane %v2049, 4
      %v2051 = vrot.slane %v1519, 5
      %v2052 = vsel %vm781, %v2050, %v2051
      %v2053 = vrot.slane %v2051, 4
      %v2054 = vrot.slane %v1543, 5
      %v2055 = vsel %vm781, %v2053, %v2054
      %v2056 = vrot.slane %v1944, 5
      %v2057 = vrot.slane %v2056, 4
      %v2058 = vrot.slane %v1521, 5
      %v2059 = vsel %vm781, %v2057, %v2058
      %v2060 = vrot.slane %v2058, 4
      %v2061 = vrot.slane %v1544, 5
      %v2062 = vsel %vm781, %v2060, %v2061
      %v2063 = vrot.slane %v1945, 5
      %v2064 = vrot.slane %v2063, 4
      %v2065 = vrot.slane %v1523, 5
      %v2066 = vsel %vm781, %v2064, %v2065
      %v2067 = vrot.slane %v2065, 4
      %v2068 = vrot.slane %v1545, 5
      %v2069 = vsel %vm781, %v2067, %v2068
      %v2070 = vrot.slane %v1946, 5
      %v2071 = vrot.slane %v2070, 4
      %v2072 = vrot.slane %v1525, 5
      %v2073 = vsel %vm781, %v2071, %v2072
      %v2074 = vrot.slane %v2072, 4
      %v2075 = vrot.slane %v1546, 5
      %v2076 = vsel %vm781, %v2074, %v2075
      %v2077 = vrot.slane %v1947, 5
      %v2078 = vrot.slane %v2077, 4
      %v2079 = vrot.slane %v1527, 5
      %v2080 = vsel %vm781, %v2078, %v2079
      %v2081 = vrot.slane %v2079, 4
      %v2082 = vrot.slane %v1547, 5
      %v2083 = vsel %vm781, %v2081, %v2082
      %v2084 = vrot.slane %v1948, 5
      %v2085 = vrot.slane %v2084, 4
      %v2086 = vrot.slane %v1529, 5
      %v2087 = vsel %vm781, %v2085, %v2086
      %v2088 = vrot.slane %v2086, 4
      %v2089 = vrot.slane %v1548, 5
      %v2090 = vsel %vm781, %v2088, %v2089
      %v2091 = vrot.slane %v1949, 5
      %v2092 = vrot.slane %v2091, 4
      %v2093 = vrot.slane %v1531, 5
      %v2094 = vsel %vm781, %v2092, %v2093
      %v2095 = vrot.slane %v2093, 4
      %v2096 = vrot.slane %v1549, 5
      %v2097 = vsel %vm781, %v2095, %v2096
      %v2098 = vrot.slane %v1950, 5
      %v2099 = vrot.slane %v2098, 4
      %v2100 = vrot.slane %v1533, 5
      %v2101 = vsel %vm781, %v2099, %v2100
      %v2102 = vrot.slane %v2100, 4
      %v2103 = vrot.slane %v1550, 5
      %v2104 = vsel %vm781, %v2102, %v2103
      %v2105 = vrot.slane %v1951, 5
      %v2106 = vrot.slane %v2105, 4
      %v2107 = vrot.slane %v1535, 5
      %v2108 = vsel %vm781, %v2106, %v2107
      %v2109 = vrot.slane %v2107, 4
      %v2110 = vrot.slane %v1551, 5
      %v2111 = vsel %vm781, %v2109, %v2110
      %v2128 = vunpack.c.l.b16 %v280
      %v2129 = vunpack.c.l.b16 %v281
      %v2130 = vunpack.c.l.b16 %v282
      %v2131 = vunpack.c.l.b16 %v283
      %v2132 = vunpack.c.l.b16 %v284
      %v2133 = vunpack.c.l.b16 %v285
      %v2134 = vunpack.c.l.b16 %v286
      %v2135 = vunpack.c.l.b16 %v287
      %v2136 = vunpack.c.l.b16 %v288
      %v2137 = vunpack.c.l.b16 %v289
      %v2138 = vunpack.c.l.b16 %v290
      %v2139 = vunpack.c.l.b16 %v291
      %v2140 = vunpack.c.l.b16 %v292
      %v2141 = vunpack.c.l.b16 %v293
      %v2142 = vunpack.c.l.b16 %v294
      %v2143 = vunpack.c.l.b16 %v295
      %v2144 = vunpack.c.l.b16 %v296
      %v2145 = vunpack.c.l.b16 %v297
      %v2146 = vunpack.c.l.b16 %v298
      %v2147 = vunpack.c.l.b16 %v299
      %v2148 = vunpack.c.l.b16 %v300
      %v2149 = vunpack.c.l.b16 %v301
      %v2150 = vunpack.c.l.b16 %v302
      %v2151 = vunpack.c.l.b16 %v303
      %v2152 = vunpack.c.l.b16 %v304
      %v2153 = vunpack.c.l.b16 %v305
      %v2154 = vunpack.c.l.b16 %v306
      %v2155 = vunpack.c.l.b16 %v307
      %v2156 = vunpack.c.l.b16 %v308
      %v2157 = vunpack.c.l.b16 %v309
      %v2158 = vunpack.c.l.b16 %v310
      %v2159 = vunpack.c.l.b16 %v311
      %v2160 = vpack.c.b16 %v2129, %v2128
      %v2161 = vpack.c.b16 %v2131, %v2130
      %v2162 = vpack.c.b16 %v2133, %v2132
      %v2163 = vpack.c.b16 %v2135, %v2134
      %v2164 = vpack.c.b16 %v2137, %v2136
      %v2165 = vpack.c.b16 %v2139, %v2138
      %v2166 = vpack.c.b16 %v2141, %v2140
      %v2167 = vpack.c.b16 %v2143, %v2142
      %v2168 = vpack.c.b16 %v2145, %v2144
      %v2169 = vpack.c.b16 %v2147, %v2146
      %v2170 = vpack.c.b16 %v2149, %v2148
      %v2171 = vpack.c.b16 %v2151, %v2150
      %v2172 = vpack.c.b16 %v2153, %v2152
      %v2173 = vpack.c.b16 %v2155, %v2154
      %v2174 = vpack.c.b16 %v2157, %v2156
      %v2175 = vpack.c.b16 %v2159, %v2158
      %v2176 = vunpack.c.l.b16 %v344
      %v2177 = vunpack.c.l.b16 %v354
      %v2178 = vunpack.c.l.b16 %v368
      %v2179 = vunpack.c.l.b16 %v378
      %v2180 = vunpack.c.l.b16 %v392
      %v2181 = vunpack.c.l.b16 %v402
      %v2182 = vunpack.c.l.b16 %v416
      %v2183 = vunpack.c.l.b16 %v426
      %v2184 = vunpack.c.l.b16 %v440
      %v2185 = vunpack.c.l.b16 %v450
      %v2186 = vunpack.c.l.b16 %v464
      %v2187 = vunpack.c.l.b16 %v474
      %v2188 = vunpack.c.l.b16 %v488
      %v2189 = vunpack.c.l.b16 %v498
      %v2190 = vunpack.c.l.b16 %v512
      %v2191 = vunpack.c.l.b16 %v522
      %v2192 = vunpack.c.l.b16 %v536
      %v2193 = vunpack.c.l.b16 %v546
      %v2194 = vunpack.c.l.b16 %v560
      %v2195 = vunpack.c.l.b16 %v570
      %v2196 = vunpack.c.l.b16 %v584
      %v2197 = vunpack.c.l.b16 %v594
      %v2198 = vunpack.c.l.b16 %v608
      %v2199 = vunpack.c.l.b16 %v618
      %v2200 = vunpack.c.l.b16 %v632
      %v2201 = vunpack.c.l.b16 %v642
      %v2202 = vunpack.c.l.b16 %v656
      %v2203 = vunpack.c.l.b16 %v666
      %v2204 = vunpack.c.l.b16 %v680
      %v2205 = vunpack.c.l.b16 %v690
      %v2206 = vunpack.c.l.b16 %v704
      %v2207 = vunpack.c.l.b16 %v714
      %v2208 = vpack.c.b16 %v2177, %v2176
      %v2209 = vpack.c.b16 %v2179, %v2178
      %v2210 = vpack.c.b16 %v2181, %v2180
      %v2211 = vpack.c.b16 %v2183, %v2182
      %v2212 = vpack.c.b16 %v2185, %v2184
      %v2213 = vpack.c.b16 %v2187, %v2186
      %v2214 = vpack.c.b16 %v2189, %v2188
      %v2215 = vpack.c.b16 %v2191, %v2190
      %v2216 = vpack.c.b16 %v2193, %v2192
      %v2217 = vpack.c.b16 %v2195, %v2194
      %v2218 = vpack.c.b16 %v2197, %v2196
      %v2219 = vpack.c.b16 %v2199, %v2198
      %v2220 = vpack.c.b16 %v2201, %v2200
      %v2221 = vpack.c.b16 %v2203, %v2202
      %v2222 = vpack.c.b16 %v2205, %v2204
      %v2223 = vpack.c.b16 %v2207, %v2206
      %2224 = vrot.lane.b32.xlu0 %v2208, 32
      %v2225 = vpop.permute.xlu0 %2224
      %2226 = vrot.lane.b32.xlu0 %v2209, 32
      %v2227 = vpop.permute.xlu0 %2226
      %2228 = vrot.lane.b32.xlu0 %v2210, 32
      %v2229 = vpop.permute.xlu0 %2228
      %2230 = vrot.lane.b32.xlu0 %v2211, 32
      %v2231 = vpop.permute.xlu0 %2230
      %2232 = vrot.lane.b32.xlu0 %v2212, 32
      %v2233 = vpop.permute.xlu0 %2232
      %2234 = vrot.lane.b32.xlu0 %v2213, 32
      %v2235 = vpop.permute.xlu0 %2234
      %2236 = vrot.lane.b32.xlu0 %v2214, 32
      %v2237 = vpop.permute.xlu0 %2236
      %2238 = vrot.lane.b32.xlu0 %v2215, 32
      %v2239 = vpop.permute.xlu0 %2238
      %2240 = vrot.lane.b32.xlu0 %v2216, 32
      %v2241 = vpop.permute.xlu0 %2240
      %2242 = vrot.lane.b32.xlu0 %v2217, 32
      %v2243 = vpop.permute.xlu0 %2242
      %2244 = vrot.lane.b32.xlu0 %v2218, 32
      %v2245 = vpop.permute.xlu0 %2244
      %2246 = vrot.lane.b32.xlu0 %v2219, 32
      %v2247 = vpop.permute.xlu0 %2246
      %2248 = vrot.lane.b32.xlu0 %v2220, 32
      %v2249 = vpop.permute.xlu0 %2248
      %2250 = vrot.lane.b32.xlu0 %v2221, 32
      %v2251 = vpop.permute.xlu0 %2250
      %2252 = vrot.lane.b32.xlu0 %v2222, 32
      %v2253 = vpop.permute.xlu0 %2252
      %2254 = vrot.lane.b32.xlu0 %v2223, 32
      %v2255 = vpop.permute.xlu0 %2254
      %v2256 = vunpack.c.l.b16 %v785
      %v2257 = vunpack.c.l.b16 %v788
      %v2258 = vunpack.c.l.b16 %v792
      %v2259 = vunpack.c.l.b16 %v795
      %v2260 = vunpack.c.l.b16 %v799
      %v2261 = vunpack.c.l.b16 %v802
      %v2262 = vunpack.c.l.b16 %v806
      %v2263 = vunpack.c.l.b16 %v809
      %v2264 = vunpack.c.l.b16 %v813
      %v2265 = vunpack.c.l.b16 %v816
      %v2266 = vunpack.c.l.b16 %v820
      %v2267 = vunpack.c.l.b16 %v823
      %v2268 = vunpack.c.l.b16 %v827
      %v2269 = vunpack.c.l.b16 %v830
      %v2270 = vunpack.c.l.b16 %v834
      %v2271 = vunpack.c.l.b16 %v837
      %v2272 = vunpack.c.l.b16 %v841
      %v2273 = vunpack.c.l.b16 %v844
      %v2274 = vunpack.c.l.b16 %v848
      %v2275 = vunpack.c.l.b16 %v851
      %v2276 = vunpack.c.l.b16 %v855
      %v2277 = vunpack.c.l.b16 %v858
      %v2278 = vunpack.c.l.b16 %v862
      %v2279 = vunpack.c.l.b16 %v865
      %v2280 = vunpack.c.l.b16 %v869
      %v2281 = vunpack.c.l.b16 %v872
      %v2282 = vunpack.c.l.b16 %v876
      %v2283 = vunpack.c.l.b16 %v879
      %v2284 = vunpack.c.l.b16 %v883
      %v2285 = vunpack.c.l.b16 %v886
      %v2286 = vunpack.c.l.b16 %v890
      %v2287 = vunpack.c.l.b16 %v893
      %v2288 = vpack.c.b16 %v2257, %v2256
      %v2289 = vpack.c.b16 %v2259, %v2258
      %v2290 = vpack.c.b16 %v2261, %v2260
      %v2291 = vpack.c.b16 %v2263, %v2262
      %v2292 = vpack.c.b16 %v2265, %v2264
      %v2293 = vpack.c.b16 %v2267, %v2266
      %v2294 = vpack.c.b16 %v2269, %v2268
      %v2295 = vpack.c.b16 %v2271, %v2270
      %v2296 = vpack.c.b16 %v2273, %v2272
      %v2297 = vpack.c.b16 %v2275, %v2274
      %v2298 = vpack.c.b16 %v2277, %v2276
      %v2299 = vpack.c.b16 %v2279, %v2278
      %v2300 = vpack.c.b16 %v2281, %v2280
      %v2301 = vpack.c.b16 %v2283, %v2282
      %v2302 = vpack.c.b16 %v2285, %v2284
      %v2303 = vpack.c.b16 %v2287, %v2286
      %2304 = vrot.lane.b32.xlu0 %v2288, 64
      %v2305 = vpop.permute.xlu0 %2304
      %2306 = vrot.lane.b32.xlu0 %v2289, 64
      %v2307 = vpop.permute.xlu0 %2306
      %2308 = vrot.lane.b32.xlu0 %v2290, 64
      %v2309 = vpop.permute.xlu0 %2308
      %2310 = vrot.lane.b32.xlu0 %v2291, 64
      %v2311 = vpop.permute.xlu0 %2310
      %2312 = vrot.lane.b32.xlu0 %v2292, 64
      %v2313 = vpop.permute.xlu0 %2312
      %2314 = vrot.lane.b32.xlu0 %v2293, 64
      %v2315 = vpop.permute.xlu0 %2314
      %2316 = vrot.lane.b32.xlu0 %v2294, 64
      %v2317 = vpop.permute.xlu0 %2316
      %2318 = vrot.lane.b32.xlu0 %v2295, 64
      %v2319 = vpop.permute.xlu0 %2318
      %2320 = vrot.lane.b32.xlu0 %v2296, 64
      %v2321 = vpop.permute.xlu0 %2320
      %2322 = vrot.lane.b32.xlu0 %v2297, 64
      %v2323 = vpop.permute.xlu0 %2322
      %2324 = vrot.lane.b32.xlu0 %v2298, 64
      %v2325 = vpop.permute.xlu0 %2324
      %2326 = vrot.lane.b32.xlu0 %v2299, 64
      %v2327 = vpop.permute.xlu0 %2326
      %2328 = vrot.lane.b32.xlu0 %v2300, 64
      %v2329 = vpop.permute.xlu0 %2328
      %2330 = vrot.lane.b32.xlu0 %v2301, 64
      %v2331 = vpop.permute.xlu0 %2330
      %2332 = vrot.lane.b32.xlu0 %v2302, 64
      %v2333 = vpop.permute.xlu0 %2332
      %2334 = vrot.lane.b32.xlu0 %v2303, 64
      %v2335 = vpop.permute.xlu0 %2334
      %v2352 = vunpack.c.l.b16 %v895
      %v2353 = vunpack.c.l.b16 %v896
      %v2354 = vunpack.c.l.b16 %v897
      %v2355 = vunpack.c.l.b16 %v898
      %v2356 = vunpack.c.l.b16 %v899
      %v2357 = vunpack.c.l.b16 %v900
      %v2358 = vunpack.c.l.b16 %v901
      %v2359 = vunpack.c.l.b16 %v902
      %v2360 = vunpack.c.l.b16 %v903
      %v2361 = vunpack.c.l.b16 %v904
      %v2362 = vunpack.c.l.b16 %v905
      %v2363 = vunpack.c.l.b16 %v906
      %v2364 = vunpack.c.l.b16 %v907
      %v2365 = vunpack.c.l.b16 %v908
      %v2366 = vunpack.c.l.b16 %v909
      %v2367 = vunpack.c.l.b16 %v910
      %v2368 = vunpack.c.l.b16 %v911
      %v2369 = vunpack.c.l.b16 %v912
      %v2370 = vunpack.c.l.b16 %v913
      %v2371 = vunpack.c.l.b16 %v914
      %v2372 = vunpack.c.l.b16 %v915
      %v2373 = vunpack.c.l.b16 %v916
      %v2374 = vunpack.c.l.b16 %v917
      %v2375 = vunpack.c.l.b16 %v918
      %v2376 = vunpack.c.l.b16 %v919
      %v2377 = vunpack.c.l.b16 %v920
      %v2378 = vunpack.c.l.b16 %v921
      %v2379 = vunpack.c.l.b16 %v922
      %v2380 = vunpack.c.l.b16 %v923
      %v2381 = vunpack.c.l.b16 %v924
      %v2382 = vunpack.c.l.b16 %v925
      %v2383 = vunpack.c.l.b16 %v926
      %v2384 = vpack.c.b16 %v2353, %v2352
      %v2385 = vpack.c.b16 %v2355, %v2354
      %v2386 = vpack.c.b16 %v2357, %v2356
      %v2387 = vpack.c.b16 %v2359, %v2358
      %v2388 = vpack.c.b16 %v2361, %v2360
      %v2389 = vpack.c.b16 %v2363, %v2362
      %v2390 = vpack.c.b16 %v2365, %v2364
      %v2391 = vpack.c.b16 %v2367, %v2366
      %v2392 = vpack.c.b16 %v2369, %v2368
      %v2393 = vpack.c.b16 %v2371, %v2370
      %v2394 = vpack.c.b16 %v2373, %v2372
      %v2395 = vpack.c.b16 %v2375, %v2374
      %v2396 = vpack.c.b16 %v2377, %v2376
      %v2397 = vpack.c.b16 %v2379, %v2378
      %v2398 = vpack.c.b16 %v2381, %v2380
      %v2399 = vpack.c.b16 %v2383, %v2382
      %2400 = vrot.lane.b32.xlu0 %v2384, 96
      %v2401 = vpop.permute.xlu0 %2400
      %2402 = vrot.lane.b32.xlu0 %v2385, 96
      %v2403 = vpop.permute.xlu0 %2402
      %2404 = vrot.lane.b32.xlu0 %v2386, 96
      %v2405 = vpop.permute.xlu0 %2404
      %2406 = vrot.lane.b32.xlu0 %v2387, 96
      %v2407 = vpop.permute.xlu0 %2406
      %2408 = vrot.lane.b32.xlu0 %v2388, 96
      %v2409 = vpop.permute.xlu0 %2408
      %2410 = vrot.lane.b32.xlu0 %v2389, 96
      %v2411 = vpop.permute.xlu0 %2410
      %2412 = vrot.lane.b32.xlu0 %v2390, 96
      %v2413 = vpop.permute.xlu0 %2412
      %2414 = vrot.lane.b32.xlu0 %v2391, 96
      %v2415 = vpop.permute.xlu0 %2414
      %2416 = vrot.lane.b32.xlu0 %v2392, 96
      %v2417 = vpop.permute.xlu0 %2416
      %2418 = vrot.lane.b32.xlu0 %v2393, 96
      %v2419 = vpop.permute.xlu0 %2418
      %2420 = vrot.lane.b32.xlu0 %v2394, 96
      %v2421 = vpop.permute.xlu0 %2420
      %2422 = vrot.lane.b32.xlu0 %v2395, 96
      %v2423 = vpop.permute.xlu0 %2422
      %2424 = vrot.lane.b32.xlu0 %v2396, 96
      %v2425 = vpop.permute.xlu0 %2424
      %2426 = vrot.lane.b32.xlu0 %v2397, 96
      %v2427 = vpop.permute.xlu0 %2426
      %2428 = vrot.lane.b32.xlu0 %v2398, 96
      %v2429 = vpop.permute.xlu0 %2428
      %2430 = vrot.lane.b32.xlu0 %v2399, 96
      %v2431 = vpop.permute.xlu0 %2430
      %v2432 = vunpack.c.l.b16 %v956
      %v2433 = vunpack.c.l.b16 %v966
      %v2434 = vunpack.c.l.b16 %v980
      %v2435 = vunpack.c.l.b16 %v990
      %v2436 = vunpack.c.l.b16 %v1004
      %v2437 = vunpack.c.l.b16 %v1014
      %v2438 = vunpack.c.l.b16 %v1028
      %v2439 = vunpack.c.l.b16 %v1038
      %v2440 = vunpack.c.l.b16 %v1052
      %v2441 = vunpack.c.l.b16 %v1062
      %v2442 = vunpack.c.l.b16 %v1076
      %v2443 = vunpack.c.l.b16 %v1086
      %v2444 = vunpack.c.l.b16 %v1100
      %v2445 = vunpack.c.l.b16 %v1110
      %v2446 = vunpack.c.l.b16 %v1124
      %v2447 = vunpack.c.l.b16 %v1134
      %v2448 = vunpack.c.l.b16 %v1148
      %v2449 = vunpack.c.l.b16 %v1158
      %v2450 = vunpack.c.l.b16 %v1172
      %v2451 = vunpack.c.l.b16 %v1182
      %v2452 = vunpack.c.l.b16 %v1196
      %v2453 = vunpack.c.l.b16 %v1206
      %v2454 = vunpack.c.l.b16 %v1220
      %v2455 = vunpack.c.l.b16 %v1230
      %v2456 = vunpack.c.l.b16 %v1244
      %v2457 = vunpack.c.l.b16 %v1254
      %v2458 = vunpack.c.l.b16 %v1268
      %v2459 = vunpack.c.l.b16 %v1278
      %v2460 = vunpack.c.l.b16 %v1292
      %v2461 = vunpack.c.l.b16 %v1302
      %v2462 = vunpack.c.l.b16 %v1316
      %v2463 = vunpack.c.l.b16 %v1326
      %v2464 = vpack.c.b16 %v2433, %v2432
      %v2465 = vpack.c.b16 %v2435, %v2434
      %v2466 = vpack.c.b16 %v2437, %v2436
      %v2467 = vpack.c.b16 %v2439, %v2438
      %v2468 = vpack.c.b16 %v2441, %v2440
      %v2469 = vpack.c.b16 %v2443, %v2442
      %v2470 = vpack.c.b16 %v2445, %v2444
      %v2471 = vpack.c.b16 %v2447, %v2446
      %v2472 = vpack.c.b16 %v2449, %v2448
      %v2473 = vpack.c.b16 %v2451, %v2450
      %v2474 = vpack.c.b16 %v2453, %v2452
      %v2475 = vpack.c.b16 %v2455, %v2454
      %v2476 = vpack.c.b16 %v2457, %v2456
      %v2477 = vpack.c.b16 %v2459, %v2458
      %v2478 = vpack.c.b16 %v2461, %v2460
      %v2479 = vpack.c.b16 %v2463, %v2462
      %v2480 = vunpack.c.l.b16 %v1394
      %v2481 = vunpack.c.l.b16 %v1397
      %v2482 = vunpack.c.l.b16 %v1401
      %v2483 = vunpack.c.l.b16 %v1404
      %v2484 = vunpack.c.l.b16 %v1408
      %v2485 = vunpack.c.l.b16 %v1411
      %v2486 = vunpack.c.l.b16 %v1415
      %v2487 = vunpack.c.l.b16 %v1418
      %v2488 = vunpack.c.l.b16 %v1422
      %v2489 = vunpack.c.l.b16 %v1425
      %v2490 = vunpack.c.l.b16 %v1429
      %v2491 = vunpack.c.l.b16 %v1432
      %v2492 = vunpack.c.l.b16 %v1436
      %v2493 = vunpack.c.l.b16 %v1439
      %v2494 = vunpack.c.l.b16 %v1443
      %v2495 = vunpack.c.l.b16 %v1446
      %v2496 = vunpack.c.l.b16 %v1450
      %v2497 = vunpack.c.l.b16 %v1453
      %v2498 = vunpack.c.l.b16 %v1457
      %v2499 = vunpack.c.l.b16 %v1460
      %v2500 = vunpack.c.l.b16 %v1464
      %v2501 = vunpack.c.l.b16 %v1467
      %v2502 = vunpack.c.l.b16 %v1471
      %v2503 = vunpack.c.l.b16 %v1474
      %v2504 = vunpack.c.l.b16 %v1478
      %v2505 = vunpack.c.l.b16 %v1481
      %v2506 = vunpack.c.l.b16 %v1485
      %v2507 = vunpack.c.l.b16 %v1488
      %v2508 = vunpack.c.l.b16 %v1492
      %v2509 = vunpack.c.l.b16 %v1495
      %v2510 = vunpack.c.l.b16 %v1499
      %v2511 = vunpack.c.l.b16 %v1502
      %v2512 = vpack.c.b16 %v2481, %v2480
      %v2513 = vpack.c.b16 %v2483, %v2482
      %v2514 = vpack.c.b16 %v2485, %v2484
      %v2515 = vpack.c.b16 %v2487, %v2486
      %v2516 = vpack.c.b16 %v2489, %v2488
      %v2517 = vpack.c.b16 %v2491, %v2490
      %v2518 = vpack.c.b16 %v2493, %v2492
      %v2519 = vpack.c.b16 %v2495, %v2494
      %v2520 = vpack.c.b16 %v2497, %v2496
      %v2521 = vpack.c.b16 %v2499, %v2498
      %v2522 = vpack.c.b16 %v2501, %v2500
      %v2523 = vpack.c.b16 %v2503, %v2502
      %v2524 = vpack.c.b16 %v2505, %v2504
      %v2525 = vpack.c.b16 %v2507, %v2506
      %v2526 = vpack.c.b16 %v2509, %v2508
      %v2527 = vpack.c.b16 %v2511, %v2510
      %2528 = vrot.lane.b32.xlu0 %v2512, 32
      %v2529 = vpop.permute.xlu0 %2528
      %2530 = vrot.lane.b32.xlu0 %v2513, 32
      %v2531 = vpop.permute.xlu0 %2530
      %2532 = vrot.lane.b32.xlu0 %v2514, 32
      %v2533 = vpop.permute.xlu0 %2532
      %2534 = vrot.lane.b32.xlu0 %v2515, 32
      %v2535 = vpop.permute.xlu0 %2534
      %2536 = vrot.lane.b32.xlu0 %v2516, 32
      %v2537 = vpop.permute.xlu0 %2536
      %2538 = vrot.lane.b32.xlu0 %v2517, 32
      %v2539 = vpop.permute.xlu0 %2538
      %2540 = vrot.lane.b32.xlu0 %v2518, 32
      %v2541 = vpop.permute.xlu0 %2540
      %2542 = vrot.lane.b32.xlu0 %v2519, 32
      %v2543 = vpop.permute.xlu0 %2542
      %2544 = vrot.lane.b32.xlu0 %v2520, 32
      %v2545 = vpop.permute.xlu0 %2544
      %2546 = vrot.lane.b32.xlu0 %v2521, 32
      %v2547 = vpop.permute.xlu0 %2546
      %2548 = vrot.lane.b32.xlu0 %v2522, 32
      %v2549 = vpop.permute.xlu0 %2548
      %2550 = vrot.lane.b32.xlu0 %v2523, 32
      %v2551 = vpop.permute.xlu0 %2550
      %2552 = vrot.lane.b32.xlu0 %v2524, 32
      %v2553 = vpop.permute.xlu0 %2552
      %2554 = vrot.lane.b32.xlu0 %v2525, 32
      %v2555 = vpop.permute.xlu0 %2554
      %2556 = vrot.lane.b32.xlu0 %v2526, 32
      %v2557 = vpop.permute.xlu0 %2556
      %2558 = vrot.lane.b32.xlu0 %v2527, 32
      %v2559 = vpop.permute.xlu0 %2558
      %v2576 = vunpack.c.l.b16 %v1504
      %v2577 = vunpack.c.l.b16 %v1505
      %v2578 = vunpack.c.l.b16 %v1506
      %v2579 = vunpack.c.l.b16 %v1507
      %v2580 = vunpack.c.l.b16 %v1508
      %v2581 = vunpack.c.l.b16 %v1509
      %v2582 = vunpack.c.l.b16 %v1510
      %v2583 = vunpack.c.l.b16 %v1511
      %v2584 = vunpack.c.l.b16 %v1512
      %v2585 = vunpack.c.l.b16 %v1513
      %v2586 = vunpack.c.l.b16 %v1514
      %v2587 = vunpack.c.l.b16 %v1515
      %v2588 = vunpack.c.l.b16 %v1516
      %v2589 = vunpack.c.l.b16 %v1517
      %v2590 = vunpack.c.l.b16 %v1518
      %v2591 = vunpack.c.l.b16 %v1519
      %v2592 = vunpack.c.l.b16 %v1520
      %v2593 = vunpack.c.l.b16 %v1521
      %v2594 = vunpack.c.l.b16 %v1522
      %v2595 = vunpack.c.l.b16 %v1523
      %v2596 = vunpack.c.l.b16 %v1524
      %v2597 = vunpack.c.l.b16 %v1525
      %v2598 = vunpack.c.l.b16 %v1526
      %v2599 = vunpack.c.l.b16 %v1527
      %v2600 = vunpack.c.l.b16 %v1528
      %v2601 = vunpack.c.l.b16 %v1529
      %v2602 = vunpack.c.l.b16 %v1530
      %v2603 = vunpack.c.l.b16 %v1531
      %v2604 = vunpack.c.l.b16 %v1532
      %v2605 = vunpack.c.l.b16 %v1533
      %v2606 = vunpack.c.l.b16 %v1534
      %v2607 = vunpack.c.l.b16 %v1535
      %v2608 = vpack.c.b16 %v2577, %v2576
      %v2609 = vpack.c.b16 %v2579, %v2578
      %v2610 = vpack.c.b16 %v2581, %v2580
      %v2611 = vpack.c.b16 %v2583, %v2582
      %v2612 = vpack.c.b16 %v2585, %v2584
      %v2613 = vpack.c.b16 %v2587, %v2586
      %v2614 = vpack.c.b16 %v2589, %v2588
      %v2615 = vpack.c.b16 %v2591, %v2590
      %v2616 = vpack.c.b16 %v2593, %v2592
      %v2617 = vpack.c.b16 %v2595, %v2594
      %v2618 = vpack.c.b16 %v2597, %v2596
      %v2619 = vpack.c.b16 %v2599, %v2598
      %v2620 = vpack.c.b16 %v2601, %v2600
      %v2621 = vpack.c.b16 %v2603, %v2602
      %v2622 = vpack.c.b16 %v2605, %v2604
      %v2623 = vpack.c.b16 %v2607, %v2606
      %2624 = vrot.lane.b32.xlu0 %v2608, 64
      %v2625 = vpop.permute.xlu0 %2624
      %2626 = vrot.lane.b32.xlu0 %v2609, 64
      %v2627 = vpop.permute.xlu0 %2626
      %2628 = vrot.lane.b32.xlu0 %v2610, 64
      %v2629 = vpop.permute.xlu0 %2628
      %2630 = vrot.lane.b32.xlu0 %v2611, 64
      %v2631 = vpop.permute.xlu0 %2630
      %2632 = vrot.lane.b32.xlu0 %v2612, 64
      %v2633 = vpop.permute.xlu0 %2632
      %2634 = vrot.lane.b32.xlu0 %v2613, 64
      %v2635 = vpop.permute.xlu0 %2634
      %2636 = vrot.lane.b32.xlu0 %v2614, 64
      %v2637 = vpop.permute.xlu0 %2636
      %2638 = vrot.lane.b32.xlu0 %v2615, 64
      %v2639 = vpop.permute.xlu0 %2638
      %2640 = vrot.lane.b32.xlu0 %v2616, 64
      %v2641 = vpop.permute.xlu0 %2640
      %2642 = vrot.lane.b32.xlu0 %v2617, 64
      %v2643 = vpop.permute.xlu0 %2642
      %2644 = vrot.lane.b32.xlu0 %v2618, 64
      %v2645 = vpop.permute.xlu0 %2644
      %2646 = vrot.lane.b32.xlu0 %v2619, 64
      %v2647 = vpop.permute.xlu0 %2646
      %2648 = vrot.lane.b32.xlu0 %v2620, 64
      %v2649 = vpop.permute.xlu0 %2648
      %2650 = vrot.lane.b32.xlu0 %v2621, 64
      %v2651 = vpop.permute.xlu0 %2650
      %2652 = vrot.lane.b32.xlu0 %v2622, 64
      %v2653 = vpop.permute.xlu0 %2652
      %2654 = vrot.lane.b32.xlu0 %v2623, 64
      %v2655 = vpop.permute.xlu0 %2654
      %v2656 = vunpack.c.l.b16 %v1565
      %v2657 = vunpack.c.l.b16 %v1575
      %v2658 = vunpack.c.l.b16 %v1589
      %v2659 = vunpack.c.l.b16 %v1599
      %v2660 = vunpack.c.l.b16 %v1613
      %v2661 = vunpack.c.l.b16 %v1623
      %v2662 = vunpack.c.l.b16 %v1637
      %v2663 = vunpack.c.l.b16 %v1647
      %v2664 = vunpack.c.l.b16 %v1661
      %v2665 = vunpack.c.l.b16 %v1671
      %v2666 = vunpack.c.l.b16 %v1685
      %v2667 = vunpack.c.l.b16 %v1695
      %v2668 = vunpack.c.l.b16 %v1709
      %v2669 = vunpack.c.l.b16 %v1719
      %v2670 = vunpack.c.l.b16 %v1733
      %v2671 = vunpack.c.l.b16 %v1743
      %v2672 = vunpack.c.l.b16 %v1757
      %v2673 = vunpack.c.l.b16 %v1767
      %v2674 = vunpack.c.l.b16 %v1781
      %v2675 = vunpack.c.l.b16 %v1791
      %v2676 = vunpack.c.l.b16 %v1805
      %v2677 = vunpack.c.l.b16 %v1815
      %v2678 = vunpack.c.l.b16 %v1829
      %v2679 = vunpack.c.l.b16 %v1839
      %v2680 = vunpack.c.l.b16 %v1853
      %v2681 = vunpack.c.l.b16 %v1863
      %v2682 = vunpack.c.l.b16 %v1877
      %v2683 = vunpack.c.l.b16 %v1887
      %v2684 = vunpack.c.l.b16 %v1901
      %v2685 = vunpack.c.l.b16 %v1911
      %v2686 = vunpack.c.l.b16 %v1925
      %v2687 = vunpack.c.l.b16 %v1935
      %v2688 = vpack.c.b16 %v2657, %v2656
      %v2689 = vpack.c.b16 %v2659, %v2658
      %v2690 = vpack.c.b16 %v2661, %v2660
      %v2691 = vpack.c.b16 %v2663, %v2662
      %v2692 = vpack.c.b16 %v2665, %v2664
      %v2693 = vpack.c.b16 %v2667, %v2666
      %v2694 = vpack.c.b16 %v2669, %v2668
      %v2695 = vpack.c.b16 %v2671, %v2670
      %v2696 = vpack.c.b16 %v2673, %v2672
      %v2697 = vpack.c.b16 %v2675, %v2674
      %v2698 = vpack.c.b16 %v2677, %v2676
      %v2699 = vpack.c.b16 %v2679, %v2678
      %v2700 = vpack.c.b16 %v2681, %v2680
      %v2701 = vpack.c.b16 %v2683, %v2682
      %v2702 = vpack.c.b16 %v2685, %v2684
      %v2703 = vpack.c.b16 %v2687, %v2686
      %2704 = vrot.lane.b32.xlu0 %v2688, 96
      %v2705 = vpop.permute.xlu0 %2704
      %2706 = vrot.lane.b32.xlu0 %v2689, 96
      %v2707 = vpop.permute.xlu0 %2706
      %2708 = vrot.lane.b32.xlu0 %v2690, 96
      %v2709 = vpop.permute.xlu0 %2708
      %2710 = vrot.lane.b32.xlu0 %v2691, 96
      %v2711 = vpop.permute.xlu0 %2710
      %2712 = vrot.lane.b32.xlu0 %v2692, 96
      %v2713 = vpop.permute.xlu0 %2712
      %2714 = vrot.lane.b32.xlu0 %v2693, 96
      %v2715 = vpop.permute.xlu0 %2714
      %2716 = vrot.lane.b32.xlu0 %v2694, 96
      %v2717 = vpop.permute.xlu0 %2716
      %2718 = vrot.lane.b32.xlu0 %v2695, 96
      %v2719 = vpop.permute.xlu0 %2718
      %2720 = vrot.lane.b32.xlu0 %v2696, 96
      %v2721 = vpop.permute.xlu0 %2720
      %2722 = vrot.lane.b32.xlu0 %v2697, 96
      %v2723 = vpop.permute.xlu0 %2722
      %2724 = vrot.lane.b32.xlu0 %v2698, 96
      %v2725 = vpop.permute.xlu0 %2724
      %2726 = vrot.lane.b32.xlu0 %v2699, 96
      %v2727 = vpop.permute.xlu0 %2726
      %2728 = vrot.lane.b32.xlu0 %v2700, 96
      %v2729 = vpop.permute.xlu0 %2728
      %2730 = vrot.lane.b32.xlu0 %v2701, 96
      %v2731 = vpop.permute.xlu0 %2730
      %2732 = vrot.lane.b32.xlu0 %v2702, 96
      %v2733 = vpop.permute.xlu0 %2732
      %2734 = vrot.lane.b32.xlu0 %v2703, 96
      %v2735 = vpop.permute.xlu0 %2734
      %v2736 = vunpack.c.l.b16 %v2003
      %v2737 = vunpack.c.l.b16 %v2006
      %v2738 = vunpack.c.l.b16 %v2010
      %v2739 = vunpack.c.l.b16 %v2013
      %v2740 = vunpack.c.l.b16 %v2017
      %v2741 = vunpack.c.l.b16 %v2020
      %v2742 = vunpack.c.l.b16 %v2024
      %v2743 = vunpack.c.l.b16 %v2027
      %v2744 = vunpack.c.l.b16 %v2031
      %v2745 = vunpack.c.l.b16 %v2034
      %v2746 = vunpack.c.l.b16 %v2038
      %v2747 = vunpack.c.l.b16 %v2041
      %v2748 = vunpack.c.l.b16 %v2045
      %v2749 = vunpack.c.l.b16 %v2048
      %v2750 = vunpack.c.l.b16 %v2052
      %v2751 = vunpack.c.l.b16 %v2055
      %v2752 = vunpack.c.l.b16 %v2059
      %v2753 = vunpack.c.l.b16 %v2062
      %v2754 = vunpack.c.l.b16 %v2066
      %v2755 = vunpack.c.l.b16 %v2069
      %v2756 = vunpack.c.l.b16 %v2073
      %v2757 = vunpack.c.l.b16 %v2076
      %v2758 = vunpack.c.l.b16 %v2080
      %v2759 = vunpack.c.l.b16 %v2083
      %v2760 = vunpack.c.l.b16 %v2087
      %v2761 = vunpack.c.l.b16 %v2090
      %v2762 = vunpack.c.l.b16 %v2094
      %v2763 = vunpack.c.l.b16 %v2097
      %v2764 = vunpack.c.l.b16 %v2101
      %v2765 = vunpack.c.l.b16 %v2104
      %v2766 = vunpack.c.l.b16 %v2108
      %v2767 = vunpack.c.l.b16 %v2111
      %v2768 = vpack.c.b16 %v2737, %v2736
      %v2769 = vpack.c.b16 %v2739, %v2738
      %v2770 = vpack.c.b16 %v2741, %v2740
      %v2771 = vpack.c.b16 %v2743, %v2742
      %v2772 = vpack.c.b16 %v2745, %v2744
      %v2773 = vpack.c.b16 %v2747, %v2746
      %v2774 = vpack.c.b16 %v2749, %v2748
      %v2775 = vpack.c.b16 %v2751, %v2750
      %v2776 = vpack.c.b16 %v2753, %v2752
      %v2777 = vpack.c.b16 %v2755, %v2754
      %v2778 = vpack.c.b16 %v2757, %v2756
      %v2779 = vpack.c.b16 %v2759, %v2758
      %v2780 = vpack.c.b16 %v2761, %v2760
      %v2781 = vpack.c.b16 %v2763, %v2762
      %v2782 = vpack.c.b16 %v2765, %v2764
      %v2783 = vpack.c.b16 %v2767, %v2766
      %vm2784 = vcmask 261120
      %v2787 = vsel %vm2784, %v2160, %v2225
      %v2790 = vsel %vm2784, %v2161, %v2227
      %v2793 = vsel %vm2784, %v2162, %v2229
      %v2796 = vsel %vm2784, %v2163, %v2231
      %v2799 = vsel %vm2784, %v2164, %v2233
      %v2802 = vsel %vm2784, %v2165, %v2235
      %v2805 = vsel %vm2784, %v2166, %v2237
      %v2808 = vsel %vm2784, %v2167, %v2239
      %v2811 = vsel %vm2784, %v2168, %v2241
      %v2814 = vsel %vm2784, %v2169, %v2243
      %v2817 = vsel %vm2784, %v2170, %v2245
      %v2820 = vsel %vm2784, %v2171, %v2247
      %v2823 = vsel %vm2784, %v2172, %v2249
      %v2826 = vsel %vm2784, %v2173, %v2251
      %v2829 = vsel %vm2784, %v2174, %v2253
      %v2832 = vsel %vm2784, %v2175, %v2255
      %vm2833 = vcmask 523264
      %v2835 = vsel %vm2833, %v2787, %v2305
      %v2837 = vsel %vm2833, %v2790, %v2307
      %v2839 = vsel %vm2833, %v2793, %v2309
      %v2841 = vsel %vm2833, %v2796, %v2311
      %v2843 = vsel %vm2833, %v2799, %v2313
      %v2845 = vsel %vm2833, %v2802, %v2315
      %v2847 = vsel %vm2833, %v2805, %v2317
      %v2849 = vsel %vm2833, %v2808, %v2319
      %v2851 = vsel %vm2833, %v2811, %v2321
      %v2853 = vsel %vm2833, %v2814, %v2323
      %v2855 = vsel %vm2833, %v2817, %v2325
      %v2857 = vsel %vm2833, %v2820, %v2327
      %v2859 = vsel %vm2833, %v2823, %v2329
      %v2861 = vsel %vm2833, %v2826, %v2331
      %v2863 = vsel %vm2833, %v2829, %v2333
      %v2865 = vsel %vm2833, %v2832, %v2335
      %vm2866 = vcmask 785408
      %v2868 = vsel %vm2866, %v2835, %v2401
      %v2871 = vsel %vm2866, %v2837, %v2403
      %v2874 = vsel %vm2866, %v2839, %v2405
      %v2877 = vsel %vm2866, %v2841, %v2407
      %v2880 = vsel %vm2866, %v2843, %v2409
      %v2883 = vsel %vm2866, %v2845, %v2411
      %v2886 = vsel %vm2866, %v2847, %v2413
      %v2889 = vsel %vm2866, %v2849, %v2415
      %v2892 = vsel %vm2866, %v2851, %v2417
      %v2895 = vsel %vm2866, %v2853, %v2419
      %v2898 = vsel %vm2866, %v2855, %v2421
      %v2901 = vsel %vm2866, %v2857, %v2423
      %v2904 = vsel %vm2866, %v2859, %v2425
      %v2907 = vsel %vm2866, %v2861, %v2427
      %v2910 = vsel %vm2866, %v2863, %v2429
      %v2913 = vsel %vm2866, %v2865, %v2431
      %v2917 = vsel %vm2784, %v2464, %v2529
      %v2920 = vsel %vm2784, %v2465, %v2531
      %v2923 = vsel %vm2784, %v2466, %v2533
      %v2926 = vsel %vm2784, %v2467, %v2535
      %v2929 = vsel %vm2784, %v2468, %v2537
      %v2932 = vsel %vm2784, %v2469, %v2539
      %v2935 = vsel %vm2784, %v2470, %v2541
      %v2938 = vsel %vm2784, %v2471, %v2543
      %v2941 = vsel %vm2784, %v2472, %v2545
      %v2944 = vsel %vm2784, %v2473, %v2547
      %v2947 = vsel %vm2784, %v2474, %v2549
      %v2950 = vsel %vm2784, %v2475, %v2551
      %v2953 = vsel %vm2784, %v2476, %v2553
      %v2956 = vsel %vm2784, %v2477, %v2555
      %v2959 = vsel %vm2784, %v2478, %v2557
      %v2962 = vsel %vm2784, %v2479, %v2559
      %v2964 = vsel %vm2833, %v2917, %v2625
      %v2966 = vsel %vm2833, %v2920, %v2627
      %v2968 = vsel %vm2833, %v2923, %v2629
      %v2970 = vsel %vm2833, %v2926, %v2631
      %v2972 = vsel %vm2833, %v2929, %v2633
      %v2974 = vsel %vm2833, %v2932, %v2635
      %v2976 = vsel %vm2833, %v2935, %v2637
      %v2978 = vsel %vm2833, %v2938, %v2639
      %v2980 = vsel %vm2833, %v2941, %v2641
      %v2982 = vsel %vm2833, %v2944, %v2643
      %v2984 = vsel %vm2833, %v2947, %v2645
      %v2986 = vsel %vm2833, %v2950, %v2647
      %v2988 = vsel %vm2833, %v2953, %v2649
      %v2990 = vsel %vm2833, %v2956, %v2651
      %v2992 = vsel %vm2833, %v2959, %v2653
      %v2994 = vsel %vm2833, %v2962, %v2655
      %v2996 = vsel %vm2866, %v2964, %v2705
      %v2999 = vsel %vm2866, %v2966, %v2707
      %v3002 = vsel %vm2866, %v2968, %v2709
      %v3005 = vsel %vm2866, %v2970, %v2711
      %v3008 = vsel %vm2866, %v2972, %v2713
      %v3011 = vsel %vm2866, %v2974, %v2715
      %v3014 = vsel %vm2866, %v2976, %v2717
      %v3017 = vsel %vm2866, %v2978, %v2719
      %v3020 = vsel %vm2866, %v2980, %v2721
      %v3023 = vsel %vm2866, %v2982, %v2723
      %v3026 = vsel %vm2866, %v2984, %v2725
      %v3029 = vsel %vm2866, %v2986, %v2727
      %v3032 = vsel %vm2866, %v2988, %v2729
      %v3035 = vsel %vm2866, %v2990, %v2731
      %v3038 = vsel %vm2866, %v2992, %v2733
      %v3041 = vsel %vm2866, %v2994, %v2735
      %v3043 = vld [vmem:[%s1] sm:$0xf]
      %v3044 = vld [vmem:[%s1 + $0x4] sm:$0xf]
      %v3045 = vld [vmem:[%s1 + $0x8] sm:$0xf]
      %v3046 = vld [vmem:[%s1 + $0xc] sm:$0xf]
      %v3047 = vld [vmem:[%s1 + $0x10] sm:$0xf]
      %v3048 = vld [vmem:[%s1 + $0x14] sm:$0xf]
      %v3049 = vld [vmem:[%s1 + $0x18] sm:$0xf]
      %v3050 = vld [vmem:[%s1 + $0x1c] sm:$0xf]
      %v3051 = vld [vmem:[%s1 + $0x20] sm:$0xf]
      %v3052 = vld [vmem:[%s1 + $0x24] sm:$0xf]
      %v3053 = vld [vmem:[%s1 + $0x28] sm:$0xf]
      %v3054 = vld [vmem:[%s1 + $0x2c] sm:$0xf]
      %v3055 = vld [vmem:[%s1 + $0x30] sm:$0xf]
      %v3056 = vld [vmem:[%s1 + $0x34] sm:$0xf]
      %v3057 = vld [vmem:[%s1 + $0x38] sm:$0xf]
      %v3058 = vld [vmem:[%s1 + $0x3c] sm:$0xf]
      %v3059 = vld [vmem:[%s1 + $0x40] sm:$0xf]
      %v3060 = vld [vmem:[%s1 + $0x44] sm:$0xf]
      %v3061 = vld [vmem:[%s1 + $0x48] sm:$0xf]
      %v3062 = vld [vmem:[%s1 + $0x4c] sm:$0xf]
      %v3063 = vld [vmem:[%s1 + $0x50] sm:$0xf]
      %v3064 = vld [vmem:[%s1 + $0x54] sm:$0xf]
      %v3065 = vld [vmem:[%s1 + $0x58] sm:$0xf]
      %v3066 = vld [vmem:[%s1 + $0x5c] sm:$0xf]
      %v3067 = vld [vmem:[%s1 + $0x60] sm:$0xf]
      %v3068 = vld [vmem:[%s1 + $0x64] sm:$0xf]
      %v3069 = vld [vmem:[%s1 + $0x68] sm:$0xf]
      %v3070 = vld [vmem:[%s1 + $0x6c] sm:$0xf]
      %v3071 = vld [vmem:[%s1 + $0x70] sm:$0xf]
      %v3072 = vld [vmem:[%s1 + $0x74] sm:$0xf]
      %v3073 = vld [vmem:[%s1 + $0x78] sm:$0xf]
      %v3074 = vld [vmem:[%s1 + $0x7c] sm:$0xf]
      %v3075 = vld [vmem:[%s1 + $0x80] sm:$0xf]
      %v3076 = vld [vmem:[%s1 + $0x84] sm:$0xf]
      %v3077 = vld [vmem:[%s1 + $0x88] sm:$0xf]
      %v3078 = vld [vmem:[%s1 + $0x8c] sm:$0xf]
      %v3079 = vld [vmem:[%s2] sm:$0x1]
      %v3081 = vlaneseq
      %v3082 = vshrl.u32 %v3081, 7
      %v3083 = vsub.s32 0, %v3082
      %v3084 = vrot.slane %v3079, %v3083
      %v3122 = vunpack.c.l.b16 %v3043
      %v3123 = vunpack.c.l.b16 %v3044
      %v3124 = vunpack.c.l.b16 %v3045
      %v3125 = vunpack.c.l.b16 %v3046
      %v3126 = vunpack.c.l.b16 %v3047
      %v3127 = vunpack.c.l.b16 %v3048
      %v3128 = vunpack.c.l.b16 %v3049
      %v3129 = vunpack.c.l.b16 %v3050
      %v3130 = vunpack.c.l.b16 %v3051
      %v3131 = vunpack.c.l.b16 %v3052
      %v3132 = vunpack.c.l.b16 %v3053
      %v3133 = vunpack.c.l.b16 %v3054
      %v3134 = vunpack.c.l.b16 %v3055
      %v3135 = vunpack.c.l.b16 %v3056
      %v3136 = vunpack.c.l.b16 %v3057
      %v3137 = vunpack.c.l.b16 %v3058
      %v3138 = vunpack.c.l.b16 %v3059
      %v3139 = vunpack.c.l.b16 %v3060
      %v3140 = vunpack.c.l.b16 %v3061
      %v3141 = vunpack.c.l.b16 %v3062
      %v3142 = vunpack.c.l.b16 %v3063
      %v3143 = vunpack.c.l.b16 %v3064
      %v3144 = vunpack.c.l.b16 %v3065
      %v3145 = vunpack.c.l.b16 %v3066
      %v3146 = vunpack.c.l.b16 %v3067
      %v3147 = vunpack.c.l.b16 %v3068
      %v3148 = vunpack.c.l.b16 %v3069
      %v3149 = vunpack.c.l.b16 %v3070
      %v3150 = vunpack.c.l.b16 %v3071
      %v3151 = vunpack.c.l.b16 %v3072
      %v3152 = vunpack.c.l.b16 %v3073
      %v3153 = vunpack.c.l.b16 %v3074
      %v3154 = vunpack.c.l.b16 %v3075
      %v3155 = vunpack.c.l.b16 %v3076
      %v3156 = vunpack.c.l.b16 %v3077
      %v3157 = vunpack.c.l.b16 %v3078
      %v3158 = vpack.c.b16 %v3123, %v3122
      %v3159 = vpack.c.b16 %v3125, %v3124
      %v3160 = vpack.c.b16 %v3127, %v3126
      %v3161 = vpack.c.b16 %v3129, %v3128
      %v3162 = vpack.c.b16 %v3131, %v3130
      %v3163 = vpack.c.b16 %v3133, %v3132
      %v3164 = vpack.c.b16 %v3135, %v3134
      %v3165 = vpack.c.b16 %v3137, %v3136
      %v3166 = vpack.c.b16 %v3139, %v3138
      %v3167 = vpack.c.b16 %v3141, %v3140
      %v3168 = vpack.c.b16 %v3143, %v3142
      %v3169 = vpack.c.b16 %v3145, %v3144
      %v3170 = vpack.c.b16 %v3147, %v3146
      %v3171 = vpack.c.b16 %v3149, %v3148
      %v3172 = vpack.c.b16 %v3151, %v3150
      %v3173 = vpack.c.b16 %v3153, %v3152
      %v3174 = vpack.c.b16 %v3155, %v3154
      %v3175 = vpack.c.b16 %v3157, %v3156
      %v3195 = vsel %vm2784, %v2768, 0
      %v3198 = vsel %vm2784, %v2769, 0
      %v3201 = vsel %vm2784, %v2770, 0
      %v3204 = vsel %vm2784, %v2771, 0
      %v3207 = vsel %vm2784, %v2772, 0
      %v3210 = vsel %vm2784, %v2773, 0
      %v3213 = vsel %vm2784, %v2774, 0
      %v3216 = vsel %vm2784, %v2775, 0
      %v3219 = vsel %vm2784, %v2776, 0
      %v3222 = vsel %vm2784, %v2777, 0
      %v3225 = vsel %vm2784, %v2778, 0
      %v3228 = vsel %vm2784, %v2779, 0
      %v3231 = vsel %vm2784, %v2780, 0
      %v3234 = vsel %vm2784, %v2781, 0
      %v3237 = vsel %vm2784, %v2782, 0
      %v3240 = vsel %vm2784, %v2783, 0
      %3242 = vmatprep.subr.bf16.mxu0 0
      %3243 = vmatpush1.bf16.msra.mxu0 %v3158
      %3244 = vmatprep.subr.bf16.mxu0 0
      %3245 = vmatpush1.bf16.msra.mxu0 %v3159
      %3246 = vmatprep.subr.bf16.mxu0 0
      %3247 = vmatpush1.bf16.msra.mxu0 %v3160
      %3248 = vmatprep.subr.bf16.mxu0 0
      %3249 = vmatpush1.bf16.msra.mxu0 %v3161
      %3250 = vmatprep.subr.bf16.mxu0 0
      %3251 = vmatpush1.bf16.msra.mxu0 %v3162
      %3252 = vmatprep.subr.bf16.mxu0 0
      %3253 = vmatpush1.bf16.msra.mxu0 %v3163
      %3254 = vmatprep.subr.bf16.mxu0 0
      %3255 = vmatpush1.bf16.msra.mxu0 %v3164
      %3256 = vmatprep.subr.bf16.mxu0 0
      %3257 = vmatpush1.bf16.msra.mxu0 %v3165
      %3258 = vmatprep.subr.bf16.mxu0 0
      %3259 = vmatpush1.bf16.msra.mxu0 %v3166
      %3260 = vmatprep.subr.bf16.mxu0 0
      %3261 = vmatpush1.bf16.msra.mxu0 %v3167
      %3262 = vmatprep.subr.bf16.mxu0 0
      %3263 = vmatpush1.bf16.msra.mxu0 %v3168
      %3264 = vmatprep.subr.bf16.mxu0 0
      %3265 = vmatpush1.bf16.msra.mxu0 %v3169
      %3266 = vmatprep.subr.bf16.mxu0 0
      %3267 = vmatpush1.bf16.msra.mxu0 %v3170
      %3268 = vmatprep.subr.bf16.mxu0 0
      %3269 = vmatpush1.bf16.msra.mxu0 %v3171
      %3270 = vmatprep.subr.bf16.mxu0 0
      %3271 = vmatpush1.bf16.msra.mxu0 %v3172
      %3272 = vmatprep.subr.bf16.mxu0 0
      %3273 = vmatpush1.bf16.msra.mxu0 %v3173
      %3274 = vmatprep.mubr.bf16.mxu0 %v2996
      %3275 = vmatmul.mubr.bf16.gmra.mrb[0].mxu0 %v2868
      %v3276 = vpop.f32.mrb[0].mxu0
      %v3277 = vadd.f32 %v3084, %v3276
      %v3278 = vpop.f32.mrb[0].mxu0
      %v3279 = vpop.f32.mrb[0].mxu0
      %v3280 = vadd.f32 %v3084, %v3279
      %v3281 = vpop.f32.mrb[0].mxu0
      %3282 = vmatprep.mubr.bf16.mxu0 %v2999
      %3283 = vmatmul.mubr.bf16.gmra.mrb[0].mxu0 %v2871
      %v3284 = vpop.f32.mrb[0].mxu0
      %v3285 = vadd.f32 %v3084, %v3284
      %v3286 = vpop.f32.mrb[0].mxu0
      %v3287 = vpop.f32.mrb[0].mxu0
      %v3288 = vadd.f32 %v3084, %v3287
      %v3289 = vpop.f32.mrb[0].mxu0
      %3290 = vmatprep.mubr.bf16.mxu0 %v3002
      %3291 = vmatmul.mubr.bf16.gmra.mrb[0].mxu0 %v2874
      %v3292 = vpop.f32.mrb[0].mxu0
      %v3293 = vadd.f32 %v3084, %v3292
      %v3294 = vpop.f32.mrb[0].mxu0
      %v3295 = vpop.f32.mrb[0].mxu0
      %v3296 = vadd.f32 %v3084, %v3295
      %v3297 = vpop.f32.mrb[0].mxu0
      %3298 = vmatprep.mubr.bf16.mxu0 %v3005
      %3299 = vmatmul.mubr.bf16.gmra.mrb[0].mxu0 %v2877
      %v3300 = vpop.f32.mrb[0].mxu0
      %v3301 = vadd.f32 %v3084, %v3300
      %v3302 = vpop.f32.mrb[0].mxu0
      %v3303 = vpop.f32.mrb[0].mxu0
      %v3304 = vadd.f32 %v3084, %v3303
      %v3305 = vpop.f32.mrb[0].mxu0
      %3306 = vmatprep.mubr.bf16.mxu0 %v3008
      %3307 = vmatmul.mubr.bf16.gmra.mrb[0].mxu0 %v2880
      %v3308 = vpop.f32.mrb[0].mxu0
      %v3309 = vadd.f32 %v3084, %v3308
      %v3310 = vpop.f32.mrb[0].mxu0
      %v3311 = vpop.f32.mrb[0].mxu0
      %v3312 = vadd.f32 %v3084, %v3311
      %v3313 = vpop.f32.mrb[0].mxu0
      %3314 = vmatprep.mubr.bf16.mxu0 %v3011
      %3315 = vmatmul.mubr.bf16.gmra.mrb[0].mxu0 %v2883
      %v3316 = vpop.f32.mrb[0].mxu0
      %v3317 = vadd.f32 %v3084, %v3316
      %v3318 = vpop.f32.mrb[0].mxu0
      %v3319 = vpop.f32.mrb[0].mxu0
      %v3320 = vadd.f32 %v3084, %v3319
      %v3321 = vpop.f32.mrb[0].mxu0
      %3322 = vmatprep.mubr.bf16.mxu0 %v3014
      %3323 = vmatmul.mubr.bf16.gmra.mrb[0].mxu0 %v2886
      %v3324 = vpop.f32.mrb[0].mxu0
      %v3325 = vadd.f32 %v3084, %v3324
      %v3326 = vpop.f32.mrb[0].mxu0
      %v3327 = vpop.f32.mrb[0].mxu0
      %v3328 = vadd.f32 %v3084, %v3327
      %v3329 = vpop.f32.mrb[0].mxu0
      %3330 = vmatprep.mubr.bf16.mxu0 %v3017
      %3331 = vmatmul.mubr.bf16.gmra.mrb[0].mxu0 %v2889
      %v3332 = vpop.f32.mrb[0].mxu0
      %v3333 = vadd.f32 %v3084, %v3332
      %v3334 = vpop.f32.mrb[0].mxu0
      %v3335 = vpop.f32.mrb[0].mxu0
      %v3336 = vadd.f32 %v3084, %v3335
      %v3337 = vpop.f32.mrb[0].mxu0
      %3338 = vmatprep.mubr.bf16.mxu0 %v3020
      %3339 = vmatmul.mubr.bf16.gmra.mrb[0].mxu0 %v2892
      %v3340 = vpop.f32.mrb[0].mxu0
      %v3341 = vadd.f32 %v3084, %v3340
      %v3342 = vpop.f32.mrb[0].mxu0
      %v3343 = vpop.f32.mrb[0].mxu0
      %v3344 = vadd.f32 %v3084, %v3343
      %v3345 = vpop.f32.mrb[0].mxu0
      %3346 = vmatprep.mubr.bf16.mxu0 %v3023
      %3347 = vmatmul.mubr.bf16.gmra.mrb[0].mxu0 %v2895
      %v3348 = vpop.f32.mrb[0].mxu0
      %v3349 = vadd.f32 %v3084, %v3348
      %v3350 = vpop.f32.mrb[0].mxu0
      %v3351 = vpop.f32.mrb[0].mxu0
      %v3352 = vadd.f32 %v3084, %v3351
      %v3353 = vpop.f32.mrb[0].mxu0
      %3354 = vmatprep.mubr.bf16.mxu0 %v3026
      %3355 = vmatmul.mubr.bf16.gmra.mrb[0].mxu0 %v2898
      %v3356 = vpop.f32.mrb[0].mxu0
      %v3357 = vadd.f32 %v3084, %v3356
      %v3358 = vpop.f32.mrb[0].mxu0
      %v3359 = vpop.f32.mrb[0].mxu0
      %v3360 = vadd.f32 %v3084, %v3359
      %v3361 = vpop.f32.mrb[0].mxu0
      %3362 = vmatprep.mubr.bf16.mxu0 %v3029
      %3363 = vmatmul.mubr.bf16.gmra.mrb[0].mxu0 %v2901
      %v3364 = vpop.f32.mrb[0].mxu0
      %v3365 = vadd.f32 %v3084, %v3364
      %v3366 = vpop.f32.mrb[0].mxu0
      %v3367 = vpop.f32.mrb[0].mxu0
      %v3368 = vadd.f32 %v3084, %v3367
      %v3369 = vpop.f32.mrb[0].mxu0
      %3370 = vmatprep.mubr.bf16.mxu0 %v3032
      %3371 = vmatmul.mubr.bf16.gmra.mrb[0].mxu0 %v2904
      %v3372 = vpop.f32.mrb[0].mxu0
      %v3373 = vadd.f32 %v3084, %v3372
      %v3374 = vpop.f32.mrb[0].mxu0
      %v3375 = vpop.f32.mrb[0].mxu0
      %v3376 = vadd.f32 %v3084, %v3375
      %v3377 = vpop.f32.mrb[0].mxu0
      %3378 = vmatprep.mubr.bf16.mxu0 %v3035
      %3379 = vmatmul.mubr.bf16.gmra.mrb[0].mxu0 %v2907
      %v3380 = vpop.f32.mrb[0].mxu0
      %v3381 = vadd.f32 %v3084, %v3380
      %v3382 = vpop.f32.mrb[0].mxu0
      %v3383 = vpop.f32.mrb[0].mxu0
      %v3384 = vadd.f32 %v3084, %v3383
      %v3385 = vpop.f32.mrb[0].mxu0
      %3386 = vmatprep.mubr.bf16.mxu0 %v3038
      %3387 = vmatmul.mubr.bf16.gmra.mrb[0].mxu0 %v2910
      %v3388 = vpop.f32.mrb[0].mxu0
      %v3389 = vadd.f32 %v3084, %v3388
      %v3390 = vpop.f32.mrb[0].mxu0
      %v3391 = vpop.f32.mrb[0].mxu0
      %v3392 = vadd.f32 %v3084, %v3391
      %v3393 = vpop.f32.mrb[0].mxu0
      %3394 = vmatprep.mubr.bf16.mxu0 %v3041
      %3395 = vmatmul.mubr.bf16.gmra.mrb[0].mxu0 %v2913
      %v3396 = vpop.f32.mrb[0].mxu0
      %v3397 = vadd.f32 %v3084, %v3396
      %v3398 = vpop.f32.mrb[0].mxu0
      %v3399 = vpop.f32.mrb[0].mxu0
      %v3400 = vadd.f32 %v3084, %v3399
      %v3401 = vpop.f32.mrb[0].mxu0
      %3402 = vdwg.mxu0
      %3403 = vmatprep.subr.bf16.mxu0 0
      %3404 = vmatpush1.bf16.msra.mxu0 %v3174
      %3405 = vmatprep.subr.bf16.mxu0 0
      %3406 = vmatpush1.bf16.msra.mxu0 %v3175
      %3407 = vmatprep.subr.bf16.mxu0 0
      %3408 = vmatpush1.bf16.msra.mxu0 0
      %3409 = vmatprep.subr.bf16.mxu0 0
      %3410 = vmatpush1.bf16.msra.mxu0 0
      %3411 = vmatprep.subr.bf16.mxu0 0
      %3412 = vmatpush1.bf16.msra.mxu0 0
      %3413 = vmatprep.subr.bf16.mxu0 0
      %3414 = vmatpush1.bf16.msra.mxu0 0
      %3415 = vmatprep.subr.bf16.mxu0 0
      %3416 = vmatpush1.bf16.msra.mxu0 0
      %3417 = vmatprep.subr.bf16.mxu0 0
      %3418 = vmatpush1.bf16.msra.mxu0 0
      %3419 = vmatprep.subr.bf16.mxu0 0
      %3420 = vmatpush1.bf16.msra.mxu0 0
      %3421 = vmatprep.subr.bf16.mxu0 0
      %3422 = vmatpush1.bf16.msra.mxu0 0
      %3423 = vmatprep.subr.bf16.mxu0 0
      %3424 = vmatpush1.bf16.msra.mxu0 0
      %3425 = vmatprep.subr.bf16.mxu0 0
      %3426 = vmatpush1.bf16.msra.mxu0 0
      %3427 = vmatprep.subr.bf16.mxu0 0
      %3428 = vmatpush1.bf16.msra.mxu0 0
      %3429 = vmatprep.subr.bf16.mxu0 0
      %3430 = vmatpush1.bf16.msra.mxu0 0
      %3431 = vmatprep.subr.bf16.mxu0 0
      %3432 = vmatpush1.bf16.msra.mxu0 0
      %3433 = vmatprep.subr.bf16.mxu0 0
      %3434 = vmatpush1.bf16.msra.mxu0 0
      %3435 = vmatprep.mubr.bf16.mxu0 0
      %3436 = vmatmul.mubr.bf16.gmra.mrb[0].mxu0 %v3195
      %v3437 = vpop.f32.mrb[0].mxu0
      %v3438 = vadd.f32 %v3277, %v3437
      %v3439 = vpop.f32.mrb[0].mxu0
      %v3440 = vpop.f32.mrb[0].mxu0
      %v3441 = vadd.f32 %v3280, %v3440
      %v3442 = vpop.f32.mrb[0].mxu0
      %3443 = vmatprep.mubr.bf16.mxu0 0
      %3444 = vmatmul.mubr.bf16.gmra.mrb[0].mxu0 %v3198
      %v3445 = vpop.f32.mrb[0].mxu0
      %v3446 = vadd.f32 %v3285, %v3445
      %v3447 = vpop.f32.mrb[0].mxu0
      %v3448 = vpop.f32.mrb[0].mxu0
      %v3449 = vadd.f32 %v3288, %v3448
      %v3450 = vpop.f32.mrb[0].mxu0
      %3451 = vmatprep.mubr.bf16.mxu0 0
      %3452 = vmatmul.mubr.bf16.gmra.mrb[0].mxu0 %v3201
      %v3453 = vpop.f32.mrb[0].mxu0
      %v3454 = vadd.f32 %v3293, %v3453
      %v3455 = vpop.f32.mrb[0].mxu0
      %v3456 = vpop.f32.mrb[0].mxu0
      %v3457 = vadd.f32 %v3296, %v3456
      %v3458 = vpop.f32.mrb[0].mxu0
      %3459 = vmatprep.mubr.bf16.mxu0 0
      %3460 = vmatmul.mubr.bf16.gmra.mrb[0].mxu0 %v3204
      %v3461 = vpop.f32.mrb[0].mxu0
      %v3462 = vadd.f32 %v3301, %v3461
      %v3463 = vpop.f32.mrb[0].mxu0
      %v3464 = vpop.f32.mrb[0].mxu0
      %v3465 = vadd.f32 %v3304, %v3464
      %v3466 = vpop.f32.mrb[0].mxu0
      %3467 = vmatprep.mubr.bf16.mxu0 0
      %3468 = vmatmul.mubr.bf16.gmra.mrb[0].mxu0 %v3207
      %v3469 = vpop.f32.mrb[0].mxu0
      %v3470 = vadd.f32 %v3309, %v3469
      %v3471 = vpop.f32.mrb[0].mxu0
      %v3472 = vpop.f32.mrb[0].mxu0
      %v3473 = vadd.f32 %v3312, %v3472
      %v3474 = vpop.f32.mrb[0].mxu0
      %3475 = vmatprep.mubr.bf16.mxu0 0
      %3476 = vmatmul.mubr.bf16.gmra.mrb[0].mxu0 %v3210
      %v3477 = vpop.f32.mrb[0].mxu0
      %v3478 = vadd.f32 %v3317, %v3477
      %v3479 = vpop.f32.mrb[0].mxu0
      %v3480 = vpop.f32.mrb[0].mxu0
      %v3481 = vadd.f32 %v3320, %v3480
      %v3482 = vpop.f32.mrb[0].mxu0
      %3483 = vmatprep.mubr.bf16.mxu0 0
      %3484 = vmatmul.mubr.bf16.gmra.mrb[0].mxu0 %v3213
      %v3485 = vpop.f32.mrb[0].mxu0
      %v3486 = vadd.f32 %v3325, %v3485
      %v3487 = vpop.f32.mrb[0].mxu0
      %v3488 = vpop.f32.mrb[0].mxu0
      %v3489 = vadd.f32 %v3328, %v3488
      %v3490 = vpop.f32.mrb[0].mxu0
      %3491 = vmatprep.mubr.bf16.mxu0 0
      %3492 = vmatmul.mubr.bf16.gmra.mrb[0].mxu0 %v3216
      %v3493 = vpop.f32.mrb[0].mxu0
      %v3494 = vadd.f32 %v3333, %v3493
      %v3495 = vpop.f32.mrb[0].mxu0
      %v3496 = vpop.f32.mrb[0].mxu0
      %v3497 = vadd.f32 %v3336, %v3496
      %v3498 = vpop.f32.mrb[0].mxu0
      %3499 = vmatprep.mubr.bf16.mxu0 0
      %3500 = vmatmul.mubr.bf16.gmra.mrb[0].mxu0 %v3219
      %v3501 = vpop.f32.mrb[0].mxu0
      %v3502 = vadd.f32 %v3341, %v3501
      %v3503 = vpop.f32.mrb[0].mxu0
      %v3504 = vpop.f32.mrb[0].mxu0
      %v3505 = vadd.f32 %v3344, %v3504
      %v3506 = vpop.f32.mrb[0].mxu0
      %3507 = vmatprep.mubr.bf16.mxu0 0
      %3508 = vmatmul.mubr.bf16.gmra.mrb[0].mxu0 %v3222
      %v3509 = vpop.f32.mrb[0].mxu0
      %v3510 = vadd.f32 %v3349, %v3509
      %v3511 = vpop.f32.mrb[0].mxu0
      %v3512 = vpop.f32.mrb[0].mxu0
      %v3513 = vadd.f32 %v3352, %v3512
      %v3514 = vpop.f32.mrb[0].mxu0
      %3515 = vmatprep.mubr.bf16.mxu0 0
      %3516 = vmatmul.mubr.bf16.gmra.mrb[0].mxu0 %v3225
      %v3517 = vpop.f32.mrb[0].mxu0
      %v3518 = vadd.f32 %v3357, %v3517
      %v3519 = vpop.f32.mrb[0].mxu0
      %v3520 = vpop.f32.mrb[0].mxu0
      %v3521 = vadd.f32 %v3360, %v3520
      %v3522 = vpop.f32.mrb[0].mxu0
      %3523 = vmatprep.mubr.bf16.mxu0 0
      %3524 = vmatmul.mubr.bf16.gmra.mrb[0].mxu0 %v3228
      %v3525 = vpop.f32.mrb[0].mxu0
      %v3526 = vadd.f32 %v3365, %v3525
      %v3527 = vpop.f32.mrb[0].mxu0
      %v3528 = vpop.f32.mrb[0].mxu0
      %v3529 = vadd.f32 %v3368, %v3528
      %v3530 = vpop.f32.mrb[0].mxu0
      %3531 = vmatprep.mubr.bf16.mxu0 0
      %3532 = vmatmul.mubr.bf16.gmra.mrb[0].mxu0 %v3231
      %v3533 = vpop.f32.mrb[0].mxu0
      %v3534 = vadd.f32 %v3373, %v3533
      %v3535 = vpop.f32.mrb[0].mxu0
      %v3536 = vpop.f32.mrb[0].mxu0
      %v3537 = vadd.f32 %v3376, %v3536
      %v3538 = vpop.f32.mrb[0].mxu0
      %3539 = vmatprep.mubr.bf16.mxu0 0
      %3540 = vmatmul.mubr.bf16.gmra.mrb[0].mxu0 %v3234
      %v3541 = vpop.f32.mrb[0].mxu0
      %v3542 = vadd.f32 %v3381, %v3541
      %v3543 = vpop.f32.mrb[0].mxu0
      %v3544 = vpop.f32.mrb[0].mxu0
      %v3545 = vadd.f32 %v3384, %v3544
      %v3546 = vpop.f32.mrb[0].mxu0
      %3547 = vmatprep.mubr.bf16.mxu0 0
      %3548 = vmatmul.mubr.bf16.gmra.mrb[0].mxu0 %v3237
      %v3549 = vpop.f32.mrb[0].mxu0
      %v3550 = vadd.f32 %v3389, %v3549
      %v3551 = vpop.f32.mrb[0].mxu0
      %v3552 = vpop.f32.mrb[0].mxu0
      %v3553 = vadd.f32 %v3392, %v3552
      %v3554 = vpop.f32.mrb[0].mxu0
      %3555 = vmatprep.mubr.bf16.mxu0 0
      %3556 = vmatmul.mubr.bf16.gmra.mrb[0].mxu0 %v3240
      %v3557 = vpop.f32.mrb[0].mxu0
      %v3558 = vadd.f32 %v3397, %v3557
      %v3559 = vpop.f32.mrb[0].mxu0
      %v3560 = vpop.f32.mrb[0].mxu0
      %v3561 = vadd.f32 %v3400, %v3560
      %v3562 = vpop.f32.mrb[0].mxu0
      %3563 = vdwg.mxu0
      %v3564 = vmax.f32 %v3438, 0.0
      %v3565 = vmax.f32 %v3441, 0.0
      %v3566 = vmax.f32 %v3446, 0.0
      %v3567 = vmax.f32 %v3449, 0.0
      %v3568 = vmax.f32 %v3454, 0.0
      %v3569 = vmax.f32 %v3457, 0.0
      %v3570 = vmax.f32 %v3462, 0.0
      %v3571 = vmax.f32 %v3465, 0.0
      %v3572 = vmax.f32 %v3470, 0.0
      %v3573 = vmax.f32 %v3473, 0.0
      %v3574 = vmax.f32 %v3478, 0.0
      %v3575 = vmax.f32 %v3481, 0.0
      %v3576 = vmax.f32 %v3486, 0.0
      %v3577 = vmax.f32 %v3489, 0.0
      %v3578 = vmax.f32 %v3494, 0.0
      %v3579 = vmax.f32 %v3497, 0.0
      %v3580 = vmax.f32 %v3502, 0.0
      %v3581 = vmax.f32 %v3505, 0.0
      %v3582 = vmax.f32 %v3510, 0.0
      %v3583 = vmax.f32 %v3513, 0.0
      %v3584 = vmax.f32 %v3518, 0.0
      %v3585 = vmax.f32 %v3521, 0.0
      %v3586 = vmax.f32 %v3526, 0.0
      %v3587 = vmax.f32 %v3529, 0.0
      %v3588 = vmax.f32 %v3534, 0.0
      %v3589 = vmax.f32 %v3537, 0.0
      %v3590 = vmax.f32 %v3542, 0.0
      %v3591 = vmax.f32 %v3545, 0.0
      %v3592 = vmax.f32 %v3550, 0.0
      %v3593 = vmax.f32 %v3553, 0.0
      %v3594 = vmax.f32 %v3558, 0.0
      %v3595 = vmax.f32 %v3561, 0.0
      %v3596 = vpack.c.bf16 %v3565, %v3564
      %v3597 = vpack.c.bf16 %v3567, %v3566
      %v3598 = vpack.c.bf16 %v3569, %v3568
      %v3599 = vpack.c.bf16 %v3571, %v3570
      %v3600 = vpack.c.bf16 %v3573, %v3572
      %v3601 = vpack.c.bf16 %v3575, %v3574
      %v3602 = vpack.c.bf16 %v3577, %v3576
      %v3603 = vpack.c.bf16 %v3579, %v3578
      %v3604 = vpack.c.bf16 %v3581, %v3580
      %v3605 = vpack.c.bf16 %v3583, %v3582
      %v3606 = vpack.c.bf16 %v3585, %v3584
      %v3607 = vpack.c.bf16 %v3587, %v3586
      %v3608 = vpack.c.bf16 %v3589, %v3588
      %v3609 = vpack.c.bf16 %v3591, %v3590
      %v3610 = vpack.c.bf16 %v3593, %v3592
      %v3611 = vpack.c.bf16 %v3595, %v3594
      %v3613 = vshrl.u32 %v3596, 16
      %v3615 = vrot.slane %v3613, 7
      %v3616 = vshll.u32 %v3596, 16
      %v3618 = vor.u32 %v3615, %v3616
      %v3620 = vshrl.u32 %v3597, 16
      %v3622 = vrot.slane %v3620, 7
      %v3623 = vshll.u32 %v3597, 16
      %v3625 = vor.u32 %v3622, %v3623
      %v3627 = vshrl.u32 %v3598, 16
      %v3629 = vrot.slane %v3627, 7
      %v3630 = vshll.u32 %v3598, 16
      %v3632 = vor.u32 %v3629, %v3630
      %v3634 = vshrl.u32 %v3599, 16
      %v3636 = vrot.slane %v3634, 7
      %v3637 = vshll.u32 %v3599, 16
      %v3639 = vor.u32 %v3636, %v3637
      %v3641 = vshrl.u32 %v3600, 16
      %v3643 = vrot.slane %v3641, 7
      %v3644 = vshll.u32 %v3600, 16
      %v3646 = vor.u32 %v3643, %v3644
      %v3648 = vshrl.u32 %v3601, 16
      %v3650 = vrot.slane %v3648, 7
      %v3651 = vshll.u32 %v3601, 16
      %v3653 = vor.u32 %v3650, %v3651
      %v3655 = vshrl.u32 %v3602, 16
      %v3657 = vrot.slane %v3655, 7
      %v3658 = vshll.u32 %v3602, 16
      %v3660 = vor.u32 %v3657, %v3658
      %v3662 = vshrl.u32 %v3603, 16
      %v3664 = vrot.slane %v3662, 7
      %v3665 = vshll.u32 %v3603, 16
      %v3667 = vor.u32 %v3664, %v3665
      %v3669 = vshrl.u32 %v3604, 16
      %v3671 = vrot.slane %v3669, 7
      %v3672 = vshll.u32 %v3604, 16
      %v3674 = vor.u32 %v3671, %v3672
      %v3676 = vshrl.u32 %v3605, 16
      %v3678 = vrot.slane %v3676, 7
      %v3679 = vshll.u32 %v3605, 16
      %v3681 = vor.u32 %v3678, %v3679
      %v3683 = vshrl.u32 %v3606, 16
      %v3685 = vrot.slane %v3683, 7
      %v3686 = vshll.u32 %v3606, 16
      %v3688 = vor.u32 %v3685, %v3686
      %v3690 = vshrl.u32 %v3607, 16
      %v3692 = vrot.slane %v3690, 7
      %v3693 = vshll.u32 %v3607, 16
      %v3695 = vor.u32 %v3692, %v3693
      %v3697 = vshrl.u32 %v3608, 16
      %v3699 = vrot.slane %v3697, 7
      %v3700 = vshll.u32 %v3608, 16
      %v3702 = vor.u32 %v3699, %v3700
      %v3704 = vshrl.u32 %v3609, 16
      %v3706 = vrot.slane %v3704, 7
      %v3707 = vshll.u32 %v3609, 16
      %v3709 = vor.u32 %v3706, %v3707
      %v3711 = vshrl.u32 %v3610, 16
      %v3713 = vrot.slane %v3711, 7
      %v3714 = vshll.u32 %v3610, 16
      %v3716 = vor.u32 %v3713, %v3714
      %v3718 = vshrl.u32 %v3611, 16
      %v3720 = vrot.slane %v3718, 7
      %v3721 = vshll.u32 %v3611, 16
      %v3723 = vor.u32 %v3720, %v3721
      %vm3756 = vcmask 1040384
      %vm3757 = vsmask.f32 256
      %vm3758 = vmand %vm3756, %vm3757
      %v3759 = vsel %vm3758, 0, %v3618
      %v3760 = vsel %vm3758, 0, %v3625
      %v3761 = vsel %vm3758, 0, %v3632
      %v3762 = vsel %vm3758, 0, %v3639
      %v3763 = vsel %vm3758, 0, %v3646
      %v3764 = vsel %vm3758, 0, %v3653
      %v3765 = vsel %vm3758, 0, %v3660
      %v3766 = vsel %vm3758, 0, %v3667
      %v3767 = vsel %vm3758, 0, %v3674
      %v3768 = vsel %vm3758, 0, %v3681
      %v3769 = vsel %vm3758, 0, %v3688
      %v3770 = vsel %vm3758, 0, %v3695
      %v3771 = vsel %vm3758, 0, %v3702
      %v3772 = vsel %vm3758, 0, %v3709
      %v3773 = vsel %vm3758, 0, %v3716
      %v3774 = vsel %vm3758, 0, %v3723
      %v3775 = vsel %vm3758, %v3615, 0
      %v3776 = vsel %vm3758, %v3622, 0
      %v3777 = vsel %vm3758, %v3629, 0
      %v3778 = vsel %vm3758, %v3636, 0
      %v3779 = vsel %vm3758, %v3643, 0
      %v3780 = vsel %vm3758, %v3650, 0
      %v3781 = vsel %vm3758, %v3657, 0
      %v3782 = vsel %vm3758, %v3664, 0
      %v3783 = vsel %vm3758, %v3671, 0
      %v3784 = vsel %vm3758, %v3678, 0
      %v3785 = vsel %vm3758, %v3685, 0
      %v3786 = vsel %vm3758, %v3692, 0
      %v3787 = vsel %vm3758, %v3699, 0
      %v3788 = vsel %vm3758, %v3706, 0
      %v3789 = vsel %vm3758, %v3713, 0
      %v3790 = vsel %vm3758, %v3720, 0
      %vm3791 = vsmask.f32 7424
      %v3793 = vshrl.u32 0, 16
      %v3795 = vshll.u32 0, 16
      %v3797 = vrot.slane %v3795, 1
      %v3798 = vor.u32 %v3793, %v3797
      %v3799 = vsel %vm3791, %v3798, %v3797
      %v3801 = vshrl.u32 %v3759, 16
      %v3803 = vshll.u32 %v3759, 16
      %v3805 = vrot.slane %v3803, 1
      %v3806 = vor.u32 %v3801, %v3805
      %v3808 = vshll.u32 %v3775, 16
      %v3810 = vrot.slane %v3808, 1
      %v3811 = vsel %vm3791, %v3806, %v3810
      %v3813 = vshrl.u32 %v3760, 16
      %v3815 = vshll.u32 %v3760, 16
      %v3817 = vrot.slane %v3815, 1
      %v3818 = vor.u32 %v3813, %v3817
      %v3820 = vshll.u32 %v3776, 16
      %v3822 = vrot.slane %v3820, 1
      %v3823 = vsel %vm3791, %v3818, %v3822
      %v3825 = vshrl.u32 %v3761, 16
      %v3827 = vshll.u32 %v3761, 16
      %v3829 = vrot.slane %v3827, 1
      %v3830 = vor.u32 %v3825, %v3829
      %v3832 = vshll.u32 %v3777, 16
      %v3834 = vrot.slane %v3832, 1
      %v3835 = vsel %vm3791, %v3830, %v3834
      %v3837 = vshrl.u32 %v3762, 16
      %v3839 = vshll.u32 %v3762, 16
      %v3841 = vrot.slane %v3839, 1
      %v3842 = vor.u32 %v3837, %v3841
      %v3844 = vshll.u32 %v3778, 16
      %v3846 = vrot.slane %v3844, 1
      %v3847 = vsel %vm3791, %v3842, %v3846
      %v3849 = vshrl.u32 %v3763, 16
      %v3851 = vshll.u32 %v3763, 16
      %v3853 = vrot.slane %v3851, 1
      %v3854 = vor.u32 %v3849, %v3853
      %v3856 = vshll.u32 %v3779, 16
      %v3858 = vrot.slane %v3856, 1
      %v3859 = vsel %vm3791, %v3854, %v3858
      %v3861 = vshrl.u32 %v3764, 16
      %v3863 = vshll.u32 %v3764, 16
      %v3865 = vrot.slane %v3863, 1
      %v3866 = vor.u32 %v3861, %v3865
      %v3868 = vshll.u32 %v3780, 16
      %v3870 = vrot.slane %v3868, 1
      %v3871 = vsel %vm3791, %v3866, %v3870
      %v3873 = vshrl.u32 %v3765, 16
      %v3875 = vshll.u32 %v3765, 16
      %v3877 = vrot.slane %v3875, 1
      %v3878 = vor.u32 %v3873, %v3877
      %v3880 = vshll.u32 %v3781, 16
      %v3882 = vrot.slane %v3880, 1
      %v3883 = vsel %vm3791, %v3878, %v3882
      %v3885 = vshrl.u32 %v3766, 16
      %v3887 = vshll.u32 %v3766, 16
      %v3889 = vrot.slane %v3887, 1
      %v3890 = vor.u32 %v3885, %v3889
      %v3892 = vshll.u32 %v3782, 16
      %v3894 = vrot.slane %v3892, 1
      %v3895 = vsel %vm3791, %v3890, %v3894
      %v3897 = vshrl.u32 %v3767, 16
      %v3899 = vshll.u32 %v3767, 16
      %v3901 = vrot.slane %v3899, 1
      %v3902 = vor.u32 %v3897, %v3901
      %v3904 = vshll.u32 %v3783, 16
      %v3906 = vrot.slane %v3904, 1
      %v3907 = vsel %vm3791, %v3902, %v3906
      %v3909 = vshrl.u32 %v3768, 16
      %v3911 = vshll.u32 %v3768, 16
      %v3913 = vrot.slane %v3911, 1
      %v3914 = vor.u32 %v3909, %v3913
      %v3916 = vshll.u32 %v3784, 16
      %v3918 = vrot.slane %v3916, 1
      %v3919 = vsel %vm3791, %v3914, %v3918
      %v3921 = vshrl.u32 %v3769, 16
      %v3923 = vshll.u32 %v3769, 16
      %v3925 = vrot.slane %v3923, 1
      %v3926 = vor.u32 %v3921, %v3925
      %v3928 = vshll.u32 %v3785, 16
      %v3930 = vrot.slane %v3928, 1
      %v3931 = vsel %vm3791, %v3926, %v3930
      %v3933 = vshrl.u32 %v3770, 16
      %v3935 = vshll.u32 %v3770, 16
      %v3937 = vrot.slane %v3935, 1
      %v3938 = vor.u32 %v3933, %v3937
      %v3940 = vshll.u32 %v3786, 16
      %v3942 = vrot.slane %v3940, 1
      %v3943 = vsel %vm3791, %v3938, %v3942
      %v3945 = vshrl.u32 %v3771, 16
      %v3947 = vshll.u32 %v3771, 16
      %v3949 = vrot.slane %v3947, 1
      %v3950 = vor.u32 %v3945, %v3949
      %v3952 = vshll.u32 %v3787, 16
      %v3954 = vrot.slane %v3952, 1
      %v3955 = vsel %vm3791, %v3950, %v3954
      %v3957 = vshrl.u32 %v3772, 16
      %v3959 = vshll.u32 %v3772, 16
      %v3961 = vrot.slane %v3959, 1
      %v3962 = vor.u32 %v3957, %v3961
      %v3964 = vshll.u32 %v3788, 16
      %v3966 = vrot.slane %v3964, 1
      %v3967 = vsel %vm3791, %v3962, %v3966
      %v3969 = vshrl.u32 %v3773, 16
      %v3971 = vshll.u32 %v3773, 16
      %v3973 = vrot.slane %v3971, 1
      %v3974 = vor.u32 %v3969, %v3973
      %v3976 = vshll.u32 %v3789, 16
      %v3978 = vrot.slane %v3976, 1
      %v3979 = vsel %vm3791, %v3974, %v3978
      %vm4011 = vcmask 1046528
      %v4012 = vrot.slane 0, 1
      %v4013 = vsel %vm4011, %v4012, %v4012
      %v4014 = vrot.slane %v3759, 1
      %v4015 = vrot.slane %v3775, 1
      %v4016 = vsel %vm4011, %v4014, %v4015
      %v4017 = vrot.slane %v3760, 1
      %v4018 = vrot.slane %v3776, 1
      %v4019 = vsel %vm4011, %v4017, %v4018
      %v4020 = vrot.slane %v3761, 1
      %v4021 = vrot.slane %v3777, 1
      %v4022 = vsel %vm4011, %v4020, %v4021
      %v4023 = vrot.slane %v3762, 1
      %v4024 = vrot.slane %v3778, 1
      %v4025 = vsel %vm4011, %v4023, %v4024
      %v4026 = vrot.slane %v3763, 1
      %v4027 = vrot.slane %v3779, 1
      %v4028 = vsel %vm4011, %v4026, %v4027
      %v4029 = vrot.slane %v3764, 1
      %v4030 = vrot.slane %v3780, 1
      %v4031 = vsel %vm4011, %v4029, %v4030
      %v4032 = vrot.slane %v3765, 1
      %v4033 = vrot.slane %v3781, 1
      %v4034 = vsel %vm4011, %v4032, %v4033
      %v4035 = vrot.slane %v3766, 1
      %v4036 = vrot.slane %v3782, 1
      %v4037 = vsel %vm4011, %v4035, %v4036
      %v4038 = vrot.slane %v3767, 1
      %v4039 = vrot.slane %v3783, 1
      %v4040 = vsel %vm4011, %v4038, %v4039
      %v4041 = vrot.slane %v3768, 1
      %v4042 = vrot.slane %v3784, 1
      %v4043 = vsel %vm4011, %v4041, %v4042
      %v4044 = vrot.slane %v3769, 1
      %v4045 = vrot.slane %v3785, 1
      %v4046 = vsel %vm4011, %v4044, %v4045
      %v4047 = vrot.slane %v3770, 1
      %v4048 = vrot.slane %v3786, 1
      %v4049 = vsel %vm4011, %v4047, %v4048
      %v4050 = vrot.slane %v3771, 1
      %v4051 = vrot.slane %v3787, 1
      %v4052 = vsel %vm4011, %v4050, %v4051
      %v4053 = vrot.slane %v3772, 1
      %v4054 = vrot.slane %v3788, 1
      %v4055 = vsel %vm4011, %v4053, %v4054
      %v4056 = vrot.slane %v3773, 1
      %v4057 = vrot.slane %v3789, 1
      %v4058 = vsel %vm4011, %v4056, %v4057
      %v4060 = vshrl.u32 %v3774, 16
      %v4062 = vshll.u32 %v3774, 16
      %v4064 = vrot.slane %v4062, 1
      %v4065 = vor.u32 %v4060, %v4064
      %v4067 = vshll.u32 %v3790, 16
      %v4069 = vrot.slane %v4067, 1
      %v4070 = vsel %vm3791, %v4065, %v4069
      %v4073 = vrot.slane %v3774, 1
      %v4074 = vrot.slane %v3790, 1
      %v4075 = vsel %vm4011, %v4073, %v4074
      %4076 = vrot.lane.b32.xlu0 %v3799, 32
      %v4077 = vpop.permute.xlu0 %4076
      %4078 = vrot.lane.b32.xlu0 %v3811, 32
      %v4079 = vpop.permute.xlu0 %4078
      %4080 = vrot.lane.b32.xlu0 %v3823, 32
      %v4081 = vpop.permute.xlu0 %4080
      %4082 = vrot.lane.b32.xlu0 %v3835, 32
      %v4083 = vpop.permute.xlu0 %4082
      %4084 = vrot.lane.b32.xlu0 %v3847, 32
      %v4085 = vpop.permute.xlu0 %4084
      %4086 = vrot.lane.b32.xlu0 %v3859, 32
      %v4087 = vpop.permute.xlu0 %4086
      %4088 = vrot.lane.b32.xlu0 %v3871, 32
      %v4089 = vpop.permute.xlu0 %4088
      %4090 = vrot.lane.b32.xlu0 %v3883, 32
      %v4091 = vpop.permute.xlu0 %4090
      %4092 = vrot.lane.b32.xlu0 %v3895, 32
      %v4093 = vpop.permute.xlu0 %4092
      %4094 = vrot.lane.b32.xlu0 %v3907, 32
      %v4095 = vpop.permute.xlu0 %4094
      %4096 = vrot.lane.b32.xlu0 %v3919, 32
      %v4097 = vpop.permute.xlu0 %4096
      %4098 = vrot.lane.b32.xlu0 %v3931, 32
      %v4099 = vpop.permute.xlu0 %4098
      %4100 = vrot.lane.b32.xlu0 %v3943, 32
      %v4101 = vpop.permute.xlu0 %4100
      %4102 = vrot.lane.b32.xlu0 %v3955, 32
      %v4103 = vpop.permute.xlu0 %4102
      %4104 = vrot.lane.b32.xlu0 %v3967, 32
      %v4105 = vpop.permute.xlu0 %4104
      %4106 = vrot.lane.b32.xlu0 %v3979, 32
      %v4107 = vpop.permute.xlu0 %4106
      %4108 = vrot.lane.b32.xlu0 %v4013, 64
      %v4109 = vpop.permute.xlu0 %4108
      %4110 = vrot.lane.b32.xlu0 %v4016, 64
      %v4111 = vpop.permute.xlu0 %4110
      %4112 = vrot.lane.b32.xlu0 %v4019, 64
      %v4113 = vpop.permute.xlu0 %4112
      %4114 = vrot.lane.b32.xlu0 %v4022, 64
      %v4115 = vpop.permute.xlu0 %4114
      %4116 = vrot.lane.b32.xlu0 %v4025, 64
      %v4117 = vpop.permute.xlu0 %4116
      %4118 = vrot.lane.b32.xlu0 %v4028, 64
      %v4119 = vpop.permute.xlu0 %4118
      %4120 = vrot.lane.b32.xlu0 %v4031, 64
      %v4121 = vpop.permute.xlu0 %4120
      %4122 = vrot.lane.b32.xlu0 %v4034, 64
      %v4123 = vpop.permute.xlu0 %4122
      %4124 = vrot.lane.b32.xlu0 %v4037, 64
      %v4125 = vpop.permute.xlu0 %4124
      %4126 = vrot.lane.b32.xlu0 %v4040, 64
      %v4127 = vpop.permute.xlu0 %4126
      %4128 = vrot.lane.b32.xlu0 %v4043, 64
      %v4129 = vpop.permute.xlu0 %4128
      %4130 = vrot.lane.b32.xlu0 %v4046, 64
      %v4131 = vpop.permute.xlu0 %4130
      %4132 = vrot.lane.b32.xlu0 %v4049, 64
      %v4133 = vpop.permute.xlu0 %4132
      %4134 = vrot.lane.b32.xlu0 %v4052, 64
      %v4135 = vpop.permute.xlu0 %4134
      %4136 = vrot.lane.b32.xlu0 %v4055, 64
      %v4137 = vpop.permute.xlu0 %4136
      %4138 = vrot.lane.b32.xlu0 %v4058, 64
      %v4139 = vpop.permute.xlu0 %4138
      %4140 = vrot.lane.b32.xlu0 %v3759, 96
      %v4141 = vpop.permute.xlu0 %4140
      %4142 = vrot.lane.b32.xlu0 %v3760, 96
      %v4143 = vpop.permute.xlu0 %4142
      %4144 = vrot.lane.b32.xlu0 %v3761, 96
      %v4145 = vpop.permute.xlu0 %4144
      %4146 = vrot.lane.b32.xlu0 %v3762, 96
      %v4147 = vpop.permute.xlu0 %4146
      %4148 = vrot.lane.b32.xlu0 %v3763, 96
      %v4149 = vpop.permute.xlu0 %4148
      %4150 = vrot.lane.b32.xlu0 %v3764, 96
      %v4151 = vpop.permute.xlu0 %4150
      %4152 = vrot.lane.b32.xlu0 %v3765, 96
      %v4153 = vpop.permute.xlu0 %4152
      %4154 = vrot.lane.b32.xlu0 %v3766, 96
      %v4155 = vpop.permute.xlu0 %4154
      %4156 = vrot.lane.b32.xlu0 %v3767, 96
      %v4157 = vpop.permute.xlu0 %4156
      %4158 = vrot.lane.b32.xlu0 %v3768, 96
      %v4159 = vpop.permute.xlu0 %4158
      %4160 = vrot.lane.b32.xlu0 %v3769, 96
      %v4161 = vpop.permute.xlu0 %4160
      %4162 = vrot.lane.b32.xlu0 %v3770, 96
      %v4163 = vpop.permute.xlu0 %4162
      %4164 = vrot.lane.b32.xlu0 %v3771, 96
      %v4165 = vpop.permute.xlu0 %4164
      %4166 = vrot.lane.b32.xlu0 %v3772, 96
      %v4167 = vpop.permute.xlu0 %4166
      %4168 = vrot.lane.b32.xlu0 %v3773, 96
      %v4169 = vpop.permute.xlu0 %4168
      %4170 = vrot.lane.b32.xlu0 %v3774, 96
      %v4171 = vpop.permute.xlu0 %4170
      %4172 = vrot.lane.b32.xlu0 %v4016, 32
      %v4173 = vpop.permute.xlu0 %4172
      %4174 = vrot.lane.b32.xlu0 %v4019, 32
      %v4175 = vpop.permute.xlu0 %4174
      %4176 = vrot.lane.b32.xlu0 %v4022, 32
      %v4177 = vpop.permute.xlu0 %4176
      %4178 = vrot.lane.b32.xlu0 %v4025, 32
      %v4179 = vpop.permute.xlu0 %4178
      %4180 = vrot.lane.b32.xlu0 %v4028, 32
      %v4181 = vpop.permute.xlu0 %4180
      %4182 = vrot.lane.b32.xlu0 %v4031, 32
      %v4183 = vpop.permute.xlu0 %4182
      %4184 = vrot.lane.b32.xlu0 %v4034, 32
      %v4185 = vpop.permute.xlu0 %4184
      %4186 = vrot.lane.b32.xlu0 %v4037, 32
      %v4187 = vpop.permute.xlu0 %4186
      %4188 = vrot.lane.b32.xlu0 %v4040, 32
      %v4189 = vpop.permute.xlu0 %4188
      %4190 = vrot.lane.b32.xlu0 %v4043, 32
      %v4191 = vpop.permute.xlu0 %4190
      %4192 = vrot.lane.b32.xlu0 %v4046, 32
      %v4193 = vpop.permute.xlu0 %4192
      %4194 = vrot.lane.b32.xlu0 %v4049, 32
      %v4195 = vpop.permute.xlu0 %4194
      %4196 = vrot.lane.b32.xlu0 %v4052, 32
      %v4197 = vpop.permute.xlu0 %4196
      %4198 = vrot.lane.b32.xlu0 %v4055, 32
      %v4199 = vpop.permute.xlu0 %4198
      %4200 = vrot.lane.b32.xlu0 %v4058, 32
      %v4201 = vpop.permute.xlu0 %4200
      %4202 = vrot.lane.b32.xlu0 %v4075, 32
      %v4203 = vpop.permute.xlu0 %4202
      %4204 = vrot.lane.b32.xlu0 %v3760, 64
      %v4205 = vpop.permute.xlu0 %4204
      %4206 = vrot.lane.b32.xlu0 %v3761, 64
      %v4207 = vpop.permute.xlu0 %4206
      %4208 = vrot.lane.b32.xlu0 %v3762, 64
      %v4209 = vpop.permute.xlu0 %4208
      %4210 = vrot.lane.b32.xlu0 %v3763, 64
      %v4211 = vpop.permute.xlu0 %4210
      %4212 = vrot.lane.b32.xlu0 %v3764, 64
      %v4213 = vpop.permute.xlu0 %4212
      %4214 = vrot.lane.b32.xlu0 %v3765, 64
      %v4215 = vpop.permute.xlu0 %4214
      %4216 = vrot.lane.b32.xlu0 %v3766, 64
      %v4217 = vpop.permute.xlu0 %4216
      %4218 = vrot.lane.b32.xlu0 %v3767, 64
      %v4219 = vpop.permute.xlu0 %4218
      %4220 = vrot.lane.b32.xlu0 %v3768, 64
      %v4221 = vpop.permute.xlu0 %4220
      %4222 = vrot.lane.b32.xlu0 %v3769, 64
      %v4223 = vpop.permute.xlu0 %4222
      %4224 = vrot.lane.b32.xlu0 %v3770, 64
      %v4225 = vpop.permute.xlu0 %4224
      %4226 = vrot.lane.b32.xlu0 %v3771, 64
      %v4227 = vpop.permute.xlu0 %4226
      %4228 = vrot.lane.b32.xlu0 %v3772, 64
      %v4229 = vpop.permute.xlu0 %4228
      %4230 = vrot.lane.b32.xlu0 %v3773, 64
      %v4231 = vpop.permute.xlu0 %4230
      %4232 = vrot.lane.b32.xlu0 %v3774, 64
      %v4233 = vpop.permute.xlu0 %4232
      %4234 = vrot.lane.b32.xlu0 0, 64
      %v4235 = vpop.permute.xlu0 %4234
      %4236 = vrot.lane.b32.xlu0 %v3823, 96
      %v4237 = vpop.permute.xlu0 %4236
      %4238 = vrot.lane.b32.xlu0 %v3835, 96
      %v4239 = vpop.permute.xlu0 %4238
      %4240 = vrot.lane.b32.xlu0 %v3847, 96
      %v4241 = vpop.permute.xlu0 %4240
      %4242 = vrot.lane.b32.xlu0 %v3859, 96
      %v4243 = vpop.permute.xlu0 %4242
      %4244 = vrot.lane.b32.xlu0 %v3871, 96
      %v4245 = vpop.permute.xlu0 %4244
      %4246 = vrot.lane.b32.xlu0 %v3883, 96
      %v4247 = vpop.permute.xlu0 %4246
      %4248 = vrot.lane.b32.xlu0 %v3895, 96
      %v4249 = vpop.permute.xlu0 %4248
      %4250 = vrot.lane.b32.xlu0 %v3907, 96
      %v4251 = vpop.permute.xlu0 %4250
      %4252 = vrot.lane.b32.xlu0 %v3919, 96
      %v4253 = vpop.permute.xlu0 %4252
      %4254 = vrot.lane.b32.xlu0 %v3931, 96
      %v4255 = vpop.permute.xlu0 %4254
      %4256 = vrot.lane.b32.xlu0 %v3943, 96
      %v4257 = vpop.permute.xlu0 %4256
      %4258 = vrot.lane.b32.xlu0 %v3955, 96
      %v4259 = vpop.permute.xlu0 %4258
      %4260 = vrot.lane.b32.xlu0 %v3967, 96
      %v4261 = vpop.permute.xlu0 %4260
      %4262 = vrot.lane.b32.xlu0 %v3979, 96
      %v4263 = vpop.permute.xlu0 %4262
      %4264 = vrot.lane.b32.xlu0 %v4070, 96
      %v4265 = vpop.permute.xlu0 %4264
      %4266 = vrot.lane.b32.xlu0 %v3799, 96
      %v4267 = vpop.permute.xlu0 %4266
      %v4269 = vsel %vm2784, 0, %v4077
      %v4271 = vsel %vm2784, %v3759, %v4079
      %v4273 = vsel %vm2784, %v3760, %v4081
      %v4275 = vsel %vm2784, %v3761, %v4083
      %v4277 = vsel %vm2784, %v3762, %v4085
      %v4279 = vsel %vm2784, %v3763, %v4087
      %v4281 = vsel %vm2784, %v3764, %v4089
      %v4283 = vsel %vm2784, %v3765, %v4091
      %v4285 = vsel %vm2784, %v3766, %v4093
      %v4287 = vsel %vm2784, %v3767, %v4095
      %v4289 = vsel %vm2784, %v3768, %v4097
      %v4291 = vsel %vm2784, %v3769, %v4099
      %v4293 = vsel %vm2784, %v3770, %v4101
      %v4295 = vsel %vm2784, %v3771, %v4103
      %v4297 = vsel %vm2784, %v3772, %v4105
      %v4299 = vsel %vm2784, %v3773, %v4107
      %v4301 = vsel %vm2833, %v4269, %v4109
      %v4303 = vsel %vm2833, %v4271, %v4111
      %v4305 = vsel %vm2833, %v4273, %v4113
      %v4307 = vsel %vm2833, %v4275, %v4115
      %v4309 = vsel %vm2833, %v4277, %v4117
      %v4311 = vsel %vm2833, %v4279, %v4119
      %v4313 = vsel %vm2833, %v4281, %v4121
      %v4315 = vsel %vm2833, %v4283, %v4123
      %v4317 = vsel %vm2833, %v4285, %v4125
      %v4319 = vsel %vm2833, %v4287, %v4127
      %v4321 = vsel %vm2833, %v4289, %v4129
      %v4323 = vsel %vm2833, %v4291, %v4131
      %v4325 = vsel %vm2833, %v4293, %v4133
      %v4327 = vsel %vm2833, %v4295, %v4135
      %v4329 = vsel %vm2833, %v4297, %v4137
      %v4331 = vsel %vm2833, %v4299, %v4139
      %v4333 = vsel %vm2866, %v4301, %v4141
      %v4336 = vsel %vm2866, %v4303, %v4143
      %v4339 = vsel %vm2866, %v4305, %v4145
      %v4342 = vsel %vm2866, %v4307, %v4147
      %v4345 = vsel %vm2866, %v4309, %v4149
      %v4348 = vsel %vm2866, %v4311, %v4151
      %v4351 = vsel %vm2866, %v4313, %v4153
      %v4354 = vsel %vm2866, %v4315, %v4155
      %v4357 = vsel %vm2866, %v4317, %v4157
      %v4360 = vsel %vm2866, %v4319, %v4159
      %v4363 = vsel %vm2866, %v4321, %v4161
      %v4366 = vsel %vm2866, %v4323, %v4163
      %v4369 = vsel %vm2866, %v4325, %v4165
      %v4372 = vsel %vm2866, %v4327, %v4167
      %v4375 = vsel %vm2866, %v4329, %v4169
      %v4378 = vsel %vm2866, %v4331, %v4171
      %v4382 = vsel %vm2784, %v3811, %v4173
      %v4385 = vsel %vm2784, %v3823, %v4175
      %v4388 = vsel %vm2784, %v3835, %v4177
      %v4391 = vsel %vm2784, %v3847, %v4179
      %v4394 = vsel %vm2784, %v3859, %v4181
      %v4397 = vsel %vm2784, %v3871, %v4183
      %v4400 = vsel %vm2784, %v3883, %v4185
      %v4403 = vsel %vm2784, %v3895, %v4187
      %v4406 = vsel %vm2784, %v3907, %v4189
      %v4409 = vsel %vm2784, %v3919, %v4191
      %v4412 = vsel %vm2784, %v3931, %v4193
      %v4415 = vsel %vm2784, %v3943, %v4195
      %v4418 = vsel %vm2784, %v3955, %v4197
      %v4421 = vsel %vm2784, %v3967, %v4199
      %v4424 = vsel %vm2784, %v3979, %v4201
      %v4427 = vsel %vm2784, %v4070, %v4203
      %v4429 = vsel %vm2833, %v4382, %v4205
      %v4431 = vsel %vm2833, %v4385, %v4207
      %v4433 = vsel %vm2833, %v4388, %v4209
      %v4435 = vsel %vm2833, %v4391, %v4211
      %v4437 = vsel %vm2833, %v4394, %v4213
      %v4439 = vsel %vm2833, %v4397, %v4215
      %v4441 = vsel %vm2833, %v4400, %v4217
      %v4443 = vsel %vm2833, %v4403, %v4219
      %v4445 = vsel %vm2833, %v4406, %v4221
      %v4447 = vsel %vm2833, %v4409, %v4223
      %v4449 = vsel %vm2833, %v4412, %v4225
      %v4451 = vsel %vm2833, %v4415, %v4227
      %v4453 = vsel %vm2833, %v4418, %v4229
      %v4455 = vsel %vm2833, %v4421, %v4231
      %v4457 = vsel %vm2833, %v4424, %v4233
      %v4459 = vsel %vm2833, %v4427, %v4235
      %v4461 = vsel %vm2866, %v4429, %v4237
      %v4464 = vsel %vm2866, %v4431, %v4239
      %v4467 = vsel %vm2866, %v4433, %v4241
      %v4470 = vsel %vm2866, %v4435, %v4243
      %v4473 = vsel %vm2866, %v4437, %v4245
      %v4476 = vsel %vm2866, %v4439, %v4247
      %v4479 = vsel %vm2866, %v4441, %v4249
      %v4482 = vsel %vm2866, %v4443, %v4251
      %v4485 = vsel %vm2866, %v4445, %v4253
      %v4488 = vsel %vm2866, %v4447, %v4255
      %v4491 = vsel %vm2866, %v4449, %v4257
      %v4494 = vsel %vm2866, %v4451, %v4259
      %v4497 = vsel %vm2866, %v4453, %v4261
      %v4500 = vsel %vm2866, %v4455, %v4263
      %v4503 = vsel %vm2866, %v4457, %v4265
      %v4506 = vsel %vm2866, %v4459, %v4267
      %v4508 = vld [vmem:[%s3] sm:$0xf]
      %v4509 = vld [vmem:[%s3 + $0x4] sm:$0xf]
      %v4510 = vld [vmem:[%s3 + $0x8] sm:$0xf]
      %v4511 = vld [vmem:[%s3 + $0xc] sm:$0xf]
      %v4512 = vld [vmem:[%s3 + $0x10] sm:$0xf]
      %v4513 = vld [vmem:[%s3 + $0x14] sm:$0xf]
      %v4514 = vld [vmem:[%s3 + $0x18] sm:$0xf]
      %v4515 = vld [vmem:[%s3 + $0x1c] sm:$0xf]
      %v4516 = vld [vmem:[%s3 + $0x20] sm:$0xf]
      %v4517 = vld [vmem:[%s3 + $0x24] sm:$0xf]
      %v4518 = vld [vmem:[%s3 + $0x28] sm:$0xf]
      %v4519 = vld [vmem:[%s3 + $0x2c] sm:$0xf]
      %v4520 = vld [vmem:[%s3 + $0x30] sm:$0xf]
      %v4521 = vld [vmem:[%s3 + $0x34] sm:$0xf]
      %v4522 = vld [vmem:[%s3 + $0x38] sm:$0xf]
      %v4523 = vld [vmem:[%s3 + $0x3c] sm:$0xf]
      %v4524 = vld [vmem:[%s3 + $0x40] sm:$0xf]
      %v4525 = vld [vmem:[%s3 + $0x44] sm:$0xf]
      %v4526 = vld [vmem:[%s3 + $0x48] sm:$0xf]
      %v4527 = vld [vmem:[%s3 + $0x4c] sm:$0xf]
      %v4528 = vld [vmem:[%s3 + $0x50] sm:$0xf]
      %v4529 = vld [vmem:[%s3 + $0x54] sm:$0xf]
      %v4530 = vld [vmem:[%s3 + $0x58] sm:$0xf]
      %v4531 = vld [vmem:[%s3 + $0x5c] sm:$0xf]
      %v4532 = vld [vmem:[%s3 + $0x60] sm:$0xf]
      %v4533 = vld [vmem:[%s3 + $0x64] sm:$0xf]
      %v4534 = vld [vmem:[%s3 + $0x68] sm:$0xf]
      %v4535 = vld [vmem:[%s3 + $0x6c] sm:$0xf]
      %v4536 = vld [vmem:[%s3 + $0x70] sm:$0xf]
      %v4537 = vld [vmem:[%s3 + $0x74] sm:$0xf]
      %v4538 = vld [vmem:[%s3 + $0x78] sm:$0xf]
      %v4539 = vld [vmem:[%s3 + $0x7c] sm:$0xf]
      %v4540 = vld [vmem:[%s3 + $0x80] sm:$0xf]
      %v4541 = vld [vmem:[%s3 + $0x84] sm:$0xf]
      %v4542 = vld [vmem:[%s3 + $0x88] sm:$0xf]
      %v4543 = vld [vmem:[%s3 + $0x8c] sm:$0xf]
      %v4544 = vld [vmem:[%s4] sm:$0x1]
      %v4546 = vlaneseq
      %v4547 = vshrl.u32 %v4546, 7
      %v4548 = vsub.s32 0, %v4547
      %v4549 = vrot.slane %v4544, %v4548
      %v4587 = vunpack.c.l.b16 %v4508
      %v4588 = vunpack.c.l.b16 %v4509
      %v4589 = vunpack.c.l.b16 %v4510
      %v4590 = vunpack.c.l.b16 %v4511
      %v4591 = vunpack.c.l.b16 %v4512
      %v4592 = vunpack.c.l.b16 %v4513
      %v4593 = vunpack.c.l.b16 %v4514
      %v4594 = vunpack.c.l.b16 %v4515
      %v4595 = vunpack.c.l.b16 %v4516
      %v4596 = vunpack.c.l.b16 %v4517
      %v4597 = vunpack.c.l.b16 %v4518
      %v4598 = vunpack.c.l.b16 %v4519
      %v4599 = vunpack.c.l.b16 %v4520
      %v4600 = vunpack.c.l.b16 %v4521
      %v4601 = vunpack.c.l.b16 %v4522
      %v4602 = vunpack.c.l.b16 %v4523
      %v4603 = vunpack.c.l.b16 %v4524
      %v4604 = vunpack.c.l.b16 %v4525
      %v4605 = vunpack.c.l.b16 %v4526
      %v4606 = vunpack.c.l.b16 %v4527
      %v4607 = vunpack.c.l.b16 %v4528
      %v4608 = vunpack.c.l.b16 %v4529
      %v4609 = vunpack.c.l.b16 %v4530
      %v4610 = vunpack.c.l.b16 %v4531
      %v4611 = vunpack.c.l.b16 %v4532
      %v4612 = vunpack.c.l.b16 %v4533
      %v4613 = vunpack.c.l.b16 %v4534
      %v4614 = vunpack.c.l.b16 %v4535
      %v4615 = vunpack.c.l.b16 %v4536
      %v4616 = vunpack.c.l.b16 %v4537
      %v4617 = vunpack.c.l.b16 %v4538
      %v4618 = vunpack.c.l.b16 %v4539
      %v4619 = vunpack.c.l.b16 %v4540
      %v4620 = vunpack.c.l.b16 %v4541
      %v4621 = vunpack.c.l.b16 %v4542
      %v4622 = vunpack.c.l.b16 %v4543
      %v4623 = vpack.c.b16 %v4588, %v4587
      %v4624 = vpack.c.b16 %v4590, %v4589
      %v4625 = vpack.c.b16 %v4592, %v4591
      %v4626 = vpack.c.b16 %v4594, %v4593
      %v4627 = vpack.c.b16 %v4596, %v4595
      %v4628 = vpack.c.b16 %v4598, %v4597
      %v4629 = vpack.c.b16 %v4600, %v4599
      %v4630 = vpack.c.b16 %v4602, %v4601
      %v4631 = vpack.c.b16 %v4604, %v4603
      %v4632 = vpack.c.b16 %v4606, %v4605
      %v4633 = vpack.c.b16 %v4608, %v4607
      %v4634 = vpack.c.b16 %v4610, %v4609
      %v4635 = vpack.c.b16 %v4612, %v4611
      %v4636 = vpack.c.b16 %v4614, %v4613
      %v4637 = vpack.c.b16 %v4616, %v4615
      %v4638 = vpack.c.b16 %v4618, %v4617
      %v4639 = vpack.c.b16 %v4620, %v4619
      %v4640 = vpack.c.b16 %v4622, %v4621
      %v4660 = vsel %vm2784, %v4019, 0
      %v4663 = vsel %vm2784, %v4022, 0
      %v4666 = vsel %vm2784, %v4025, 0
      %v4669 = vsel %vm2784, %v4028, 0
      %v4672 = vsel %vm2784, %v4031, 0
      %v4675 = vsel %vm2784, %v4034, 0
      %v4678 = vsel %vm2784, %v4037, 0
      %v4681 = vsel %vm2784, %v4040, 0
      %v4684 = vsel %vm2784, %v4043, 0
      %v4687 = vsel %vm2784, %v4046, 0
      %v4690 = vsel %vm2784, %v4049, 0
      %v4693 = vsel %vm2784, %v4052, 0
      %v4696 = vsel %vm2784, %v4055, 0
      %v4699 = vsel %vm2784, %v4058, 0
      %v4702 = vsel %vm2784, %v4075, 0
      %v4705 = vsel %vm2784, %v4013, 0
      %4707 = vmatprep.subr.bf16.mxu0 0
      %4708 = vmatpush1.bf16.msra.mxu0 %v4623
      %4709 = vmatprep.subr.bf16.mxu0 0
      %4710 = vmatpush1.bf16.msra.mxu0 %v4624
      %4711 = vmatprep.subr.bf16.mxu0 0
      %4712 = vmatpush1.bf16.msra.mxu0 %v4625
      %4713 = vmatprep.subr.bf16.mxu0 0
      %4714 = vmatpush1.bf16.msra.mxu0 %v4626
      %4715 = vmatprep.subr.bf16.mxu0 0
      %4716 = vmatpush1.bf16.msra.mxu0 %v4627
      %4717 = vmatprep.subr.bf16.mxu0 0
      %4718 = vmatpush1.bf16.msra.mxu0 %v4628
      %4719 = vmatprep.subr.bf16.mxu0 0
      %4720 = vmatpush1.bf16.msra.mxu0 %v4629
      %4721 = vmatprep.subr.bf16.mxu0 0
      %4722 = vmatpush1.bf16.msra.mxu0 %v4630
      %4723 = vmatprep.subr.bf16.mxu0 0
      %4724 = vmatpush1.bf16.msra.mxu0 %v4631
      %4725 = vmatprep.subr.bf16.mxu0 0
      %4726 = vmatpush1.bf16.msra.mxu0 %v4632
      %4727 = vmatprep.subr.bf16.mxu0 0
      %4728 = vmatpush1.bf16.msra.mxu0 %v4633
      %4729 = vmatprep.subr.bf16.mxu0 0
      %4730 = vmatpush1.bf16.msra.mxu0 %v4634
      %4731 = vmatprep.subr.bf16.mxu0 0
      %4732 = vmatpush1.bf16.msra.mxu0 %v4635
      %4733 = vmatprep.subr.bf16.mxu0 0
      %4734 = vmatpush1.bf16.msra.mxu0 %v4636
      %4735 = vmatprep.subr.bf16.mxu0 0
      %4736 = vmatpush1.bf16.msra.mxu0 %v4637
      %4737 = vmatprep.subr.bf16.mxu0 0
      %4738 = vmatpush1.bf16.msra.mxu0 %v4638
      %4739 = vmatprep.mubr.bf16.mxu0 %v4461
      %4740 = vmatmul.mubr.bf16.gmra.mrb[0].mxu0 %v4333
      %v4741 = vpop.f32.mrb[0].mxu0
      %v4742 = vadd.f32 %v4549, %v4741
      %v4743 = vpop.f32.mrb[0].mxu0
      %v4744 = vpop.f32.mrb[0].mxu0
      %v4745 = vadd.f32 %v4549, %v4744
      %v4746 = vpop.f32.mrb[0].mxu0
      %4747 = vmatprep.mubr.bf16.mxu0 %v4464
      %4748 = vmatmul.mubr.bf16.gmra.mrb[0].mxu0 %v4336
      %v4749 = vpop.f32.mrb[0].mxu0
      %v4750 = vadd.f32 %v4549, %v4749
      %v4751 = vpop.f32.mrb[0].mxu0
      %v4752 = vpop.f32.mrb[0].mxu0
      %v4753 = vadd.f32 %v4549, %v4752
      %v4754 = vpop.f32.mrb[0].mxu0
      %4755 = vmatprep.mubr.bf16.mxu0 %v4467
      %4756 = vmatmul.mubr.bf16.gmra.mrb[0].mxu0 %v4339
      %v4757 = vpop.f32.mrb[0].mxu0
      %v4758 = vadd.f32 %v4549, %v4757
      %v4759 = vpop.f32.mrb[0].mxu0
      %v4760 = vpop.f32.mrb[0].mxu0
      %v4761 = vadd.f32 %v4549, %v4760
      %v4762 = vpop.f32.mrb[0].mxu0
      %4763 = vmatprep.mubr.bf16.mxu0 %v4470
      %4764 = vmatmul.mubr.bf16.gmra.mrb[0].mxu0 %v4342
      %v4765 = vpop.f32.mrb[0].mxu0
      %v4766 = vadd.f32 %v4549, %v4765
      %v4767 = vpop.f32.mrb[0].mxu0
      %v4768 = vpop.f32.mrb[0].mxu0
      %v4769 = vadd.f32 %v4549, %v4768
      %v4770 = vpop.f32.mrb[0].mxu0
      %4771 = vmatprep.mubr.bf16.mxu0 %v4473
      %4772 = vmatmul.mubr.bf16.gmra.mrb[0].mxu0 %v4345
      %v4773 = vpop.f32.mrb[0].mxu0
      %v4774 = vadd.f32 %v4549, %v4773
      %v4775 = vpop.f32.mrb[0].mxu0
      %v4776 = vpop.f32.mrb[0].mxu0
      %v4777 = vadd.f32 %v4549, %v4776
      %v4778 = vpop.f32.mrb[0].mxu0
      %4779 = vmatprep.mubr.bf16.mxu0 %v4476
      %4780 = vmatmul.mubr.bf16.gmra.mrb[0].mxu0 %v4348
      %v4781 = vpop.f32.mrb[0].mxu0
      %v4782 = vadd.f32 %v4549, %v4781
      %v4783 = vpop.f32.mrb[0].mxu0
      %v4784 = vpop.f32.mrb[0].mxu0
      %v4785 = vadd.f32 %v4549, %v4784
      %v4786 = vpop.f32.mrb[0].mxu0
      %4787 = vmatprep.mubr.bf16.mxu0 %v4479
      %4788 = vmatmul.mubr.bf16.gmra.mrb[0].mxu0 %v4351
      %v4789 = vpop.f32.mrb[0].mxu0
      %v4790 = vadd.f32 %v4549, %v4789
      %v4791 = vpop.f32.mrb[0].mxu0
      %v4792 = vpop.f32.mrb[0].mxu0
      %v4793 = vadd.f32 %v4549, %v4792
      %v4794 = vpop.f32.mrb[0].mxu0
      %4795 = vmatprep.mubr.bf16.mxu0 %v4482
      %4796 = vmatmul.mubr.bf16.gmra.mrb[0].mxu0 %v4354
      %v4797 = vpop.f32.mrb[0].mxu0
      %v4798 = vadd.f32 %v4549, %v4797
      %v4799 = vpop.f32.mrb[0].mxu0
      %v4800 = vpop.f32.mrb[0].mxu0
      %v4801 = vadd.f32 %v4549, %v4800
      %v4802 = vpop.f32.mrb[0].mxu0
      %4803 = vmatprep.mubr.bf16.mxu0 %v4485
      %4804 = vmatmul.mubr.bf16.gmra.mrb[0].mxu0 %v4357
      %v4805 = vpop.f32.mrb[0].mxu0
      %v4806 = vadd.f32 %v4549, %v4805
      %v4807 = vpop.f32.mrb[0].mxu0
      %v4808 = vpop.f32.mrb[0].mxu0
      %v4809 = vadd.f32 %v4549, %v4808
      %v4810 = vpop.f32.mrb[0].mxu0
      %4811 = vmatprep.mubr.bf16.mxu0 %v4488
      %4812 = vmatmul.mubr.bf16.gmra.mrb[0].mxu0 %v4360
      %v4813 = vpop.f32.mrb[0].mxu0
      %v4814 = vadd.f32 %v4549, %v4813
      %v4815 = vpop.f32.mrb[0].mxu0
      %v4816 = vpop.f32.mrb[0].mxu0
      %v4817 = vadd.f32 %v4549, %v4816
      %v4818 = vpop.f32.mrb[0].mxu0
      %4819 = vmatprep.mubr.bf16.mxu0 %v4491
      %4820 = vmatmul.mubr.bf16.gmra.mrb[0].mxu0 %v4363
      %v4821 = vpop.f32.mrb[0].mxu0
      %v4822 = vadd.f32 %v4549, %v4821
      %v4823 = vpop.f32.mrb[0].mxu0
      %v4824 = vpop.f32.mrb[0].mxu0
      %v4825 = vadd.f32 %v4549, %v4824
      %v4826 = vpop.f32.mrb[0].mxu0
      %4827 = vmatprep.mubr.bf16.mxu0 %v4494
      %4828 = vmatmul.mubr.bf16.gmra.mrb[0].mxu0 %v4366
      %v4829 = vpop.f32.mrb[0].mxu0
      %v4830 = vadd.f32 %v4549, %v4829
      %v4831 = vpop.f32.mrb[0].mxu0
      %v4832 = vpop.f32.mrb[0].mxu0
      %v4833 = vadd.f32 %v4549, %v4832
      %v4834 = vpop.f32.mrb[0].mxu0
      %4835 = vmatprep.mubr.bf16.mxu0 %v4497
      %4836 = vmatmul.mubr.bf16.gmra.mrb[0].mxu0 %v4369
      %v4837 = vpop.f32.mrb[0].mxu0
      %v4838 = vadd.f32 %v4549, %v4837
      %v4839 = vpop.f32.mrb[0].mxu0
      %v4840 = vpop.f32.mrb[0].mxu0
      %v4841 = vadd.f32 %v4549, %v4840
      %v4842 = vpop.f32.mrb[0].mxu0
      %4843 = vmatprep.mubr.bf16.mxu0 %v4500
      %4844 = vmatmul.mubr.bf16.gmra.mrb[0].mxu0 %v4372
      %v4845 = vpop.f32.mrb[0].mxu0
      %v4846 = vadd.f32 %v4549, %v4845
      %v4847 = vpop.f32.mrb[0].mxu0
      %v4848 = vpop.f32.mrb[0].mxu0
      %v4849 = vadd.f32 %v4549, %v4848
      %v4850 = vpop.f32.mrb[0].mxu0
      %4851 = vmatprep.mubr.bf16.mxu0 %v4503
      %4852 = vmatmul.mubr.bf16.gmra.mrb[0].mxu0 %v4375
      %v4853 = vpop.f32.mrb[0].mxu0
      %v4854 = vadd.f32 %v4549, %v4853
      %v4855 = vpop.f32.mrb[0].mxu0
      %v4856 = vpop.f32.mrb[0].mxu0
      %v4857 = vadd.f32 %v4549, %v4856
      %v4858 = vpop.f32.mrb[0].mxu0
      %4859 = vmatprep.mubr.bf16.mxu0 %v4506
      %4860 = vmatmul.mubr.bf16.gmra.mrb[0].mxu0 %v4378
      %v4861 = vpop.f32.mrb[0].mxu0
      %v4862 = vadd.f32 %v4549, %v4861
      %v4863 = vpop.f32.mrb[0].mxu0
      %v4864 = vpop.f32.mrb[0].mxu0
      %v4865 = vadd.f32 %v4549, %v4864
      %v4866 = vpop.f32.mrb[0].mxu0
      %4867 = vdwg.mxu0
      %4868 = vmatprep.subr.bf16.mxu0 0
      %4869 = vmatpush1.bf16.msra.mxu0 %v4639
      %4870 = vmatprep.subr.bf16.mxu0 0
      %4871 = vmatpush1.bf16.msra.mxu0 %v4640
      %4872 = vmatprep.subr.bf16.mxu0 0
      %4873 = vmatpush1.bf16.msra.mxu0 0
      %4874 = vmatprep.subr.bf16.mxu0 0
      %4875 = vmatpush1.bf16.msra.mxu0 0
      %4876 = vmatprep.subr.bf16.mxu0 0
      %4877 = vmatpush1.bf16.msra.mxu0 0
      %4878 = vmatprep.subr.bf16.mxu0 0
      %4879 = vmatpush1.bf16.msra.mxu0 0
      %4880 = vmatprep.subr.bf16.mxu0 0
      %4881 = vmatpush1.bf16.msra.mxu0 0
      %4882 = vmatprep.subr.bf16.mxu0 0
      %4883 = vmatpush1.bf16.msra.mxu0 0
      %4884 = vmatprep.subr.bf16.mxu0 0
      %4885 = vmatpush1.bf16.msra.mxu0 0
      %4886 = vmatprep.subr.bf16.mxu0 0
      %4887 = vmatpush1.bf16.msra.mxu0 0
      %4888 = vmatprep.subr.bf16.mxu0 0
      %4889 = vmatpush1.bf16.msra.mxu0 0
      %4890 = vmatprep.subr.bf16.mxu0 0
      %4891 = vmatpush1.bf16.msra.mxu0 0
      %4892 = vmatprep.subr.bf16.mxu0 0
      %4893 = vmatpush1.bf16.msra.mxu0 0
      %4894 = vmatprep.subr.bf16.mxu0 0
      %4895 = vmatpush1.bf16.msra.mxu0 0
      %4896 = vmatprep.subr.bf16.mxu0 0
      %4897 = vmatpush1.bf16.msra.mxu0 0
      %4898 = vmatprep.subr.bf16.mxu0 0
      %4899 = vmatpush1.bf16.msra.mxu0 0
      %4900 = vmatprep.mubr.bf16.mxu0 0
      %4901 = vmatmul.mubr.bf16.gmra.mrb[0].mxu0 %v4660
      %v4902 = vpop.f32.mrb[0].mxu0
      %v4903 = vadd.f32 %v4742, %v4902
      %v4904 = vpop.f32.mrb[0].mxu0
      %v4905 = vpop.f32.mrb[0].mxu0
      %v4906 = vadd.f32 %v4745, %v4905
      %v4907 = vpop.f32.mrb[0].mxu0
      %4908 = vmatprep.mubr.bf16.mxu0 0
      %4909 = vmatmul.mubr.bf16.gmra.mrb[0].mxu0 %v4663
      %v4910 = vpop.f32.mrb[0].mxu0
      %v4911 = vadd.f32 %v4750, %v4910
      %v4912 = vpop.f32.mrb[0].mxu0
      %v4913 = vpop.f32.mrb[0].mxu0
      %v4914 = vadd.f32 %v4753, %v4913
      %v4915 = vpop.f32.mrb[0].mxu0
      %4916 = vmatprep.mubr.bf16.mxu0 0
      %4917 = vmatmul.mubr.bf16.gmra.mrb[0].mxu0 %v4666
      %v4918 = vpop.f32.mrb[0].mxu0
      %v4919 = vadd.f32 %v4758, %v4918
      %v4920 = vpop.f32.mrb[0].mxu0
      %v4921 = vpop.f32.mrb[0].mxu0
      %v4922 = vadd.f32 %v4761, %v4921
      %v4923 = vpop.f32.mrb[0].mxu0
      %4924 = vmatprep.mubr.bf16.mxu0 0
      %4925 = vmatmul.mubr.bf16.gmra.mrb[0].mxu0 %v4669
      %v4926 = vpop.f32.mrb[0].mxu0
      %v4927 = vadd.f32 %v4766, %v4926
      %v4928 = vpop.f32.mrb[0].mxu0
      %v4929 = vpop.f32.mrb[0].mxu0
      %v4930 = vadd.f32 %v4769, %v4929
      %v4931 = vpop.f32.mrb[0].mxu0
      %4932 = vmatprep.mubr.bf16.mxu0 0
      %4933 = vmatmul.mubr.bf16.gmra.mrb[0].mxu0 %v4672
      %v4934 = vpop.f32.mrb[0].mxu0
      %v4935 = vadd.f32 %v4774, %v4934
      %v4936 = vpop.f32.mrb[0].mxu0
      %v4937 = vpop.f32.mrb[0].mxu0
      %v4938 = vadd.f32 %v4777, %v4937
      %v4939 = vpop.f32.mrb[0].mxu0
      %4940 = vmatprep.mubr.bf16.mxu0 0
      %4941 = vmatmul.mubr.bf16.gmra.mrb[0].mxu0 %v4675
      %v4942 = vpop.f32.mrb[0].mxu0
      %v4943 = vadd.f32 %v4782, %v4942
      %v4944 = vpop.f32.mrb[0].mxu0
      %v4945 = vpop.f32.mrb[0].mxu0
      %v4946 = vadd.f32 %v4785, %v4945
      %v4947 = vpop.f32.mrb[0].mxu0
      %4948 = vmatprep.mubr.bf16.mxu0 0
      %4949 = vmatmul.mubr.bf16.gmra.mrb[0].mxu0 %v4678
      %v4950 = vpop.f32.mrb[0].mxu0
      %v4951 = vadd.f32 %v4790, %v4950
      %v4952 = vpop.f32.mrb[0].mxu0
      %v4953 = vpop.f32.mrb[0].mxu0
      %v4954 = vadd.f32 %v4793, %v4953
      %v4955 = vpop.f32.mrb[0].mxu0
      %4956 = vmatprep.mubr.bf16.mxu0 0
      %4957 = vmatmul.mubr.bf16.gmra.mrb[0].mxu0 %v4681
      %v4958 = vpop.f32.mrb[0].mxu0
      %v4959 = vadd.f32 %v4798, %v4958
      %v4960 = vpop.f32.mrb[0].mxu0
      %v4961 = vpop.f32.mrb[0].mxu0
      %v4962 = vadd.f32 %v4801, %v4961
      %v4963 = vpop.f32.mrb[0].mxu0
      %4964 = vmatprep.mubr.bf16.mxu0 0
      %4965 = vmatmul.mubr.bf16.gmra.mrb[0].mxu0 %v4684
      %v4966 = vpop.f32.mrb[0].mxu0
      %v4967 = vadd.f32 %v4806, %v4966
      %v4968 = vpop.f32.mrb[0].mxu0
      %v4969 = vpop.f32.mrb[0].mxu0
      %v4970 = vadd.f32 %v4809, %v4969
      %v4971 = vpop.f32.mrb[0].mxu0
      %4972 = vmatprep.mubr.bf16.mxu0 0
      %4973 = vmatmul.mubr.bf16.gmra.mrb[0].mxu0 %v4687
      %v4974 = vpop.f32.mrb[0].mxu0
      %v4975 = vadd.f32 %v4814, %v4974
      %v4976 = vpop.f32.mrb[0].mxu0
      %v4977 = vpop.f32.mrb[0].mxu0
      %v4978 = vadd.f32 %v4817, %v4977
      %v4979 = vpop.f32.mrb[0].mxu0
      %4980 = vmatprep.mubr.bf16.mxu0 0
      %4981 = vmatmul.mubr.bf16.gmra.mrb[0].mxu0 %v4690
      %v4982 = vpop.f32.mrb[0].mxu0
      %v4983 = vadd.f32 %v4822, %v4982
      %v4984 = vpop.f32.mrb[0].mxu0
      %v4985 = vpop.f32.mrb[0].mxu0
      %v4986 = vadd.f32 %v4825, %v4985
      %v4987 = vpop.f32.mrb[0].mxu0
      %4988 = vmatprep.mubr.bf16.mxu0 0
      %4989 = vmatmul.mubr.bf16.gmra.mrb[0].mxu0 %v4693
      %v4990 = vpop.f32.mrb[0].mxu0
      %v4991 = vadd.f32 %v4830, %v4990
      %v4992 = vpop.f32.mrb[0].mxu0
      %v4993 = vpop.f32.mrb[0].mxu0
      %v4994 = vadd.f32 %v4833, %v4993
      %v4995 = vpop.f32.mrb[0].mxu0
      %4996 = vmatprep.mubr.bf16.mxu0 0
      %4997 = vmatmul.mubr.bf16.gmra.mrb[0].mxu0 %v4696
      %v4998 = vpop.f32.mrb[0].mxu0
      %v4999 = vadd.f32 %v4838, %v4998
      %v5000 = vpop.f32.mrb[0].mxu0
      %v5001 = vpop.f32.mrb[0].mxu0
      %v5002 = vadd.f32 %v4841, %v5001
      %v5003 = vpop.f32.mrb[0].mxu0
      %5004 = vmatprep.mubr.bf16.mxu0 0
      %5005 = vmatmul.mubr.bf16.gmra.mrb[0].mxu0 %v4699
      %v5006 = vpop.f32.mrb[0].mxu0
      %v5007 = vadd.f32 %v4846, %v5006
      %v5008 = vpop.f32.mrb[0].mxu0
      %v5009 = vpop.f32.mrb[0].mxu0
      %v5010 = vadd.f32 %v4849, %v5009
      %v5011 = vpop.f32.mrb[0].mxu0
      %5012 = vmatprep.mubr.bf16.mxu0 0
      %5013 = vmatmul.mubr.bf16.gmra.mrb[0].mxu0 %v4702
      %v5014 = vpop.f32.mrb[0].mxu0
      %v5015 = vadd.f32 %v4854, %v5014
      %v5016 = vpop.f32.mrb[0].mxu0
      %v5017 = vpop.f32.mrb[0].mxu0
      %v5018 = vadd.f32 %v4857, %v5017
      %v5019 = vpop.f32.mrb[0].mxu0
      %5020 = vmatprep.mubr.bf16.mxu0 0
      %5021 = vmatmul.mubr.bf16.gmra.mrb[0].mxu0 %v4705
      %v5022 = vpop.f32.mrb[0].mxu0
      %v5023 = vadd.f32 %v4862, %v5022
      %v5024 = vpop.f32.mrb[0].mxu0
      %v5025 = vpop.f32.mrb[0].mxu0
      %v5026 = vadd.f32 %v4865, %v5025
      %v5027 = vpop.f32.mrb[0].mxu0
      %5028 = vdwg.mxu0
      %v5029 = vmax.f32 %v4903, 0.0
      %v5030 = vmax.f32 %v4906, 0.0
      %v5031 = vmax.f32 %v4911, 0.0
      %v5032 = vmax.f32 %v4914, 0.0
      %v5033 = vmax.f32 %v4919, 0.0
      %v5034 = vmax.f32 %v4922, 0.0
      %v5035 = vmax.f32 %v4927, 0.0
      %v5036 = vmax.f32 %v4930, 0.0
      %v5037 = vmax.f32 %v4935, 0.0
      %v5038 = vmax.f32 %v4938, 0.0
      %v5039 = vmax.f32 %v4943, 0.0
      %v5040 = vmax.f32 %v4946, 0.0
      %v5041 = vmax.f32 %v4951, 0.0
      %v5042 = vmax.f32 %v4954, 0.0
      %v5043 = vmax.f32 %v4959, 0.0
      %v5044 = vmax.f32 %v4962, 0.0
      %v5045 = vmax.f32 %v4967, 0.0
      %v5046 = vmax.f32 %v4970, 0.0
      %v5047 = vmax.f32 %v4975, 0.0
      %v5048 = vmax.f32 %v4978, 0.0
      %v5049 = vmax.f32 %v4983, 0.0
      %v5050 = vmax.f32 %v4986, 0.0
      %v5051 = vmax.f32 %v4991, 0.0
      %v5052 = vmax.f32 %v4994, 0.0
      %v5053 = vmax.f32 %v4999, 0.0
      %v5054 = vmax.f32 %v5002, 0.0
      %v5055 = vmax.f32 %v5007, 0.0
      %v5056 = vmax.f32 %v5010, 0.0
      %v5057 = vmax.f32 %v5015, 0.0
      %v5058 = vmax.f32 %v5018, 0.0
      %v5059 = vmax.f32 %v5023, 0.0
      %v5060 = vmax.f32 %v5026, 0.0
      %v5061 = vsel %vm2784, %v5029, 0.0
      %v5062 = vsel %vm2784, %v5030, 0.0
      %v5063 = vadd.f32 %v5061, %v5062
      %v5064 = vsel %vm2784, %v5031, 0.0
      %v5065 = vadd.f32 %v5063, %v5064
      %v5066 = vsel %vm2784, %v5032, 0.0
      %v5067 = vadd.f32 %v5065, %v5066
      %v5068 = vsel %vm2784, %v5033, 0.0
      %v5069 = vadd.f32 %v5067, %v5068
      %v5070 = vsel %vm2784, %v5034, 0.0
      %v5071 = vadd.f32 %v5069, %v5070
      %v5072 = vsel %vm2784, %v5035, 0.0
      %v5073 = vadd.f32 %v5071, %v5072
      %v5074 = vsel %vm2784, %v5036, 0.0
      %v5075 = vadd.f32 %v5073, %v5074
      %v5076 = vsel %vm2784, %v5037, 0.0
      %v5077 = vadd.f32 %v5075, %v5076
      %v5078 = vsel %vm2784, %v5038, 0.0
      %v5079 = vadd.f32 %v5077, %v5078
      %v5080 = vsel %vm2784, %v5039, 0.0
      %v5081 = vadd.f32 %v5079, %v5080
      %v5082 = vsel %vm2784, %v5040, 0.0
      %v5083 = vadd.f32 %v5081, %v5082
      %v5084 = vsel %vm2784, %v5041, 0.0
      %v5085 = vadd.f32 %v5083, %v5084
      %v5086 = vsel %vm2784, %v5042, 0.0
      %v5087 = vadd.f32 %v5085, %v5086
      %v5088 = vsel %vm2784, %v5043, 0.0
      %v5089 = vadd.f32 %v5087, %v5088
      %v5090 = vsel %vm2784, %v5044, 0.0
      %v5091 = vadd.f32 %v5089, %v5090
      %v5092 = vsel %vm2784, %v5045, 0.0
      %v5093 = vadd.f32 %v5091, %v5092
      %v5094 = vsel %vm2784, %v5046, 0.0
      %v5095 = vadd.f32 %v5093, %v5094
      %v5096 = vsel %vm2784, %v5047, 0.0
      %v5097 = vadd.f32 %v5095, %v5096
      %v5098 = vsel %vm2784, %v5048, 0.0
      %v5099 = vadd.f32 %v5097, %v5098
      %v5100 = vsel %vm2784, %v5049, 0.0
      %v5101 = vadd.f32 %v5099, %v5100
      %v5102 = vsel %vm2784, %v5050, 0.0
      %v5103 = vadd.f32 %v5101, %v5102
      %v5104 = vsel %vm2784, %v5051, 0.0
      %v5105 = vadd.f32 %v5103, %v5104
      %v5106 = vsel %vm2784, %v5052, 0.0
      %v5107 = vadd.f32 %v5105, %v5106
      %v5108 = vsel %vm2784, %v5053, 0.0
      %v5109 = vadd.f32 %v5107, %v5108
      %v5110 = vsel %vm2784, %v5054, 0.0
      %v5111 = vadd.f32 %v5109, %v5110
      %v5112 = vsel %vm2784, %v5055, 0.0
      %v5113 = vadd.f32 %v5111, %v5112
      %v5114 = vsel %vm2784, %v5056, 0.0
      %v5115 = vadd.f32 %v5113, %v5114
      %v5116 = vsel %vm2784, %v5057, 0.0
      %v5117 = vadd.f32 %v5115, %v5116
      %v5118 = vsel %vm2784, %v5058, 0.0
      %v5119 = vadd.f32 %v5117, %v5118
      %v5120 = vsel %vm2784, %v5059, 0.0
      %v5121 = vadd.f32 %v5119, %v5120
      %v5122 = vsel %vm2784, %v5060, 0.0
      %v5123 = vadd.f32 %v5121, %v5122
      %v5124 = vrot.slane %v5123, 4
      %v5125 = vadd.f32 %v5123, %v5124
      %v5126 = vrot.slane %v5125, 2
      %v5127 = vadd.f32 %v5125, %v5126
      %v5128 = vrot.slane %v5127, 1
      %v5129 = vadd.f32 %v5127, %v5128
      %v5130 = vrcp.pop 256.0
      %v5131 = vmul.f32 %v5129, %v5130
      %v5132 = vld [vmem:[%s5] sm:$0xff]
      %v5133 = vmul.f32 %v5131, %v5132
      %v5134 = vsel %vm2784, %v5133, 0.0
      %5135 = vadd.xlane.f32.xlu0 %v5134
      %v5136 = vpop.xlane.xlu0 %5135
      %v5137 = vmax.f32 %v5136, 0.0
      %v5138 = vld [vmem:[%s6] sm:$0xff]
      %v5139 = vmul.f32 %v5137, %v5138
      %v5140 = vsel %vm2784, %v5139, 0.0
      %v5141 = vrot.slane %v5140, 4
      %v5142 = vadd.f32 %v5140, %v5141
      %v5143 = vrot.slane %v5142, 2
      %v5144 = vadd.f32 %v5142, %v5143
      %v5145 = vrot.slane %v5144, 1
      %v5146 = vadd.f32 %v5144, %v5145
      %v5147 = vxor.u32 %v5146, 2147483648
      %v5148 = vmul.f32 %v5147, 1.442695
      %v5149 = vpow.pop %v5148
      %v5150 = vadd.f32 %v5149, 1.0
      %v5151 = vrcp.pop %v5150
      %v5152 = vmul.f32 1.0, %v5151
      %v5153 = vmul.f32 %v5029, %v5152
      %v5154 = vmul.f32 %v5030, %v5152
      %v5155 = vmul.f32 %v5031, %v5152
      %v5156 = vmul.f32 %v5032, %v5152
      %v5157 = vmul.f32 %v5033, %v5152
      %v5158 = vmul.f32 %v5034, %v5152
      %v5159 = vmul.f32 %v5035, %v5152
      %v5160 = vmul.f32 %v5036, %v5152
      %v5161 = vmul.f32 %v5037, %v5152
      %v5162 = vmul.f32 %v5038, %v5152
      %v5163 = vmul.f32 %v5039, %v5152
      %v5164 = vmul.f32 %v5040, %v5152
      %v5165 = vmul.f32 %v5041, %v5152
      %v5166 = vmul.f32 %v5042, %v5152
      %v5167 = vmul.f32 %v5043, %v5152
      %v5168 = vmul.f32 %v5044, %v5152
      %v5169 = vmul.f32 %v5045, %v5152
      %v5170 = vmul.f32 %v5046, %v5152
      %v5171 = vmul.f32 %v5047, %v5152
      %v5172 = vmul.f32 %v5048, %v5152
      %v5173 = vmul.f32 %v5049, %v5152
      %v5174 = vmul.f32 %v5050, %v5152
      %v5175 = vmul.f32 %v5051, %v5152
      %v5176 = vmul.f32 %v5052, %v5152
      %v5177 = vmul.f32 %v5053, %v5152
      %v5178 = vmul.f32 %v5054, %v5152
      %v5179 = vmul.f32 %v5055, %v5152
      %v5180 = vmul.f32 %v5056, %v5152
      %v5181 = vmul.f32 %v5057, %v5152
      %v5182 = vmul.f32 %v5058, %v5152
      %v5183 = vmul.f32 %v5059, %v5152
      %v5184 = vmul.f32 %v5060, %v5152
      %5185 = vxpose.xlu0.b32.start [1/16] %v5153, 128
      %5186 = vxpose.xlu0.b32.cont [2/16] %v5154, 128
      %5187 = vxpose.xlu0.b32.cont [3/16] %v5155, 128
      %5188 = vxpose.xlu0.b32.cont [4/16] %v5156, 128
      %5189 = vxpose.xlu0.b32.cont [5/16] %v5157, 128
      %5190 = vxpose.xlu0.b32.cont [6/16] %v5158, 128
      %5191 = vxpose.xlu0.b32.cont [7/16] %v5159, 128
      %5192 = vxpose.xlu0.b32.cont [8/16] %v5160, 128
      %5193 = vxpose.xlu0.b32.cont [9/16] %v5161, 128
      %5194 = vxpose.xlu0.b32.cont [10/16] %v5162, 128
      %5195 = vxpose.xlu0.b32.cont [11/16] %v5163, 128
      %5196 = vxpose.xlu0.b32.cont [12/16] %v5164, 128
      %5197 = vxpose.xlu0.b32.cont [13/16] %v5165, 128
      %5198 = vxpose.xlu0.b32.cont [14/16] %v5166, 128
      %5199 = vxpose.xlu0.b32.cont [15/16] %v5167, 128
      %5200 = vxpose.xlu0.b32.end [16/16] %v5168, 128
      %v5201 = vpop.trf.xlu0
      %v5202 = vpop.trf.xlu0
      %v5203 = vpop.trf.xlu0
      %v5204 = vpop.trf.xlu0
      %v5205 = vpop.trf.xlu0
      %v5206 = vpop.trf.xlu0
      %v5207 = vpop.trf.xlu0
      %v5208 = vpop.trf.xlu0
      %v5209 = vpop.trf.xlu0
      %v5210 = vpop.trf.xlu0
      %v5211 = vpop.trf.xlu0
      %v5212 = vpop.trf.xlu0
      %v5213 = vpop.trf.xlu0
      %v5214 = vpop.trf.xlu0
      %v5215 = vpop.trf.xlu0
      %v5216 = vpop.trf.xlu0
      %5217 = vxpose.xlu0.b32.start [1/16] %v5169, 128
      %5218 = vxpose.xlu0.b32.cont [2/16] %v5170, 128
      %5219 = vxpose.xlu0.b32.cont [3/16] %v5171, 128
      %5220 = vxpose.xlu0.b32.cont [4/16] %v5172, 128
      %5221 = vxpose.xlu0.b32.cont [5/16] %v5173, 128
      %5222 = vxpose.xlu0.b32.cont [6/16] %v5174, 128
      %5223 = vxpose.xlu0.b32.cont [7/16] %v5175, 128
      %5224 = vxpose.xlu0.b32.cont [8/16] %v5176, 128
      %5225 = vxpose.xlu0.b32.cont [9/16] %v5177, 128
      %5226 = vxpose.xlu0.b32.cont [10/16] %v5178, 128
      %5227 = vxpose.xlu0.b32.cont [11/16] %v5179, 128
      %5228 = vxpose.xlu0.b32.cont [12/16] %v5180, 128
      %5229 = vxpose.xlu0.b32.cont [13/16] %v5181, 128
      %5230 = vxpose.xlu0.b32.cont [14/16] %v5182, 128
      %5231 = vxpose.xlu0.b32.cont [15/16] %v5183, 128
      %5232 = vxpose.xlu0.b32.end [16/16] %v5184, 128
      %v5233 = vpop.trf.xlu0
      %v5234 = vpop.trf.xlu0
      %v5235 = vpop.trf.xlu0
      %v5236 = vpop.trf.xlu0
      %v5237 = vpop.trf.xlu0
      %v5238 = vpop.trf.xlu0
      %v5239 = vpop.trf.xlu0
      %v5240 = vpop.trf.xlu0
      %v5241 = vpop.trf.xlu0
      %v5242 = vpop.trf.xlu0
      %v5243 = vpop.trf.xlu0
      %v5244 = vpop.trf.xlu0
      %v5245 = vpop.trf.xlu0
      %v5246 = vpop.trf.xlu0
      %v5247 = vpop.trf.xlu0
      %v5248 = vpop.trf.xlu0
      %5249 = vst [vmem:[%s278] sm:$0xff] %v5201
      %5250 = vst [vmem:[%s278 + $0x8] sm:$0xff] %v5233
      %5251 = vst [vmem:[%s278 + $0x10] sm:$0xff] %v5202
      %5252 = vst [vmem:[%s278 + $0x18] sm:$0xff] %v5234
      %5253 = vst [vmem:[%s278 + $0x20] sm:$0xff] %v5203
      %5254 = vst [vmem:[%s278 + $0x28] sm:$0xff] %v5235
      %5255 = vst [vmem:[%s278 + $0x30] sm:$0xff] %v5204
      %5256 = vst [vmem:[%s278 + $0x38] sm:$0xff] %v5236
      %p5257 = scmp.lt.s32.totalorder %s18, 1
      %s5258 = scalar_select %p5257, %s18, 1
      %s5259 = smul.addr %s5258, 8
      %s5260 = smul.addr %s5259, 8
      %s5261 = scalar_lea.vmem %s7, %s5260
      // Predicated region
      $region49: #{up_skip_se_forward.1} parent=47 // pred_check
        %p5262 = pneg %p188
      $region50: #{up_skip_se_forward.1} parent=47 // pred_check_branch
        %5264 = sbr.rel (%p5262) target = $region52
      $region51: #{up_skip_se_forward.1} parent=47 // pred_region
        _
      $region52: #{up_skip_se_forward.1} parent=47 // pred_fallthru
        _
    $region48: #{up_skip_se_forward.1} parent=5 // pred_fallthru
      _
    %p5265 = scmp.le.s32.totalorder 2, %s13
    // Predicated region
    $region53: #{up_skip_se_forward.1} parent=5 // pred_check
      %p5266 = pneg %p5265
    $region54: #{up_skip_se_forward.1} parent=5 // pred_check_branch
      %5268 = sbr.rel (%p5266) target = $region56
    $region55: #{up_skip_se_forward.1} parent=5 // pred_region
      %s5269 = ssub.s32 %s13, 2
      // Predicated region
      $region57: #{up_skip_se_forward.1} parent=55 // pred_check
        %p5270 = pneg %p194
      $region58: #{up_skip_se_forward.1} parent=55 // pred_check_branch
        %5272 = sbr.rel (%p5270) target = $region60
      $region59: #{up_skip_se_forward.1} parent=55 // pred_region
        %p5273 = scmp.lt.s32.totalorder %s19, 1
        %s5274 = scalar_select %p5273, %s19, 1
        %s5275 = smul.addr %s5274, 8
        %s5276 = smul.addr %s5275, 8
        %s5277 = scalar_lea.vmem %s7, %s5276
      $region60: #{up_skip_se_forward.1} parent=55 // pred_fallthru
        _
    $region56: #{up_skip_se_forward.1} parent=5 // pred_fallthru
      _
  $region6: #{up_skip_se_forward.1} parent=0 // loop_footer
    %s17 = sadd.s32 1, %s13
  $region7: #{up_skip_se_forward.1} parent=0 // loop_footer_branch
    %12 = sbr.rel target = $region3
  $region8: #{up_skip_se_forward.1} parent=0 // loop_exit
    _

</llo_original>
